<compile_context>
chip_gen: v6e
topology: v6e:2x2x1
jax: 0.10.0
libtpu: 0.0.40
codegen_flags: <defaults>
</compile_context>

<pallas_src>
import math

import jax
import jax.numpy as jnp
from jax import lax
from jax.experimental import pallas as pl
from jax.experimental.pallas import tpu as pltpu

EMB_DIM = 1000       # embedding_net output dim (fc input dim in the module)
NUM_CLASSES = 2      # fc = nn.Linear(1000, 2)
EMB_PAD = 1024       # EMB_DIM padded to a multiple of 128 (lane-dense output)
NC_PAD = 8           # fc output padded only to 8 (was 128 = 64x real size)
MAX_TK = 2048        # K tile cap -> 4 MiB bf16 weight tile, v7x-VMEM safe
NEG_INF = -1e30      # mask value for padded logit lanes


def _round_up(x, m):
    return (x + m - 1) // m * m


def _pad_dims(d):
    """Padded K extent and K tile size for input feature dim d."""
    if d <= MAX_TK:
        dp = _round_up(d, 128)
        return dp, dp          # whole-K single tile -> grid of one step
    dp = _round_up(d, MAX_TK)
    return dp, MAX_TK


# ---------------------------------------------------------------------------
# Fused kernel: embedding (Linear + ReLU) for all 5 inputs + fc/log_softmax
# epilogue for output1.  Grid is the K (input-feature) reduction only; the
# f32 embedding output block is resident across the grid and used directly as
# the accumulator.
# ---------------------------------------------------------------------------
def quintuplet_kernel(x_ref, w_ref, b_ref, wfc_ref, bfc_ref, emb_ref, logp_ref):
    k = pl.program_id(0)
    nk = pl.num_programs(0)

    @pl.when(k == 0)
    def _():
        emb_ref[...] = jnp.zeros_like(emb_ref)

    # bf16 x bf16 -> f32 on the MXU, accumulated straight into the output block.
    emb_ref[...] += jnp.dot(x_ref[...], w_ref[...],
                            preferred_element_type=jnp.float32)

    # Epilogue (runs exactly once): bias + ReLU in f32, then the f32 fc head
    # and a masked, numerically stable log-softmax over the 2 real classes.
    @pl.when(k == nk - 1)
    def _():
        emb = jnp.maximum(emb_ref[...] + b_ref[...], 0.0)
        emb_ref[...] = emb
        logits = jnp.dot(emb, wfc_ref[...],
                         preferred_element_type=jnp.float32) + bfc_ref[...]
        lane = lax.broadcasted_iota(jnp.int32, logits.shape, 1)
        logits = jnp.where(lane < NUM_CLASSES, logits, NEG_INF)
        m = jnp.max(logits, axis=1, keepdims=True)
        s = logits - m
        lse = jnp.log(jnp.sum(jnp.exp(s), axis=1, keepdims=True))
        logp_ref[...] = s - lse


def quintuplet_fused(x_pad, w_emb, b_emb, w_fc, b_fc):
    """One pallas_call: embeddings for all rows + log-softmax fc logits."""
    mp, dp = x_pad.shape
    tk = dp if dp <= MAX_TK else MAX_TK
    assert dp % tk == 0 and w_emb.shape == (dp, EMB_PAD)
    nk = dp // tk

    # VMEM budget (double-buffered inputs + outputs), with explicit limit so the
    # same tiling stays safe on v7x's 64-MiB part.
    vmem_est = (2 * mp * tk * 2            # x tiles (bf16)
                + 2 * tk * EMB_PAD * 2     # w_emb tiles (bf16)
                + 2 * EMB_PAD * 4          # b_emb
                + 2 * EMB_PAD * NC_PAD * 4 # w_fc (f32 strip)
                + 2 * NC_PAD * 4           # b_fc
                + 2 * mp * EMB_PAD * 4     # emb output block
                + 2 * mp * NC_PAD * 4)     # log-prob output block
    vmem_limit = min(max(2 * vmem_est, 32 << 20), 64 << 20)

    return pl.pallas_call(
        quintuplet_kernel,
        out_shape=(jax.ShapeDtypeStruct((mp, EMB_PAD), jnp.float32),
                   jax.ShapeDtypeStruct((mp, NC_PAD), jnp.float32)),
        grid_spec=pltpu.PrefetchScalarGridSpec(
            num_scalar_prefetch=0,
            grid=(nk,),
            in_specs=[
                pl.BlockSpec((mp, tk), lambda k: (0, k)),           # x (read once)
                pl.BlockSpec((tk, EMB_PAD), lambda k: (k, 0)),      # w_emb
                pl.BlockSpec((1, EMB_PAD), lambda k: (0, 0)),       # b_emb
                pl.BlockSpec((EMB_PAD, NC_PAD), lambda k: (0, 0)),  # w_fc
                pl.BlockSpec((1, NC_PAD), lambda k: (0, 0)),        # b_fc
            ],
            out_specs=[
                pl.BlockSpec((mp, EMB_PAD), lambda k: (0, 0)),      # embeddings
                pl.BlockSpec((mp, NC_PAD), lambda k: (0, 0)),       # log-probs
            ],
        ),
        compiler_params=pltpu.CompilerParams(
            # The single remaining grid axis is the K reduction -> "arbitrary".
            dimension_semantics=("arbitrary",),
            vmem_limit_bytes=vmem_limit,
        ),
    )(x_pad, w_emb, b_emb, w_fc, b_fc)


# ---------------------------------------------------------------------------
# Wrapper: mirrors QuintupletNet.forward
# ---------------------------------------------------------------------------
def quintuplet_forward(prep, x1, x2, x3, x4, x5):
    """Returns (output1..output5, log_softmax(fc(output1)))."""
    b = x1.shape[0]
    d = math.prod(x1.shape[1:])
    m = 5 * b
    mp = _round_up(m, 16)                     # bf16 sublane packing
    dp, _ = _pad_dims(d)

    # Single concatenate builds the padded-row activation (no zeros+set pass).
    parts = [x.reshape(b, -1).astype(jnp.bfloat16) for x in (x1, x2, x3, x4, x5)]
    if mp > m:
        parts.append(jnp.zeros((mp - m, d), jnp.bfloat16))
    x_cat = jnp.concatenate(parts, axis=0)
    if dp > d:
        x_cat = jnp.pad(x_cat, ((0, 0), (0, dp - d)))

    emb_pad, logp_pad = quintuplet_fused(
        x_cat, prep["w_emb"], prep["b_emb"], prep["w_fc"], prep["b_fc"])

    outs = tuple(emb_pad[i * b:(i + 1) * b, :EMB_DIM] for i in range(5))
    o6 = logp_pad[:b, :NUM_CLASSES]
    return outs + (o6,)


def prepare_params(params, in_features):
    """Pad weights to kernel layouts (once). Embedding matmul operands -> bf16,
    fc head stays f32 to match the PyTorch module."""
    dp, _ = _pad_dims(in_features)
    w_emb = jnp.zeros((dp, EMB_PAD), jnp.bfloat16).at[
        :in_features, :EMB_DIM].set(params["w_emb"].astype(jnp.bfloat16))
    b_emb = jnp.zeros((1, EMB_PAD), jnp.float32).at[:, :EMB_DIM].set(params["b_emb"])
    w_fc = jnp.zeros((EMB_PAD, NC_PAD), jnp.float32).at[
        :EMB_DIM, :NUM_CLASSES].set(params["w_fc"])
    b_fc = jnp.zeros((1, NC_PAD), jnp.float32).at[:, :NUM_CLASSES].set(params["b_fc"])
    return {"w_emb": w_emb, "b_emb": b_emb, "w_fc": w_fc, "b_fc": b_fc}


def init_params(key, in_features):
    k1, k2, k3, k4 = jax.random.split(key, 4)
    scale_e = 1.0 / jnp.sqrt(jnp.float32(in_features))
    scale_f = 1.0 / jnp.sqrt(jnp.float32(EMB_DIM))
    return {
        "w_emb": jax.random.normal(k1, (in_features, EMB_DIM), jnp.float32) * scale_e,
        "b_emb": jax.random.normal(k2, (1, EMB_DIM), jnp.float32) * scale_e,
        "w_fc":  jax.random.normal(k3, (EMB_DIM, NUM_CLASSES), jnp.float32) * scale_f,
        "b_fc":  jax.random.normal(k4, (1, NUM_CLASSES), jnp.float32) * scale_f,
    }


if __name__ == "__main__":
    B, C, H, W = 2, 4, 16, 16          # small NCHW inputs
    D = C * H * W                       # 1024 flattened features

    key = jax.random.PRNGKey(0)
    kx, kp = jax.random.split(key)
    kxs = jax.random.split(kx, 5)
    xs = [jax.random.normal(k, (B, C, H, W), jnp.float32) for k in kxs]
    params = init_params(kp, D)
    prep = prepare_params(params, D)     # pad / cast weights once

    fwd = jax.jit(quintuplet_forward)
    outs = jax.block_until_ready(fwd(prep, *xs))
    o1, o2, o3, o4, o5, o6 = outs

    # Shape / stability checks.
    assert all(o.shape == (B, EMB_DIM) for o in (o1, o2, o3, o4, o5))
    assert o6.shape == (B, NUM_CLASSES)
    assert bool(jnp.allclose(jnp.sum(jnp.exp(o6), axis=1), 1.0, atol=1e-5))

    # Pure-JAX reference with the same bf16-quantized embedding operands.
    x_flat = jnp.concatenate([x.reshape(B, -1) for x in xs], axis=0)
    xb = x_flat.astype(jnp.bfloat16).astype(jnp.float32)
    wb = prep["w_emb"][:D, :EMB_DIM].astype(jnp.float32)
    ref_emb = jnp.maximum(
        jnp.dot(xb, wb, precision=lax.Precision.HIGHEST) + params["b_emb"], 0.0)
    got_emb = jnp.concatenate([o1, o2, o3, o4, o5], axis=0)
    assert bool(jnp.allclose(got_emb, ref_emb, atol=1e-2, rtol=1e-2))

    # fc head reference in full f32 (kernel now runs the fc in f32 too).
    ref_logits = jnp.dot(ref_emb[:B], params["w_fc"],
                         precision=lax.Precision.HIGHEST) + params["b_fc"]
    ref_o6 = jax.nn.log_softmax(ref_logits, axis=1)
    assert bool(jnp.allclose(o6, ref_o6, atol=2e-2, rtol=2e-2))

    print("KERNEL_OK")
</pallas_src>

<mosaic_0001>
module attributes {stable_mosaic.version = 11 : i64} {
  func.func @quintuplet_kernel(%arg0: i32, %arg1: memref<16x1024xbf16, #tpu.memory_space<vmem>>, %arg2: memref<1024x1024xbf16, #tpu.memory_space<vmem>>, %arg3: memref<1x1024xf32, #tpu.memory_space<vmem>>, %arg4: memref<1024x8xf32, #tpu.memory_space<vmem>>, %arg5: memref<1x8xf32, #tpu.memory_space<vmem>>, %arg6: memref<16x1024xf32, #tpu.memory_space<vmem>>, %arg7: memref<16x8xf32, #tpu.memory_space<vmem>>) attributes {dimension_semantics = [#tpu.dimension_semantics<arbitrary>], iteration_bounds = array<i64: 1>, scalar_prefetch = 0 : i64, scratch_operands = 0 : i64, tpu.core_type = #tpu.core_type<tc>, window_params = [{transform_indices = @transform_0, window_bounds = array<i64: 16, 1024>}, {transform_indices = @transform_1, window_bounds = array<i64: 1024, 1024>}, {pipeline_mode = #tpu.pipeline_mode<synchronous>, transform_indices = @transform_2, window_bounds = array<i64: 1, 1024>}, {pipeline_mode = #tpu.pipeline_mode<synchronous>, transform_indices = @transform_3, window_bounds = array<i64: 1024, 8>}, {pipeline_mode = #tpu.pipeline_mode<synchronous>, transform_indices = @transform_4, window_bounds = array<i64: 1, 8>}, {pipeline_mode = #tpu.pipeline_mode<synchronous>, transform_indices = @transform_5, window_bounds = array<i64: 16, 1024>}, {pipeline_mode = #tpu.pipeline_mode<synchronous>, transform_indices = @transform_6, window_bounds = array<i64: 16, 8>}]} {
    %c0_i32 = arith.constant 0 : i32
    %0 = arith.cmpi eq, %arg0, %c0_i32 : i32
    %1 = arith.extui %0 : i1 to i32
    %c0_i32_0 = arith.constant 0 : i32
    %2 = arith.cmpi ne, %1, %c0_i32_0 : i32
    scf.if %2 {
      %cst_10 = arith.constant 0.000000e+00 : f32
      %12 = vector.broadcast %cst_10 : f32 to vector<16x1024xf32>
      %c0_11 = arith.constant 0 : index
      %c0_12 = arith.constant 0 : index
      %13 = vector.load %arg6[%c0_11, %c0_12] : memref<16x1024xf32, #tpu.memory_space<vmem>>, vector<16x1024xf32>
      tpu.vector_store %arg6[%c0_11, %c0_12], %12 {strides = array<i32>} : memref<16x1024xf32, #tpu.memory_space<vmem>>, vector<16x1024xf32>,
    } else {
    }
    %c0 = arith.constant 0 : index
    %c0_1 = arith.constant 0 : index
    %3 = vector.load %arg6[%c0, %c0_1] : memref<16x1024xf32, #tpu.memory_space<vmem>>, vector<16x1024xf32>
    %c0_2 = arith.constant 0 : index
    %c0_3 = arith.constant 0 : index
    %4 = vector.load %arg1[%c0_2, %c0_3] : memref<16x1024xbf16, #tpu.memory_space<vmem>>, vector<16x1024xbf16>
    %c0_4 = arith.constant 0 : index
    %c0_5 = arith.constant 0 : index
    %5 = vector.load %arg2[%c0_4, %c0_5] : memref<1024x1024xbf16, #tpu.memory_space<vmem>>, vector<1024x1024xbf16>
    %cst = arith.constant dense<0.000000e+00> : vector<16x1024xf32>
    %6 = tpu.matmul %4, %5, %cst {dimension_numbers = #tpu.dot_dimension_numbers<[1], [0], [0], [1], [0, 0, 1, 1], [], []>} : vector<16x1024xbf16>, vector<1024x1024xbf16>, vector<16x1024xf32> -> vector<16x1024xf32>
    %7 = arith.addf %3, %6 : vector<16x1024xf32>
    %c0_6 = arith.constant 0 : index
    %c0_7 = arith.constant 0 : index
    %8 = vector.load %arg6[%c0_6, %c0_7] : memref<16x1024xf32, #tpu.memory_space<vmem>>, vector<16x1024xf32>
    tpu.vector_store %arg6[%c0_6, %c0_7], %7 {strides = array<i32>} : memref<16x1024xf32, #tpu.memory_space<vmem>>, vector<16x1024xf32>,
    %c0_i32_8 = arith.constant 0 : i32
    %9 = arith.cmpi eq, %arg0, %c0_i32_8 : i32
    %10 = arith.extui %9 : i1 to i32
    %c0_i32_9 = arith.constant 0 : i32
    %11 = arith.cmpi ne, %10, %c0_i32_9 : i32
    scf.if %11 {
      %c0_10 = arith.constant 0 : index
      %c0_11 = arith.constant 0 : index
      %12 = vector.load %arg6[%c0_10, %c0_11] : memref<16x1024xf32, #tpu.memory_space<vmem>>, vector<16x1024xf32>
      %c0_12 = arith.constant 0 : index
      %c0_13 = arith.constant 0 : index
      %13 = vector.load %arg3[%c0_12, %c0_13] : memref<1x1024xf32, #tpu.memory_space<vmem>>, vector<1x1024xf32>
      %14 = vector.broadcast %13 : vector<1x1024xf32> to vector<16x1024xf32>
      %15 = arith.addf %12, %14 : vector<16x1024xf32>
      %cst_14 = arith.constant 0.000000e+00 : f32
      %16 = vector.broadcast %cst_14 : f32 to vector<16x1024xf32>
      %17 = arith.maximumf %15, %16 : vector<16x1024xf32>
      %c0_15 = arith.constant 0 : index
      %c0_16 = arith.constant 0 : index
      %18 = vector.load %arg6[%c0_15, %c0_16] : memref<16x1024xf32, #tpu.memory_space<vmem>>, vector<16x1024xf32>
      tpu.vector_store %arg6[%c0_15, %c0_16], %17 {strides = array<i32>} : memref<16x1024xf32, #tpu.memory_space<vmem>>, vector<16x1024xf32>,
      %c0_17 = arith.constant 0 : index
      %c0_18 = arith.constant 0 : index
      %19 = vector.load %arg4[%c0_17, %c0_18] : memref<1024x8xf32, #tpu.memory_space<vmem>>, vector<1024x8xf32>
      %cst_19 = arith.constant dense<0.000000e+00> : vector<16x8xf32>
      %20 = tpu.matmul %17, %19, %cst_19 {dimension_numbers = #tpu.dot_dimension_numbers<[1], [0], [0], [1], [0, 0, 1, 1], [], []>} : vector<16x1024xf32>, vector<1024x8xf32>, vector<16x8xf32> -> vector<16x8xf32>
      %c0_20 = arith.constant 0 : index
      %c0_21 = arith.constant 0 : index
      %21 = vector.load %arg5[%c0_20, %c0_21] : memref<1x8xf32, #tpu.memory_space<vmem>>, vector<1x8xf32>
      %22 = vector.broadcast %21 : vector<1x8xf32> to vector<16x8xf32>
      %23 = arith.addf %20, %22 : vector<16x8xf32>
      %24 = tpu.iota {dimensions = array<i32: 1>} : vector<16x8xi32>
      %c2_i32 = arith.constant 2 : i32
      %25 = vector.broadcast %c2_i32 : i32 to vector<16x8xi32>
      %26 = arith.cmpi slt, %24, %25 : vector<16x8xi32>
      %cst_22 = arith.constant -1.000000e+30 : f32
      %27 = vector.broadcast %cst_22 : f32 to vector<16x8xf32>
      %28 = arith.select %26, %23, %27 : vector<16x8xi1>, vector<16x8xf32>
      %cst_23 = arith.constant dense<0xFF800000> : vector<16xf32>
      %29 = vector.multi_reduction <maximumf>, %28, %cst_23 [1] : vector<16x8xf32> to vector<16xf32>
      %30 = vector.shape_cast %29 : vector<16xf32> to vector<16x1xf32>
      %31 = vector.broadcast %30 : vector<16x1xf32> to vector<16x8xf32>
      %32 = arith.subf %28, %31 : vector<16x8xf32>
      %33 = math.exp %32 : vector<16x8xf32>
      %cst_24 = arith.constant dense<0.000000e+00> : vector<16xf32>
      %34 = vector.multi_reduction <add>, %33, %cst_24 [1] : vector<16x8xf32> to vector<16xf32>
      %35 = vector.shape_cast %34 : vector<16xf32> to vector<16x1xf32>
      %36 = math.log %35 : vector<16x1xf32>
      %37 = vector.broadcast %36 : vector<16x1xf32> to vector<16x8xf32>
      %38 = arith.subf %32, %37 : vector<16x8xf32>
      %c0_25 = arith.constant 0 : index
      %c0_26 = arith.constant 0 : index
      %39 = vector.load %arg7[%c0_25, %c0_26] : memref<16x8xf32, #tpu.memory_space<vmem>>, vector<16x8xf32>
      tpu.vector_store %arg7[%c0_25, %c0_26], %38 {strides = array<i32>} : memref<16x8xf32, #tpu.memory_space<vmem>>, vector<16x8xf32>,
    } else {
    }
    return
  }
  func.func @transform_0(%arg0: i32) -> (i32, i32) {
    %c0_i32 = arith.constant 0 : i32
    %c0_i32_0 = arith.constant 0 : i32
    return %c0_i32, %arg0 : i32, i32
  }
  func.func @transform_1(%arg0: i32) -> (i32, i32) {
    %c0_i32 = arith.constant 0 : i32
    %c0_i32_0 = arith.constant 0 : i32
    return %arg0, %c0_i32 : i32, i32
  }
  func.func @transform_2(%arg0: i32) -> (i32, i32) {
    %c0_i32 = arith.constant 0 : i32
    %c0_i32_0 = arith.constant 0 : i32
    %c0_i32_1 = arith.constant 0 : i32
    return %c0_i32, %c0_i32_0 : i32, i32
  }
  func.func @transform_3(%arg0: i32) -> (i32, i32) {
    %c0_i32 = arith.constant 0 : i32
    %c0_i32_0 = arith.constant 0 : i32
    %c0_i32_1 = arith.constant 0 : i32
    return %c0_i32, %c0_i32_0 : i32, i32
  }
  func.func @transform_4(%arg0: i32) -> (i32, i32) {
    %c0_i32 = arith.constant 0 : i32
    %c0_i32_0 = arith.constant 0 : i32
    %c0_i32_1 = arith.constant 0 : i32
    return %c0_i32, %c0_i32_0 : i32, i32
  }
  func.func @transform_5(%arg0: i32) -> (i32, i32) {
    %c0_i32 = arith.constant 0 : i32
    %c0_i32_0 = arith.constant 0 : i32
    %c0_i32_1 = arith.constant 0 : i32
    return %c0_i32, %c0_i32_0 : i32, i32
  }
  func.func @transform_6(%arg0: i32) -> (i32, i32) {
    %c0_i32 = arith.constant 0 : i32
    %c0_i32_0 = arith.constant 0 : i32
    %c0_i32_1 = arith.constant 0 : i32
    return %c0_i32, %c0_i32_0 : i32, i32
  }
}

</mosaic_0001>

<llo_original>
// kernel: quintuplet_forward.1
$region0: #{quintuplet_forward.1}
  #allocation0 [shape = 'u32[]', space=smem, size = 0x4, offset = 0x4, fixed_abs, tag = 'smem constant byte address 0x4 - core index']
  #allocation1 [shape = 'u32[144,128]{1,0:T(1,128)}', space=vmem, size = 0x12000, scoped, tag = 'internal scratch']
  %s0 = inlined_call_operand.vmem [shape: bf16[16,1024], index: 0, kind: input, shape index: {}]
  %s1 = inlined_call_operand.hbm [shape: bf16[1024,1024], index: 1, kind: input, shape index: {}]
  %s2 = inlined_call_operand.hbm [shape: f32[1,1024], index: 2, kind: input, shape index: {}]
  %s3 = inlined_call_operand.vmem [shape: f32[1024,8], index: 3, kind: input, shape index: {}]
  %s4 = inlined_call_operand.hbm [shape: f32[1,8], index: 4, kind: input, shape index: {}]
  %s5 = inlined_call_operand.vmem [shape: f32[16,1024], index: 5, kind: output, shape index: {0}]
  %s6 = inlined_call_operand.vmem [shape: f32[16,8], index: 6, kind: output, shape index: {1}]
  %7 = xla_tuple %s5, %s6
  %s8 = sld [smem:[#allocation0]]
  $region58: #{quintuplet_forward.1} parent=0
    _
  %s10 = ssub.s32 1, %s8
  %s11 = scalar_select 0, %s10, %s8
  $region1: #{quintuplet_forward.1} parent=0
    #allocation2 [shape = 'u8[2097152]{0}', space=vmem, size = 0x200000, scoped, tag = 'input window, operand 1, single buffered']
    #allocation3 [shape = 's32[1]{0}', space=sflag, size = 0x4, scoped, tag = 'scoped memory for quintuplet_forward.1']
    #allocation4 [shape = 'u8[4096]{0}', space=vmem, size = 0x1000, scoped, tag = 'input window, operand 2, single buffered']
    #allocation5 [shape = 's32[1]{0}', space=sflag, size = 0x4, scoped, tag = 'scoped memory for quintuplet_forward.1']
    #allocation6 [shape = 'u8[512]{0}', space=vmem, size = 0x400, scoped, tag = 'input window, operand 4, single buffered']
    %12 = vsyncpa [#allocation3], 0
    %13 = vsyncpa [#allocation5], 0
    // Predicated region
    $region2: #{quintuplet_forward.1} parent=1 // pred_check
      _
    $region3: #{quintuplet_forward.1} parent=1 // pred_check_branch
      %15 = sbr.rel (0) target = $region5
    $region4: #{quintuplet_forward.1} parent=1 // pred_region
      _
    $region5: #{quintuplet_forward.1} parent=1 // pred_fallthru
      _
    // Predicated region
    $region6: #{quintuplet_forward.1} parent=1 // pred_check
      _
    $region7: #{quintuplet_forward.1} parent=1 // pred_check_branch
      %17 = sbr.rel (0) target = $region9
    $region8: #{quintuplet_forward.1} parent=1 // pred_region
      %s19 = ssub.s32 65536, 65536
      %20 = vsyncadd [#allocation3], %s19
      %s21 = sshll.u32 [#allocation2], 4
      %s22 = int_to_ptr.vmem [resolvable:$true] %s21
      %27 = dma.hbm_to_vmem [thread:$0]  %s1, 65536, %s22, [#allocation3], 512, 512, 32
    $region9: #{quintuplet_forward.1} parent=1 // pred_fallthru
      _
    // Predicated region
    $region10: #{quintuplet_forward.1} parent=1 // pred_check
      _
    $region11: #{quintuplet_forward.1} parent=1 // pred_check_branch
      %29 = sbr.rel (0) target = $region13
    $region12: #{quintuplet_forward.1} parent=1 // pred_region
      %s31 = ssub.s32 128, 128
      %32 = vsyncadd [#allocation5], %s31
      %s34 = sshll.u32 [#allocation4], 4
      %s35 = int_to_ptr.vmem [resolvable:$true] %s34
      %37 = dma.hbm_to_vmem [thread:$0]  %s2, 128, %s35, [#allocation5]
    $region13: #{quintuplet_forward.1} parent=1 // pred_fallthru
      _
    // Predicated region
    $region14: #{quintuplet_forward.1} parent=1 // pred_check
      _
    $region15: #{quintuplet_forward.1} parent=1 // pred_check_branch
      %39 = sbr.rel (0) target = $region17
    $region16: #{quintuplet_forward.1} parent=1 // pred_region
      _
    $region17: #{quintuplet_forward.1} parent=1 // pred_fallthru
      _
    // Predicated region
    $region18: #{quintuplet_forward.1} parent=1 // pred_check
      _
    $region19: #{quintuplet_forward.1} parent=1 // pred_check_branch
      %41 = sbr.rel (0) target = $region21
    $region20: #{quintuplet_forward.1} parent=1 // pred_region
      %s43 = ssub.s32 16, 16
      %44 = vsyncadd [#allocation5], %s43
      %s46 = sshll.u32 [#allocation6], 4
      %s47 = int_to_ptr.vmem [resolvable:$true] %s46
      %49 = dma.hbm_to_vmem [thread:$0]  %s4, 16, %s47, [#allocation5]
    $region21: #{quintuplet_forward.1} parent=1 // pred_fallthru
      _
    // Predicated region
    $region22: #{quintuplet_forward.1} parent=1 // pred_check
      _
    $region23: #{quintuplet_forward.1} parent=1 // pred_check_branch
      %51 = sbr.rel (0) target = $region25
    $region24: #{quintuplet_forward.1} parent=1 // pred_region
      %52 = dma.done [#allocation3], 65536
    $region25: #{quintuplet_forward.1} parent=1 // pred_fallthru
      _
    // Predicated region
    $region26: #{quintuplet_forward.1} parent=1 // pred_check
      _
    $region27: #{quintuplet_forward.1} parent=1 // pred_check_branch
      %54 = sbr.rel (0) target = $region29
    $region28: #{quintuplet_forward.1} parent=1 // pred_region
      %55 = dma.done [#allocation5], 128
    $region29: #{quintuplet_forward.1} parent=1 // pred_fallthru
      _
    // Predicated region
    $region30: #{quintuplet_forward.1} parent=1 // pred_check
      _
    $region31: #{quintuplet_forward.1} parent=1 // pred_check_branch
      %57 = sbr.rel (0) target = $region33
    $region32: #{quintuplet_forward.1} parent=1 // pred_region
      %58 = dma.done [#allocation5], 16
    $region33: #{quintuplet_forward.1} parent=1 // pred_fallthru
      _
    %p59 = scmp.eq.s32.totalorder 0, 0
    // Predicated region
    $region34: #{quintuplet_forward.1} parent=1 // pred_check
      %p60 = pneg %p59
    $region35: #{quintuplet_forward.1} parent=1 // pred_check_branch
      %62 = sbr.rel (%p60) target = $region37
    $region36: #{quintuplet_forward.1} parent=1 // pred_region
      %63 = vst [vmem:[%s5] sm:$0xff] 0.0
      %64 = vst [vmem:[%s5 + $0x8] sm:$0xff] 0.0
      %65 = vst [vmem:[%s5 + $0x10] sm:$0xff] 0.0
      %66 = vst [vmem:[%s5 + $0x18] sm:$0xff] 0.0
      %67 = vst [vmem:[%s5 + $0x20] sm:$0xff] 0.0
      %68 = vst [vmem:[%s5 + $0x28] sm:$0xff] 0.0
      %69 = vst [vmem:[%s5 + $0x30] sm:$0xff] 0.0
      %70 = vst [vmem:[%s5 + $0x38] sm:$0xff] 0.0
      %71 = vst [vmem:[%s5 + $0x40] sm:$0xff] 0.0
      %72 = vst [vmem:[%s5 + $0x48] sm:$0xff] 0.0
      %73 = vst [vmem:[%s5 + $0x50] sm:$0xff] 0.0
      %74 = vst [vmem:[%s5 + $0x58] sm:$0xff] 0.0
      %75 = vst [vmem:[%s5 + $0x60] sm:$0xff] 0.0
      %76 = vst [vmem:[%s5 + $0x68] sm:$0xff] 0.0
      %77 = vst [vmem:[%s5 + $0x70] sm:$0xff] 0.0
      %78 = vst [vmem:[%s5 + $0x78] sm:$0xff] 0.0
    $region37: #{quintuplet_forward.1} parent=1 // pred_fallthru
      _
    %v79 = vld [vmem:[%s5] sm:$0xff]
    %v80 = vld [vmem:[%s5 + $0x8] sm:$0xff]
    %v81 = vld [vmem:[%s5 + $0x10] sm:$0xff]
    %v82 = vld [vmem:[%s5 + $0x18] sm:$0xff]
    %v83 = vld [vmem:[%s5 + $0x20] sm:$0xff]
    %v84 = vld [vmem:[%s5 + $0x28] sm:$0xff]
    %v85 = vld [vmem:[%s5 + $0x30] sm:$0xff]
    %v86 = vld [vmem:[%s5 + $0x38] sm:$0xff]
    %v87 = vld [vmem:[%s5 + $0x40] sm:$0xff]
    %v88 = vld [vmem:[%s5 + $0x48] sm:$0xff]
    %v89 = vld [vmem:[%s5 + $0x50] sm:$0xff]
    %v90 = vld [vmem:[%s5 + $0x58] sm:$0xff]
    %v91 = vld [vmem:[%s5 + $0x60] sm:$0xff]
    %v92 = vld [vmem:[%s5 + $0x68] sm:$0xff]
    %v93 = vld [vmem:[%s5 + $0x70] sm:$0xff]
    %v94 = vld [vmem:[%s5 + $0x78] sm:$0xff]
    %v95 = vld [vmem:[%s0] sm:$0xff]
    %v96 = vld [vmem:[%s0 + $0x8] sm:$0xff]
    %v97 = vld [vmem:[%s0 + $0x10] sm:$0xff]
    %v98 = vld [vmem:[%s0 + $0x18] sm:$0xff]
    %v99 = vld [vmem:[%s0 + $0x20] sm:$0xff]
    %v100 = vld [vmem:[%s0 + $0x28] sm:$0xff]
    %v101 = vld [vmem:[%s0 + $0x30] sm:$0xff]
    %v102 = vld [vmem:[%s0 + $0x38] sm:$0xff]
    %v103 = vld [vmem:[#allocation2] sm:$0xff]
    %v104 = vld [vmem:[#allocation2 + $0x8] sm:$0xff]
    %v105 = vld [vmem:[#allocation2 + $0x10] sm:$0xff]
    %v106 = vld [vmem:[#allocation2 + $0x18] sm:$0xff]
    %v107 = vld [vmem:[#allocation2 + $0x20] sm:$0xff]
    %v108 = vld [vmem:[#allocation2 + $0x28] sm:$0xff]
    %v109 = vld [vmem:[#allocation2 + $0x30] sm:$0xff]
    %v110 = vld [vmem:[#allocation2 + $0x38] sm:$0xff]
    %v111 = vld [vmem:[#allocation2 + $0x40] sm:$0xff]
    %v112 = vld [vmem:[#allocation2 + $0x48] sm:$0xff]
    %v113 = vld [vmem:[#allocation2 + $0x50] sm:$0xff]
    %v114 = vld [vmem:[#allocation2 + $0x58] sm:$0xff]
    %v115 = vld [vmem:[#allocation2 + $0x60] sm:$0xff]
    %v116 = vld [vmem:[#allocation2 + $0x68] sm:$0xff]
    %v117 = vld [vmem:[#allocation2 + $0x70] sm:$0xff]
    %v118 = vld [vmem:[#allocation2 + $0x78] sm:$0xff]
    %v119 = vld [vmem:[#allocation2 + $0x80] sm:$0xff]
    %v120 = vld [vmem:[#allocation2 + $0x88] sm:$0xff]
    %v121 = vld [vmem:[#allocation2 + $0x90] sm:$0xff]
    %v122 = vld [vmem:[#allocation2 + $0x98] sm:$0xff]
    %v123 = vld [vmem:[#allocation2 + $0xa0] sm:$0xff]
    %v124 = vld [vmem:[#allocation2 + $0xa8] sm:$0xff]
    %v125 = vld [vmem:[#allocation2 + $0xb0] sm:$0xff]
    %v126 = vld [vmem:[#allocation2 + $0xb8] sm:$0xff]
    %v127 = vld [vmem:[#allocation2 + $0xc0] sm:$0xff]
    %v128 = vld [vmem:[#allocation2 + $0xc8] sm:$0xff]
    %v129 = vld [vmem:[#allocation2 + $0xd0] sm:$0xff]
    %v130 = vld [vmem:[#allocation2 + $0xd8] sm:$0xff]
    %v131 = vld [vmem:[#allocation2 + $0xe0] sm:$0xff]
    %v132 = vld [vmem:[#allocation2 + $0xe8] sm:$0xff]
    %v133 = vld [vmem:[#allocation2 + $0xf0] sm:$0xff]
    %v134 = vld [vmem:[#allocation2 + $0xf8] sm:$0xff]
    %v135 = vld [vmem:[#allocation2 + $0x100] sm:$0xff]
    %v136 = vld [vmem:[#allocation2 + $0x108] sm:$0xff]
    %v137 = vld [vmem:[#allocation2 + $0x110] sm:$0xff]
    %v138 = vld [vmem:[#allocation2 + $0x118] sm:$0xff]
    %v139 = vld [vmem:[#allocation2 + $0x120] sm:$0xff]
    %v140 = vld [vmem:[#allocation2 + $0x128] sm:$0xff]
    %v141 = vld [vmem:[#allocation2 + $0x130] sm:$0xff]
    %v142 = vld [vmem:[#allocation2 + $0x138] sm:$0xff]
    %v143 = vld [vmem:[#allocation2 + $0x140] sm:$0xff]
    %v144 = vld [vmem:[#allocation2 + $0x148] sm:$0xff]
    %v145 = vld [vmem:[#allocation2 + $0x150] sm:$0xff]
    %v146 = vld [vmem:[#allocation2 + $0x158] sm:$0xff]
    %v147 = vld [vmem:[#allocation2 + $0x160] sm:$0xff]
    %v148 = vld [vmem:[#allocation2 + $0x168] sm:$0xff]
    %v149 = vld [vmem:[#allocation2 + $0x170] sm:$0xff]
    %v150 = vld [vmem:[#allocation2 + $0x178] sm:$0xff]
    %v151 = vld [vmem:[#allocation2 + $0x180] sm:$0xff]
    %v152 = vld [vmem:[#allocation2 + $0x188] sm:$0xff]
    %v153 = vld [vmem:[#allocation2 + $0x190] sm:$0xff]
    %v154 = vld [vmem:[#allocation2 + $0x198] sm:$0xff]
    %v155 = vld [vmem:[#allocation2 + $0x1a0] sm:$0xff]
    %v156 = vld [vmem:[#allocation2 + $0x1a8] sm:$0xff]
    %v157 = vld [vmem:[#allocation2 + $0x1b0] sm:$0xff]
    %v158 = vld [vmem:[#allocation2 + $0x1b8] sm:$0xff]
    %v159 = vld [vmem:[#allocation2 + $0x1c0] sm:$0xff]
    %v160 = vld [vmem:[#allocation2 + $0x1c8] sm:$0xff]
    %v161 = vld [vmem:[#allocation2 + $0x1d0] sm:$0xff]
    %v162 = vld [vmem:[#allocation2 + $0x1d8] sm:$0xff]
    %v163 = vld [vmem:[#allocation2 + $0x1e0] sm:$0xff]
    %v164 = vld [vmem:[#allocation2 + $0x1e8] sm:$0xff]
    %v165 = vld [vmem:[#allocation2 + $0x1f0] sm:$0xff]
    %v166 = vld [vmem:[#allocation2 + $0x1f8] sm:$0xff]
    %v167 = vld [vmem:[#allocation2 + $0x200] sm:$0xff]
    %v168 = vld [vmem:[#allocation2 + $0x208] sm:$0xff]
    %v169 = vld [vmem:[#allocation2 + $0x210] sm:$0xff]
    %v170 = vld [vmem:[#allocation2 + $0x218] sm:$0xff]
    %v171 = vld [vmem:[#allocation2 + $0x220] sm:$0xff]
    %v172 = vld [vmem:[#allocation2 + $0x228] sm:$0xff]
    %v173 = vld [vmem:[#allocation2 + $0x230] sm:$0xff]
    %v174 = vld [vmem:[#allocation2 + $0x238] sm:$0xff]
    %v175 = vld [vmem:[#allocation2 + $0x240] sm:$0xff]
    %v176 = vld [vmem:[#allocation2 + $0x248] sm:$0xff]
    %v177 = vld [vmem:[#allocation2 + $0x250] sm:$0xff]
    %v178 = vld [vmem:[#allocation2 + $0x258] sm:$0xff]
    %v179 = vld [vmem:[#allocation2 + $0x260] sm:$0xff]
    %v180 = vld [vmem:[#allocation2 + $0x268] sm:$0xff]
    %v181 = vld [vmem:[#allocation2 + $0x270] sm:$0xff]
    %v182 = vld [vmem:[#allocation2 + $0x278] sm:$0xff]
    %v183 = vld [vmem:[#allocation2 + $0x280] sm:$0xff]
    %v184 = vld [vmem:[#allocation2 + $0x288] sm:$0xff]
    %v185 = vld [vmem:[#allocation2 + $0x290] sm:$0xff]
    %v186 = vld [vmem:[#allocation2 + $0x298] sm:$0xff]
    %v187 = vld [vmem:[#allocation2 + $0x2a0] sm:$0xff]
    %v188 = vld [vmem:[#allocation2 + $0x2a8] sm:$0xff]
    %v189 = vld [vmem:[#allocation2 + $0x2b0] sm:$0xff]
    %v190 = vld [vmem:[#allocation2 + $0x2b8] sm:$0xff]
    %v191 = vld [vmem:[#allocation2 + $0x2c0] sm:$0xff]
    %v192 = vld [vmem:[#allocation2 + $0x2c8] sm:$0xff]
    %v193 = vld [vmem:[#allocation2 + $0x2d0] sm:$0xff]
    %v194 = vld [vmem:[#allocation2 + $0x2d8] sm:$0xff]
    %v195 = vld [vmem:[#allocation2 + $0x2e0] sm:$0xff]
    %v196 = vld [vmem:[#allocation2 + $0x2e8] sm:$0xff]
    %v197 = vld [vmem:[#allocation2 + $0x2f0] sm:$0xff]
    %v198 = vld [vmem:[#allocation2 + $0x2f8] sm:$0xff]
    %v199 = vld [vmem:[#allocation2 + $0x300] sm:$0xff]
    %v200 = vld [vmem:[#allocation2 + $0x308] sm:$0xff]
    %v201 = vld [vmem:[#allocation2 + $0x310] sm:$0xff]
    %v202 = vld [vmem:[#allocation2 + $0x318] sm:$0xff]
    %v203 = vld [vmem:[#allocation2 + $0x320] sm:$0xff]
    %v204 = vld [vmem:[#allocation2 + $0x328] sm:$0xff]
    %v205 = vld [vmem:[#allocation2 + $0x330] sm:$0xff]
    %v206 = vld [vmem:[#allocation2 + $0x338] sm:$0xff]
    %v207 = vld [vmem:[#allocation2 + $0x340] sm:$0xff]
    %v208 = vld [vmem:[#allocation2 + $0x348] sm:$0xff]
    %v209 = vld [vmem:[#allocation2 + $0x350] sm:$0xff]
    %v210 = vld [vmem:[#allocation2 + $0x358] sm:$0xff]
    %v211 = vld [vmem:[#allocation2 + $0x360] sm:$0xff]
    %v212 = vld [vmem:[#allocation2 + $0x368] sm:$0xff]
    %v213 = vld [vmem:[#allocation2 + $0x370] sm:$0xff]
    %v214 = vld [vmem:[#allocation2 + $0x378] sm:$0xff]
    %v215 = vld [vmem:[#allocation2 + $0x380] sm:$0xff]
    %v216 = vld [vmem:[#allocation2 + $0x388] sm:$0xff]
    %v217 = vld [vmem:[#allocation2 + $0x390] sm:$0xff]
    %v218 = vld [vmem:[#allocation2 + $0x398] sm:$0xff]
    %v219 = vld [vmem:[#allocation2 + $0x3a0] sm:$0xff]
    %v220 = vld [vmem:[#allocation2 + $0x3a8] sm:$0xff]
    %v221 = vld [vmem:[#allocation2 + $0x3b0] sm:$0xff]
    %v222 = vld [vmem:[#allocation2 + $0x3b8] sm:$0xff]
    %v223 = vld [vmem:[#allocation2 + $0x3c0] sm:$0xff]
    %v224 = vld [vmem:[#allocation2 + $0x3c8] sm:$0xff]
    %v225 = vld [vmem:[#allocation2 + $0x3d0] sm:$0xff]
    %v226 = vld [vmem:[#allocation2 + $0x3d8] sm:$0xff]
    %v227 = vld [vmem:[#allocation2 + $0x3e0] sm:$0xff]
    %v228 = vld [vmem:[#allocation2 + $0x3e8] sm:$0xff]
    %v229 = vld [vmem:[#allocation2 + $0x3f0] sm:$0xff]
    %v230 = vld [vmem:[#allocation2 + $0x3f8] sm:$0xff]
    %v231 = vld [vmem:[#allocation2 + $0x400] sm:$0xff]
    %v232 = vld [vmem:[#allocation2 + $0x408] sm:$0xff]
    %v233 = vld [vmem:[#allocation2 + $0x410] sm:$0xff]
    %v234 = vld [vmem:[#allocation2 + $0x418] sm:$0xff]
    %v235 = vld [vmem:[#allocation2 + $0x420] sm:$0xff]
    %v236 = vld [vmem:[#allocation2 + $0x428] sm:$0xff]
    %v237 = vld [vmem:[#allocation2 + $0x430] sm:$0xff]
    %v238 = vld [vmem:[#allocation2 + $0x438] sm:$0xff]
    %v239 = vld [vmem:[#allocation2 + $0x440] sm:$0xff]
    %v240 = vld [vmem:[#allocation2 + $0x448] sm:$0xff]
    %v241 = vld [vmem:[#allocation2 + $0x450] sm:$0xff]
    %v242 = vld [vmem:[#allocation2 + $0x458] sm:$0xff]
    %v243 = vld [vmem:[#allocation2 + $0x460] sm:$0xff]
    %v244 = vld [vmem:[#allocation2 + $0x468] sm:$0xff]
    %v245 = vld [vmem:[#allocation2 + $0x470] sm:$0xff]
    %v246 = vld [vmem:[#allocation2 + $0x478] sm:$0xff]
    %v247 = vld [vmem:[#allocation2 + $0x480] sm:$0xff]
    %v248 = vld [vmem:[#allocation2 + $0x488] sm:$0xff]
    %v249 = vld [vmem:[#allocation2 + $0x490] sm:$0xff]
    %v250 = vld [vmem:[#allocation2 + $0x498] sm:$0xff]
    %v251 = vld [vmem:[#allocation2 + $0x4a0] sm:$0xff]
    %v252 = vld [vmem:[#allocation2 + $0x4a8] sm:$0xff]
    %v253 = vld [vmem:[#allocation2 + $0x4b0] sm:$0xff]
    %v254 = vld [vmem:[#allocation2 + $0x4b8] sm:$0xff]
    %v255 = vld [vmem:[#allocation2 + $0x4c0] sm:$0xff]
    %v256 = vld [vmem:[#allocation2 + $0x4c8] sm:$0xff]
    %v257 = vld [vmem:[#allocation2 + $0x4d0] sm:$0xff]
    %v258 = vld [vmem:[#allocation2 + $0x4d8] sm:$0xff]
    %v259 = vld [vmem:[#allocation2 + $0x4e0] sm:$0xff]
    %v260 = vld [vmem:[#allocation2 + $0x4e8] sm:$0xff]
    %v261 = vld [vmem:[#allocation2 + $0x4f0] sm:$0xff]
    %v262 = vld [vmem:[#allocation2 + $0x4f8] sm:$0xff]
    %v263 = vld [vmem:[#allocation2 + $0x500] sm:$0xff]
    %v264 = vld [vmem:[#allocation2 + $0x508] sm:$0xff]
    %v265 = vld [vmem:[#allocation2 + $0x510] sm:$0xff]
    %v266 = vld [vmem:[#allocation2 + $0x518] sm:$0xff]
    %v267 = vld [vmem:[#allocation2 + $0x520] sm:$0xff]
    %v268 = vld [vmem:[#allocation2 + $0x528] sm:$0xff]
    %v269 = vld [vmem:[#allocation2 + $0x530] sm:$0xff]
    %v270 = vld [vmem:[#allocation2 + $0x538] sm:$0xff]
    %v271 = vld [vmem:[#allocation2 + $0x540] sm:$0xff]
    %v272 = vld [vmem:[#allocation2 + $0x548] sm:$0xff]
    %v273 = vld [vmem:[#allocation2 + $0x550] sm:$0xff]
    %v274 = vld [vmem:[#allocation2 + $0x558] sm:$0xff]
    %v275 = vld [vmem:[#allocation2 + $0x560] sm:$0xff]
    %v276 = vld [vmem:[#allocation2 + $0x568] sm:$0xff]
    %v277 = vld [vmem:[#allocation2 + $0x570] sm:$0xff]
    %v278 = vld [vmem:[#allocation2 + $0x578] sm:$0xff]
    %v279 = vld [vmem:[#allocation2 + $0x580] sm:$0xff]
    %v280 = vld [vmem:[#allocation2 + $0x588] sm:$0xff]
    %v281 = vld [vmem:[#allocation2 + $0x590] sm:$0xff]
    %v282 = vld [vmem:[#allocation2 + $0x598] sm:$0xff]
    %v283 = vld [vmem:[#allocation2 + $0x5a0] sm:$0xff]
    %v284 = vld [vmem:[#allocation2 + $0x5a8] sm:$0xff]
    %v285 = vld [vmem:[#allocation2 + $0x5b0] sm:$0xff]
    %v286 = vld [vmem:[#allocation2 + $0x5b8] sm:$0xff]
    %v287 = vld [vmem:[#allocation2 + $0x5c0] sm:$0xff]
    %v288 = vld [vmem:[#allocation2 + $0x5c8] sm:$0xff]
    %v289 = vld [vmem:[#allocation2 + $0x5d0] sm:$0xff]
    %v290 = vld [vmem:[#allocation2 + $0x5d8] sm:$0xff]
    %v291 = vld [vmem:[#allocation2 + $0x5e0] sm:$0xff]
    %v292 = vld [vmem:[#allocation2 + $0x5e8] sm:$0xff]
    %v293 = vld [vmem:[#allocation2 + $0x5f0] sm:$0xff]
    %v294 = vld [vmem:[#allocation2 + $0x5f8] sm:$0xff]
    %v295 = vld [vmem:[#allocation2 + $0x600] sm:$0xff]
    %v296 = vld [vmem:[#allocation2 + $0x608] sm:$0xff]
    %v297 = vld [vmem:[#allocation2 + $0x610] sm:$0xff]
    %v298 = vld [vmem:[#allocation2 + $0x618] sm:$0xff]
    %v299 = vld [vmem:[#allocation2 + $0x620] sm:$0xff]
    %v300 = vld [vmem:[#allocation2 + $0x628] sm:$0xff]
    %v301 = vld [vmem:[#allocation2 + $0x630] sm:$0xff]
    %v302 = vld [vmem:[#allocation2 + $0x638] sm:$0xff]
    %v303 = vld [vmem:[#allocation2 + $0x640] sm:$0xff]
    %v304 = vld [vmem:[#allocation2 + $0x648] sm:$0xff]
    %v305 = vld [vmem:[#allocation2 + $0x650] sm:$0xff]
    %v306 = vld [vmem:[#allocation2 + $0x658] sm:$0xff]
    %v307 = vld [vmem:[#allocation2 + $0x660] sm:$0xff]
    %v308 = vld [vmem:[#allocation2 + $0x668] sm:$0xff]
    %v309 = vld [vmem:[#allocation2 + $0x670] sm:$0xff]
    %v310 = vld [vmem:[#allocation2 + $0x678] sm:$0xff]
    %v311 = vld [vmem:[#allocation2 + $0x680] sm:$0xff]
    %v312 = vld [vmem:[#allocation2 + $0x688] sm:$0xff]
    %v313 = vld [vmem:[#allocation2 + $0x690] sm:$0xff]
    %v314 = vld [vmem:[#allocation2 + $0x698] sm:$0xff]
    %v315 = vld [vmem:[#allocation2 + $0x6a0] sm:$0xff]
    %v316 = vld [vmem:[#allocation2 + $0x6a8] sm:$0xff]
    %v317 = vld [vmem:[#allocation2 + $0x6b0] sm:$0xff]
    %v318 = vld [vmem:[#allocation2 + $0x6b8] sm:$0xff]
    %v319 = vld [vmem:[#allocation2 + $0x6c0] sm:$0xff]
    %v320 = vld [vmem:[#allocation2 + $0x6c8] sm:$0xff]
    %v321 = vld [vmem:[#allocation2 + $0x6d0] sm:$0xff]
    %v322 = vld [vmem:[#allocation2 + $0x6d8] sm:$0xff]
    %v323 = vld [vmem:[#allocation2 + $0x6e0] sm:$0xff]
    %v324 = vld [vmem:[#allocation2 + $0x6e8] sm:$0xff]
    %v325 = vld [vmem:[#allocation2 + $0x6f0] sm:$0xff]
    %v326 = vld [vmem:[#allocation2 + $0x6f8] sm:$0xff]
    %v327 = vld [vmem:[#allocation2 + $0x700] sm:$0xff]
    %v328 = vld [vmem:[#allocation2 + $0x708] sm:$0xff]
    %v329 = vld [vmem:[#allocation2 + $0x710] sm:$0xff]
    %v330 = vld [vmem:[#allocation2 + $0x718] sm:$0xff]
    %v331 = vld [vmem:[#allocation2 + $0x720] sm:$0xff]
    %v332 = vld [vmem:[#allocation2 + $0x728] sm:$0xff]
    %v333 = vld [vmem:[#allocation2 + $0x730] sm:$0xff]
    %v334 = vld [vmem:[#allocation2 + $0x738] sm:$0xff]
    %v335 = vld [vmem:[#allocation2 + $0x740] sm:$0xff]
    %v336 = vld [vmem:[#allocation2 + $0x748] sm:$0xff]
    %v337 = vld [vmem:[#allocation2 + $0x750] sm:$0xff]
    %v338 = vld [vmem:[#allocation2 + $0x758] sm:$0xff]
    %v339 = vld [vmem:[#allocation2 + $0x760] sm:$0xff]
    %v340 = vld [vmem:[#allocation2 + $0x768] sm:$0xff]
    %v341 = vld [vmem:[#allocation2 + $0x770] sm:$0xff]
    %v342 = vld [vmem:[#allocation2 + $0x778] sm:$0xff]
    %v343 = vld [vmem:[#allocation2 + $0x780] sm:$0xff]
    %v344 = vld [vmem:[#allocation2 + $0x788] sm:$0xff]
    %v345 = vld [vmem:[#allocation2 + $0x790] sm:$0xff]
    %v346 = vld [vmem:[#allocation2 + $0x798] sm:$0xff]
    %v347 = vld [vmem:[#allocation2 + $0x7a0] sm:$0xff]
    %v348 = vld [vmem:[#allocation2 + $0x7a8] sm:$0xff]
    %v349 = vld [vmem:[#allocation2 + $0x7b0] sm:$0xff]
    %v350 = vld [vmem:[#allocation2 + $0x7b8] sm:$0xff]
    %v351 = vld [vmem:[#allocation2 + $0x7c0] sm:$0xff]
    %v352 = vld [vmem:[#allocation2 + $0x7c8] sm:$0xff]
    %v353 = vld [vmem:[#allocation2 + $0x7d0] sm:$0xff]
    %v354 = vld [vmem:[#allocation2 + $0x7d8] sm:$0xff]
    %v355 = vld [vmem:[#allocation2 + $0x7e0] sm:$0xff]
    %v356 = vld [vmem:[#allocation2 + $0x7e8] sm:$0xff]
    %v357 = vld [vmem:[#allocation2 + $0x7f0] sm:$0xff]
    %v358 = vld [vmem:[#allocation2 + $0x7f8] sm:$0xff]
    %v359 = vld [vmem:[#allocation2 + $0x800] sm:$0xff]
    %v360 = vld [vmem:[#allocation2 + $0x808] sm:$0xff]
    %v361 = vld [vmem:[#allocation2 + $0x810] sm:$0xff]
    %v362 = vld [vmem:[#allocation2 + $0x818] sm:$0xff]
    %v363 = vld [vmem:[#allocation2 + $0x820] sm:$0xff]
    %v364 = vld [vmem:[#allocation2 + $0x828] sm:$0xff]
    %v365 = vld [vmem:[#allocation2 + $0x830] sm:$0xff]
    %v366 = vld [vmem:[#allocation2 + $0x838] sm:$0xff]
    %v367 = vld [vmem:[#allocation2 + $0x840] sm:$0xff]
    %v368 = vld [vmem:[#allocation2 + $0x848] sm:$0xff]
    %v369 = vld [vmem:[#allocation2 + $0x850] sm:$0xff]
    %v370 = vld [vmem:[#allocation2 + $0x858] sm:$0xff]
    %v371 = vld [vmem:[#allocation2 + $0x860] sm:$0xff]
    %v372 = vld [vmem:[#allocation2 + $0x868] sm:$0xff]
    %v373 = vld [vmem:[#allocation2 + $0x870] sm:$0xff]
    %v374 = vld [vmem:[#allocation2 + $0x878] sm:$0xff]
    %v375 = vld [vmem:[#allocation2 + $0x880] sm:$0xff]
    %v376 = vld [vmem:[#allocation2 + $0x888] sm:$0xff]
    %v377 = vld [vmem:[#allocation2 + $0x890] sm:$0xff]
    %v378 = vld [vmem:[#allocation2 + $0x898] sm:$0xff]
    %v379 = vld [vmem:[#allocation2 + $0x8a0] sm:$0xff]
    %v380 = vld [vmem:[#allocation2 + $0x8a8] sm:$0xff]
    %v381 = vld [vmem:[#allocation2 + $0x8b0] sm:$0xff]
    %v382 = vld [vmem:[#allocation2 + $0x8b8] sm:$0xff]
    %v383 = vld [vmem:[#allocation2 + $0x8c0] sm:$0xff]
    %v384 = vld [vmem:[#allocation2 + $0x8c8] sm:$0xff]
    %v385 = vld [vmem:[#allocation2 + $0x8d0] sm:$0xff]
    %v386 = vld [vmem:[#allocation2 + $0x8d8] sm:$0xff]
    %v387 = vld [vmem:[#allocation2 + $0x8e0] sm:$0xff]
    %v388 = vld [vmem:[#allocation2 + $0x8e8] sm:$0xff]
    %v389 = vld [vmem:[#allocation2 + $0x8f0] sm:$0xff]
    %v390 = vld [vmem:[#allocation2 + $0x8f8] sm:$0xff]
    %v391 = vld [vmem:[#allocation2 + $0x900] sm:$0xff]
    %v392 = vld [vmem:[#allocation2 + $0x908] sm:$0xff]
    %v393 = vld [vmem:[#allocation2 + $0x910] sm:$0xff]
    %v394 = vld [vmem:[#allocation2 + $0x918] sm:$0xff]
    %v395 = vld [vmem:[#allocation2 + $0x920] sm:$0xff]
    %v396 = vld [vmem:[#allocation2 + $0x928] sm:$0xff]
    %v397 = vld [vmem:[#allocation2 + $0x930] sm:$0xff]
    %v398 = vld [vmem:[#allocation2 + $0x938] sm:$0xff]
    %v399 = vld [vmem:[#allocation2 + $0x940] sm:$0xff]
    %v400 = vld [vmem:[#allocation2 + $0x948] sm:$0xff]
    %v401 = vld [vmem:[#allocation2 + $0x950] sm:$0xff]
    %v402 = vld [vmem:[#allocation2 + $0x958] sm:$0xff]
    %v403 = vld [vmem:[#allocation2 + $0x960] sm:$0xff]
    %v404 = vld [vmem:[#allocation2 + $0x968] sm:$0xff]
    %v405 = vld [vmem:[#allocation2 + $0x970] sm:$0xff]
    %v406 = vld [vmem:[#allocation2 + $0x978] sm:$0xff]
    %v407 = vld [vmem:[#allocation2 + $0x980] sm:$0xff]
    %v408 = vld [vmem:[#allocation2 + $0x988] sm:$0xff]
    %v409 = vld [vmem:[#allocation2 + $0x990] sm:$0xff]
    %v410 = vld [vmem:[#allocation2 + $0x998] sm:$0xff]
    %v411 = vld [vmem:[#allocation2 + $0x9a0] sm:$0xff]
    %v412 = vld [vmem:[#allocation2 + $0x9a8] sm:$0xff]
    %v413 = vld [vmem:[#allocation2 + $0x9b0] sm:$0xff]
    %v414 = vld [vmem:[#allocation2 + $0x9b8] sm:$0xff]
    %v415 = vld [vmem:[#allocation2 + $0x9c0] sm:$0xff]
    %v416 = vld [vmem:[#allocation2 + $0x9c8] sm:$0xff]
    %v417 = vld [vmem:[#allocation2 + $0x9d0] sm:$0xff]
    %v418 = vld [vmem:[#allocation2 + $0x9d8] sm:$0xff]
    %v419 = vld [vmem:[#allocation2 + $0x9e0] sm:$0xff]
    %v420 = vld [vmem:[#allocation2 + $0x9e8] sm:$0xff]
    %v421 = vld [vmem:[#allocation2 + $0x9f0] sm:$0xff]
    %v422 = vld [vmem:[#allocation2 + $0x9f8] sm:$0xff]
    %v423 = vld [vmem:[#allocation2 + $0xa00] sm:$0xff]
    %v424 = vld [vmem:[#allocation2 + $0xa08] sm:$0xff]
    %v425 = vld [vmem:[#allocation2 + $0xa10] sm:$0xff]
    %v426 = vld [vmem:[#allocation2 + $0xa18] sm:$0xff]
    %v427 = vld [vmem:[#allocation2 + $0xa20] sm:$0xff]
    %v428 = vld [vmem:[#allocation2 + $0xa28] sm:$0xff]
    %v429 = vld [vmem:[#allocation2 + $0xa30] sm:$0xff]
    %v430 = vld [vmem:[#allocation2 + $0xa38] sm:$0xff]
    %v431 = vld [vmem:[#allocation2 + $0xa40] sm:$0xff]
    %v432 = vld [vmem:[#allocation2 + $0xa48] sm:$0xff]
    %v433 = vld [vmem:[#allocation2 + $0xa50] sm:$0xff]
    %v434 = vld [vmem:[#allocation2 + $0xa58] sm:$0xff]
    %v435 = vld [vmem:[#allocation2 + $0xa60] sm:$0xff]
    %v436 = vld [vmem:[#allocation2 + $0xa68] sm:$0xff]
    %v437 = vld [vmem:[#allocation2 + $0xa70] sm:$0xff]
    %v438 = vld [vmem:[#allocation2 + $0xa78] sm:$0xff]
    %v439 = vld [vmem:[#allocation2 + $0xa80] sm:$0xff]
    %v440 = vld [vmem:[#allocation2 + $0xa88] sm:$0xff]
    %v441 = vld [vmem:[#allocation2 + $0xa90] sm:$0xff]
    %v442 = vld [vmem:[#allocation2 + $0xa98] sm:$0xff]
    %v443 = vld [vmem:[#allocation2 + $0xaa0] sm:$0xff]
    %v444 = vld [vmem:[#allocation2 + $0xaa8] sm:$0xff]
    %v445 = vld [vmem:[#allocation2 + $0xab0] sm:$0xff]
    %v446 = vld [vmem:[#allocation2 + $0xab8] sm:$0xff]
    %v447 = vld [vmem:[#allocation2 + $0xac0] sm:$0xff]
    %v448 = vld [vmem:[#allocation2 + $0xac8] sm:$0xff]
    %v449 = vld [vmem:[#allocation2 + $0xad0] sm:$0xff]
    %v450 = vld [vmem:[#allocation2 + $0xad8] sm:$0xff]
    %v451 = vld [vmem:[#allocation2 + $0xae0] sm:$0xff]
    %v452 = vld [vmem:[#allocation2 + $0xae8] sm:$0xff]
    %v453 = vld [vmem:[#allocation2 + $0xaf0] sm:$0xff]
    %v454 = vld [vmem:[#allocation2 + $0xaf8] sm:$0xff]
    %v455 = vld [vmem:[#allocation2 + $0xb00] sm:$0xff]
    %v456 = vld [vmem:[#allocation2 + $0xb08] sm:$0xff]
    %v457 = vld [vmem:[#allocation2 + $0xb10] sm:$0xff]
    %v458 = vld [vmem:[#allocation2 + $0xb18] sm:$0xff]
    %v459 = vld [vmem:[#allocation2 + $0xb20] sm:$0xff]
    %v460 = vld [vmem:[#allocation2 + $0xb28] sm:$0xff]
    %v461 = vld [vmem:[#allocation2 + $0xb30] sm:$0xff]
    %v462 = vld [vmem:[#allocation2 + $0xb38] sm:$0xff]
    %v463 = vld [vmem:[#allocation2 + $0xb40] sm:$0xff]
    %v464 = vld [vmem:[#allocation2 + $0xb48] sm:$0xff]
    %v465 = vld [vmem:[#allocation2 + $0xb50] sm:$0xff]
    %v466 = vld [vmem:[#allocation2 + $0xb58] sm:$0xff]
    %v467 = vld [vmem:[#allocation2 + $0xb60] sm:$0xff]
    %v468 = vld [vmem:[#allocation2 + $0xb68] sm:$0xff]
    %v469 = vld [vmem:[#allocation2 + $0xb70] sm:$0xff]
    %v470 = vld [vmem:[#allocation2 + $0xb78] sm:$0xff]
    %v471 = vld [vmem:[#allocation2 + $0xb80] sm:$0xff]
    %v472 = vld [vmem:[#allocation2 + $0xb88] sm:$0xff]
    %v473 = vld [vmem:[#allocation2 + $0xb90] sm:$0xff]
    %v474 = vld [vmem:[#allocation2 + $0xb98] sm:$0xff]
    %v475 = vld [vmem:[#allocation2 + $0xba0] sm:$0xff]
    %v476 = vld [vmem:[#allocation2 + $0xba8] sm:$0xff]
    %v477 = vld [vmem:[#allocation2 + $0xbb0] sm:$0xff]
    %v478 = vld [vmem:[#allocation2 + $0xbb8] sm:$0xff]
    %v479 = vld [vmem:[#allocation2 + $0xbc0] sm:$0xff]
    %v480 = vld [vmem:[#allocation2 + $0xbc8] sm:$0xff]
    %v481 = vld [vmem:[#allocation2 + $0xbd0] sm:$0xff]
    %v482 = vld [vmem:[#allocation2 + $0xbd8] sm:$0xff]
    %v483 = vld [vmem:[#allocation2 + $0xbe0] sm:$0xff]
    %v484 = vld [vmem:[#allocation2 + $0xbe8] sm:$0xff]
    %v485 = vld [vmem:[#allocation2 + $0xbf0] sm:$0xff]
    %v486 = vld [vmem:[#allocation2 + $0xbf8] sm:$0xff]
    %v487 = vld [vmem:[#allocation2 + $0xc00] sm:$0xff]
    %v488 = vld [vmem:[#allocation2 + $0xc08] sm:$0xff]
    %v489 = vld [vmem:[#allocation2 + $0xc10] sm:$0xff]
    %v490 = vld [vmem:[#allocation2 + $0xc18] sm:$0xff]
    %v491 = vld [vmem:[#allocation2 + $0xc20] sm:$0xff]
    %v492 = vld [vmem:[#allocation2 + $0xc28] sm:$0xff]
    %v493 = vld [vmem:[#allocation2 + $0xc30] sm:$0xff]
    %v494 = vld [vmem:[#allocation2 + $0xc38] sm:$0xff]
    %v495 = vld [vmem:[#allocation2 + $0xc40] sm:$0xff]
    %v496 = vld [vmem:[#allocation2 + $0xc48] sm:$0xff]
    %v497 = vld [vmem:[#allocation2 + $0xc50] sm:$0xff]
    %v498 = vld [vmem:[#allocation2 + $0xc58] sm:$0xff]
    %v499 = vld [vmem:[#allocation2 + $0xc60] sm:$0xff]
    %v500 = vld [vmem:[#allocation2 + $0xc68] sm:$0xff]
    %v501 = vld [vmem:[#allocation2 + $0xc70] sm:$0xff]
    %v502 = vld [vmem:[#allocation2 + $0xc78] sm:$0xff]
    %v503 = vld [vmem:[#allocation2 + $0xc80] sm:$0xff]
    %v504 = vld [vmem:[#allocation2 + $0xc88] sm:$0xff]
    %v505 = vld [vmem:[#allocation2 + $0xc90] sm:$0xff]
    %v506 = vld [vmem:[#allocation2 + $0xc98] sm:$0xff]
    %v507 = vld [vmem:[#allocation2 + $0xca0] sm:$0xff]
    %v508 = vld [vmem:[#allocation2 + $0xca8] sm:$0xff]
    %v509 = vld [vmem:[#allocation2 + $0xcb0] sm:$0xff]
    %v510 = vld [vmem:[#allocation2 + $0xcb8] sm:$0xff]
    %v511 = vld [vmem:[#allocation2 + $0xcc0] sm:$0xff]
    %v512 = vld [vmem:[#allocation2 + $0xcc8] sm:$0xff]
    %v513 = vld [vmem:[#allocation2 + $0xcd0] sm:$0xff]
    %v514 = vld [vmem:[#allocation2 + $0xcd8] sm:$0xff]
    %v515 = vld [vmem:[#allocation2 + $0xce0] sm:$0xff]
    %v516 = vld [vmem:[#allocation2 + $0xce8] sm:$0xff]
    %v517 = vld [vmem:[#allocation2 + $0xcf0] sm:$0xff]
    %v518 = vld [vmem:[#allocation2 + $0xcf8] sm:$0xff]
    %v519 = vld [vmem:[#allocation2 + $0xd00] sm:$0xff]
    %v520 = vld [vmem:[#allocation2 + $0xd08] sm:$0xff]
    %v521 = vld [vmem:[#allocation2 + $0xd10] sm:$0xff]
    %v522 = vld [vmem:[#allocation2 + $0xd18] sm:$0xff]
    %v523 = vld [vmem:[#allocation2 + $0xd20] sm:$0xff]
    %v524 = vld [vmem:[#allocation2 + $0xd28] sm:$0xff]
    %v525 = vld [vmem:[#allocation2 + $0xd30] sm:$0xff]
    %v526 = vld [vmem:[#allocation2 + $0xd38] sm:$0xff]
    %v527 = vld [vmem:[#allocation2 + $0xd40] sm:$0xff]
    %v528 = vld [vmem:[#allocation2 + $0xd48] sm:$0xff]
    %v529 = vld [vmem:[#allocation2 + $0xd50] sm:$0xff]
    %v530 = vld [vmem:[#allocation2 + $0xd58] sm:$0xff]
    %v531 = vld [vmem:[#allocation2 + $0xd60] sm:$0xff]
    %v532 = vld [vmem:[#allocation2 + $0xd68] sm:$0xff]
    %v533 = vld [vmem:[#allocation2 + $0xd70] sm:$0xff]
    %v534 = vld [vmem:[#allocation2 + $0xd78] sm:$0xff]
    %v535 = vld [vmem:[#allocation2 + $0xd80] sm:$0xff]
    %v536 = vld [vmem:[#allocation2 + $0xd88] sm:$0xff]
    %v537 = vld [vmem:[#allocation2 + $0xd90] sm:$0xff]
    %v538 = vld [vmem:[#allocation2 + $0xd98] sm:$0xff]
    %v539 = vld [vmem:[#allocation2 + $0xda0] sm:$0xff]
    %v540 = vld [vmem:[#allocation2 + $0xda8] sm:$0xff]
    %v541 = vld [vmem:[#allocation2 + $0xdb0] sm:$0xff]
    %v542 = vld [vmem:[#allocation2 + $0xdb8] sm:$0xff]
    %v543 = vld [vmem:[#allocation2 + $0xdc0] sm:$0xff]
    %v544 = vld [vmem:[#allocation2 + $0xdc8] sm:$0xff]
    %v545 = vld [vmem:[#allocation2 + $0xdd0] sm:$0xff]
    %v546 = vld [vmem:[#allocation2 + $0xdd8] sm:$0xff]
    %v547 = vld [vmem:[#allocation2 + $0xde0] sm:$0xff]
    %v548 = vld [vmem:[#allocation2 + $0xde8] sm:$0xff]
    %v549 = vld [vmem:[#allocation2 + $0xdf0] sm:$0xff]
    %v550 = vld [vmem:[#allocation2 + $0xdf8] sm:$0xff]
    %v551 = vld [vmem:[#allocation2 + $0xe00] sm:$0xff]
    %v552 = vld [vmem:[#allocation2 + $0xe08] sm:$0xff]
    %v553 = vld [vmem:[#allocation2 + $0xe10] sm:$0xff]
    %v554 = vld [vmem:[#allocation2 + $0xe18] sm:$0xff]
    %v555 = vld [vmem:[#allocation2 + $0xe20] sm:$0xff]
    %v556 = vld [vmem:[#allocation2 + $0xe28] sm:$0xff]
    %v557 = vld [vmem:[#allocation2 + $0xe30] sm:$0xff]
    %v558 = vld [vmem:[#allocation2 + $0xe38] sm:$0xff]
    %v559 = vld [vmem:[#allocation2 + $0xe40] sm:$0xff]
    %v560 = vld [vmem:[#allocation2 + $0xe48] sm:$0xff]
    %v561 = vld [vmem:[#allocation2 + $0xe50] sm:$0xff]
    %v562 = vld [vmem:[#allocation2 + $0xe58] sm:$0xff]
    %v563 = vld [vmem:[#allocation2 + $0xe60] sm:$0xff]
    %v564 = vld [vmem:[#allocation2 + $0xe68] sm:$0xff]
    %v565 = vld [vmem:[#allocation2 + $0xe70] sm:$0xff]
    %v566 = vld [vmem:[#allocation2 + $0xe78] sm:$0xff]
    %v567 = vld [vmem:[#allocation2 + $0xe80] sm:$0xff]
    %v568 = vld [vmem:[#allocation2 + $0xe88] sm:$0xff]
    %v569 = vld [vmem:[#allocation2 + $0xe90] sm:$0xff]
    %v570 = vld [vmem:[#allocation2 + $0xe98] sm:$0xff]
    %v571 = vld [vmem:[#allocation2 + $0xea0] sm:$0xff]
    %v572 = vld [vmem:[#allocation2 + $0xea8] sm:$0xff]
    %v573 = vld [vmem:[#allocation2 + $0xeb0] sm:$0xff]
    %v574 = vld [vmem:[#allocation2 + $0xeb8] sm:$0xff]
    %v575 = vld [vmem:[#allocation2 + $0xec0] sm:$0xff]
    %v576 = vld [vmem:[#allocation2 + $0xec8] sm:$0xff]
    %v577 = vld [vmem:[#allocation2 + $0xed0] sm:$0xff]
    %v578 = vld [vmem:[#allocation2 + $0xed8] sm:$0xff]
    %v579 = vld [vmem:[#allocation2 + $0xee0] sm:$0xff]
    %v580 = vld [vmem:[#allocation2 + $0xee8] sm:$0xff]
    %v581 = vld [vmem:[#allocation2 + $0xef0] sm:$0xff]
    %v582 = vld [vmem:[#allocation2 + $0xef8] sm:$0xff]
    %v583 = vld [vmem:[#allocation2 + $0xf00] sm:$0xff]
    %v584 = vld [vmem:[#allocation2 + $0xf08] sm:$0xff]
    %v585 = vld [vmem:[#allocation2 + $0xf10] sm:$0xff]
    %v586 = vld [vmem:[#allocation2 + $0xf18] sm:$0xff]
    %v587 = vld [vmem:[#allocation2 + $0xf20] sm:$0xff]
    %v588 = vld [vmem:[#allocation2 + $0xf28] sm:$0xff]
    %v589 = vld [vmem:[#allocation2 + $0xf30] sm:$0xff]
    %v590 = vld [vmem:[#allocation2 + $0xf38] sm:$0xff]
    %v591 = vld [vmem:[#allocation2 + $0xf40] sm:$0xff]
    %v592 = vld [vmem:[#allocation2 + $0xf48] sm:$0xff]
    %v593 = vld [vmem:[#allocation2 + $0xf50] sm:$0xff]
    %v594 = vld [vmem:[#allocation2 + $0xf58] sm:$0xff]
    %v595 = vld [vmem:[#allocation2 + $0xf60] sm:$0xff]
    %v596 = vld [vmem:[#allocation2 + $0xf68] sm:$0xff]
    %v597 = vld [vmem:[#allocation2 + $0xf70] sm:$0xff]
    %v598 = vld [vmem:[#allocation2 + $0xf78] sm:$0xff]
    %v599 = vld [vmem:[#allocation2 + $0xf80] sm:$0xff]
    %v600 = vld [vmem:[#allocation2 + $0xf88] sm:$0xff]
    %v601 = vld [vmem:[#allocation2 + $0xf90] sm:$0xff]
    %v602 = vld [vmem:[#allocation2 + $0xf98] sm:$0xff]
    %v603 = vld [vmem:[#allocation2 + $0xfa0] sm:$0xff]
    %v604 = vld [vmem:[#allocation2 + $0xfa8] sm:$0xff]
    %v605 = vld [vmem:[#allocation2 + $0xfb0] sm:$0xff]
    %v606 = vld [vmem:[#allocation2 + $0xfb8] sm:$0xff]
    %v607 = vld [vmem:[#allocation2 + $0xfc0] sm:$0xff]
    %v608 = vld [vmem:[#allocation2 + $0xfc8] sm:$0xff]
    %v609 = vld [vmem:[#allocation2 + $0xfd0] sm:$0xff]
    %v610 = vld [vmem:[#allocation2 + $0xfd8] sm:$0xff]
    %v611 = vld [vmem:[#allocation2 + $0xfe0] sm:$0xff]
    %v612 = vld [vmem:[#allocation2 + $0xfe8] sm:$0xff]
    %v613 = vld [vmem:[#allocation2 + $0xff0] sm:$0xff]
    %v614 = vld [vmem:[#allocation2 + $0xff8] sm:$0xff]
    %v623 = vunpack.c.l.b16 %v95
    %v624 = vunpack.c.h.b16 %v95
    %v625 = vunpack.c.l.b16 %v96
    %v626 = vunpack.c.h.b16 %v96
    %v627 = vunpack.c.l.b16 %v97
    %v628 = vunpack.c.h.b16 %v97
    %v629 = vunpack.c.l.b16 %v98
    %v630 = vunpack.c.h.b16 %v98
    %v631 = vunpack.c.l.b16 %v99
    %v632 = vunpack.c.h.b16 %v99
    %v633 = vunpack.c.l.b16 %v100
    %v634 = vunpack.c.h.b16 %v100
    %v635 = vunpack.c.l.b16 %v101
    %v636 = vunpack.c.h.b16 %v101
    %v637 = vunpack.c.l.b16 %v102
    %v638 = vunpack.c.h.b16 %v102
    %v639 = vpack.c.b16 %v631, %v623
    %v640 = vpack.c.b16 %v632, %v624
    %v641 = vpack.c.b16 %v633, %v625
    %v642 = vpack.c.b16 %v634, %v626
    %v643 = vpack.c.b16 %v635, %v627
    %v644 = vpack.c.b16 %v636, %v628
    %v645 = vpack.c.b16 %v637, %v629
    %v646 = vpack.c.b16 %v638, %v630
    %v1167 = vunpack.c.l.b16 %v103
    %v1168 = vunpack.c.h.b16 %v103
    %v1169 = vunpack.c.l.b16 %v104
    %v1170 = vunpack.c.h.b16 %v104
    %v1171 = vunpack.c.l.b16 %v105
    %v1172 = vunpack.c.h.b16 %v105
    %v1173 = vunpack.c.l.b16 %v106
    %v1174 = vunpack.c.h.b16 %v106
    %v1175 = vunpack.c.l.b16 %v107
    %v1176 = vunpack.c.h.b16 %v107
    %v1177 = vunpack.c.l.b16 %v108
    %v1178 = vunpack.c.h.b16 %v108
    %v1179 = vunpack.c.l.b16 %v109
    %v1180 = vunpack.c.h.b16 %v109
    %v1181 = vunpack.c.l.b16 %v110
    %v1182 = vunpack.c.h.b16 %v110
    %v1183 = vunpack.c.l.b16 %v111
    %v1184 = vunpack.c.h.b16 %v111
    %v1185 = vunpack.c.l.b16 %v112
    %v1186 = vunpack.c.h.b16 %v112
    %v1187 = vunpack.c.l.b16 %v113
    %v1188 = vunpack.c.h.b16 %v113
    %v1189 = vunpack.c.l.b16 %v114
    %v1190 = vunpack.c.h.b16 %v114
    %v1191 = vunpack.c.l.b16 %v115
    %v1192 = vunpack.c.h.b16 %v115
    %v1193 = vunpack.c.l.b16 %v116
    %v1194 = vunpack.c.h.b16 %v116
    %v1195 = vunpack.c.l.b16 %v117
    %v1196 = vunpack.c.h.b16 %v117
    %v1197 = vunpack.c.l.b16 %v118
    %v1198 = vunpack.c.h.b16 %v118
    %v1199 = vunpack.c.l.b16 %v119
    %v1200 = vunpack.c.h.b16 %v119
    %v1201 = vunpack.c.l.b16 %v120
    %v1202 = vunpack.c.h.b16 %v120
    %v1203 = vunpack.c.l.b16 %v121
    %v1204 = vunpack.c.h.b16 %v121
    %v1205 = vunpack.c.l.b16 %v122
    %v1206 = vunpack.c.h.b16 %v122
    %v1207 = vunpack.c.l.b16 %v123
    %v1208 = vunpack.c.h.b16 %v123
    %v1209 = vunpack.c.l.b16 %v124
    %v1210 = vunpack.c.h.b16 %v124
    %v1211 = vunpack.c.l.b16 %v125
    %v1212 = vunpack.c.h.b16 %v125
    %v1213 = vunpack.c.l.b16 %v126
    %v1214 = vunpack.c.h.b16 %v126
    %v1215 = vunpack.c.l.b16 %v127
    %v1216 = vunpack.c.h.b16 %v127
    %v1217 = vunpack.c.l.b16 %v128
    %v1218 = vunpack.c.h.b16 %v128
    %v1219 = vunpack.c.l.b16 %v129
    %v1220 = vunpack.c.h.b16 %v129
    %v1221 = vunpack.c.l.b16 %v130
    %v1222 = vunpack.c.h.b16 %v130
    %v1223 = vunpack.c.l.b16 %v131
    %v1224 = vunpack.c.h.b16 %v131
    %v1225 = vunpack.c.l.b16 %v132
    %v1226 = vunpack.c.h.b16 %v132
    %v1227 = vunpack.c.l.b16 %v133
    %v1228 = vunpack.c.h.b16 %v133
    %v1229 = vunpack.c.l.b16 %v134
    %v1230 = vunpack.c.h.b16 %v134
    %v1231 = vunpack.c.l.b16 %v135
    %v1232 = vunpack.c.h.b16 %v135
    %v1233 = vunpack.c.l.b16 %v136
    %v1234 = vunpack.c.h.b16 %v136
    %v1235 = vunpack.c.l.b16 %v137
    %v1236 = vunpack.c.h.b16 %v137
    %v1237 = vunpack.c.l.b16 %v138
    %v1238 = vunpack.c.h.b16 %v138
    %v1239 = vunpack.c.l.b16 %v139
    %v1240 = vunpack.c.h.b16 %v139
    %v1241 = vunpack.c.l.b16 %v140
    %v1242 = vunpack.c.h.b16 %v140
    %v1243 = vunpack.c.l.b16 %v141
    %v1244 = vunpack.c.h.b16 %v141
    %v1245 = vunpack.c.l.b16 %v142
    %v1246 = vunpack.c.h.b16 %v142
    %v1247 = vunpack.c.l.b16 %v143
    %v1248 = vunpack.c.h.b16 %v143
    %v1249 = vunpack.c.l.b16 %v144
    %v1250 = vunpack.c.h.b16 %v144
    %v1251 = vunpack.c.l.b16 %v145
    %v1252 = vunpack.c.h.b16 %v145
    %v1253 = vunpack.c.l.b16 %v146
    %v1254 = vunpack.c.h.b16 %v146
    %v1255 = vunpack.c.l.b16 %v147
    %v1256 = vunpack.c.h.b16 %v147
    %v1257 = vunpack.c.l.b16 %v148
    %v1258 = vunpack.c.h.b16 %v148
    %v1259 = vunpack.c.l.b16 %v149
    %v1260 = vunpack.c.h.b16 %v149
    %v1261 = vunpack.c.l.b16 %v150
    %v1262 = vunpack.c.h.b16 %v150
    %v1263 = vunpack.c.l.b16 %v151
    %v1264 = vunpack.c.h.b16 %v151
    %v1265 = vunpack.c.l.b16 %v152
    %v1266 = vunpack.c.h.b16 %v152
    %v1267 = vunpack.c.l.b16 %v153
    %v1268 = vunpack.c.h.b16 %v153
    %v1269 = vunpack.c.l.b16 %v154
    %v1270 = vunpack.c.h.b16 %v154
    %v1271 = vunpack.c.l.b16 %v155
    %v1272 = vunpack.c.h.b16 %v155
    %v1273 = vunpack.c.l.b16 %v156
    %v1274 = vunpack.c.h.b16 %v156
    %v1275 = vunpack.c.l.b16 %v157
    %v1276 = vunpack.c.h.b16 %v157
    %v1277 = vunpack.c.l.b16 %v158
    %v1278 = vunpack.c.h.b16 %v158
    %v1279 = vunpack.c.l.b16 %v159
    %v1280 = vunpack.c.h.b16 %v159
    %v1281 = vunpack.c.l.b16 %v160
    %v1282 = vunpack.c.h.b16 %v160
    %v1283 = vunpack.c.l.b16 %v161
    %v1284 = vunpack.c.h.b16 %v161
    %v1285 = vunpack.c.l.b16 %v162
    %v1286 = vunpack.c.h.b16 %v162
    %v1287 = vunpack.c.l.b16 %v163
    %v1288 = vunpack.c.h.b16 %v163
    %v1289 = vunpack.c.l.b16 %v164
    %v1290 = vunpack.c.h.b16 %v164
    %v1291 = vunpack.c.l.b16 %v165
    %v1292 = vunpack.c.h.b16 %v165
    %v1293 = vunpack.c.l.b16 %v166
    %v1294 = vunpack.c.h.b16 %v166
    %v1295 = vunpack.c.l.b16 %v167
    %v1296 = vunpack.c.h.b16 %v167
    %v1297 = vunpack.c.l.b16 %v168
    %v1298 = vunpack.c.h.b16 %v168
    %v1299 = vunpack.c.l.b16 %v169
    %v1300 = vunpack.c.h.b16 %v169
    %v1301 = vunpack.c.l.b16 %v170
    %v1302 = vunpack.c.h.b16 %v170
    %v1303 = vunpack.c.l.b16 %v171
    %v1304 = vunpack.c.h.b16 %v171
    %v1305 = vunpack.c.l.b16 %v172
    %v1306 = vunpack.c.h.b16 %v172
    %v1307 = vunpack.c.l.b16 %v173
    %v1308 = vunpack.c.h.b16 %v173
    %v1309 = vunpack.c.l.b16 %v174
    %v1310 = vunpack.c.h.b16 %v174
    %v1311 = vunpack.c.l.b16 %v175
    %v1312 = vunpack.c.h.b16 %v175
    %v1313 = vunpack.c.l.b16 %v176
    %v1314 = vunpack.c.h.b16 %v176
    %v1315 = vunpack.c.l.b16 %v177
    %v1316 = vunpack.c.h.b16 %v177
    %v1317 = vunpack.c.l.b16 %v178
    %v1318 = vunpack.c.h.b16 %v178
    %v1319 = vunpack.c.l.b16 %v179
    %v1320 = vunpack.c.h.b16 %v179
    %v1321 = vunpack.c.l.b16 %v180
    %v1322 = vunpack.c.h.b16 %v180
    %v1323 = vunpack.c.l.b16 %v181
    %v1324 = vunpack.c.h.b16 %v181
    %v1325 = vunpack.c.l.b16 %v182
    %v1326 = vunpack.c.h.b16 %v182
    %v1327 = vunpack.c.l.b16 %v183
    %v1328 = vunpack.c.h.b16 %v183
    %v1329 = vunpack.c.l.b16 %v184
    %v1330 = vunpack.c.h.b16 %v184
    %v1331 = vunpack.c.l.b16 %v185
    %v1332 = vunpack.c.h.b16 %v185
    %v1333 = vunpack.c.l.b16 %v186
    %v1334 = vunpack.c.h.b16 %v186
    %v1335 = vunpack.c.l.b16 %v187
    %v1336 = vunpack.c.h.b16 %v187
    %v1337 = vunpack.c.l.b16 %v188
    %v1338 = vunpack.c.h.b16 %v188
    %v1339 = vunpack.c.l.b16 %v189
    %v1340 = vunpack.c.h.b16 %v189
    %v1341 = vunpack.c.l.b16 %v190
    %v1342 = vunpack.c.h.b16 %v190
    %v1343 = vunpack.c.l.b16 %v191
    %v1344 = vunpack.c.h.b16 %v191
    %v1345 = vunpack.c.l.b16 %v192
    %v1346 = vunpack.c.h.b16 %v192
    %v1347 = vunpack.c.l.b16 %v193
    %v1348 = vunpack.c.h.b16 %v193
    %v1349 = vunpack.c.l.b16 %v194
    %v1350 = vunpack.c.h.b16 %v194
    %v1351 = vunpack.c.l.b16 %v195
    %v1352 = vunpack.c.h.b16 %v195
    %v1353 = vunpack.c.l.b16 %v196
    %v1354 = vunpack.c.h.b16 %v196
    %v1355 = vunpack.c.l.b16 %v197
    %v1356 = vunpack.c.h.b16 %v197
    %v1357 = vunpack.c.l.b16 %v198
    %v1358 = vunpack.c.h.b16 %v198
    %v1359 = vunpack.c.l.b16 %v199
    %v1360 = vunpack.c.h.b16 %v199
    %v1361 = vunpack.c.l.b16 %v200
    %v1362 = vunpack.c.h.b16 %v200
    %v1363 = vunpack.c.l.b16 %v201
    %v1364 = vunpack.c.h.b16 %v201
    %v1365 = vunpack.c.l.b16 %v202
    %v1366 = vunpack.c.h.b16 %v202
    %v1367 = vunpack.c.l.b16 %v203
    %v1368 = vunpack.c.h.b16 %v203
    %v1369 = vunpack.c.l.b16 %v204
    %v1370 = vunpack.c.h.b16 %v204
    %v1371 = vunpack.c.l.b16 %v205
    %v1372 = vunpack.c.h.b16 %v205
    %v1373 = vunpack.c.l.b16 %v206
    %v1374 = vunpack.c.h.b16 %v206
    %v1375 = vunpack.c.l.b16 %v207
    %v1376 = vunpack.c.h.b16 %v207
    %v1377 = vunpack.c.l.b16 %v208
    %v1378 = vunpack.c.h.b16 %v208
    %v1379 = vunpack.c.l.b16 %v209
    %v1380 = vunpack.c.h.b16 %v209
    %v1381 = vunpack.c.l.b16 %v210
    %v1382 = vunpack.c.h.b16 %v210
    %v1383 = vunpack.c.l.b16 %v211
    %v1384 = vunpack.c.h.b16 %v211
    %v1385 = vunpack.c.l.b16 %v212
    %v1386 = vunpack.c.h.b16 %v212
    %v1387 = vunpack.c.l.b16 %v213
    %v1388 = vunpack.c.h.b16 %v213
    %v1389 = vunpack.c.l.b16 %v214
    %v1390 = vunpack.c.h.b16 %v214
    %v1391 = vunpack.c.l.b16 %v215
    %v1392 = vunpack.c.h.b16 %v215
    %v1393 = vunpack.c.l.b16 %v216
    %v1394 = vunpack.c.h.b16 %v216
    %v1395 = vunpack.c.l.b16 %v217
    %v1396 = vunpack.c.h.b16 %v217
    %v1397 = vunpack.c.l.b16 %v218
    %v1398 = vunpack.c.h.b16 %v218
    %v1399 = vunpack.c.l.b16 %v219
    %v1400 = vunpack.c.h.b16 %v219
    %v1401 = vunpack.c.l.b16 %v220
    %v1402 = vunpack.c.h.b16 %v220
    %v1403 = vunpack.c.l.b16 %v221
    %v1404 = vunpack.c.h.b16 %v221
    %v1405 = vunpack.c.l.b16 %v222
    %v1406 = vunpack.c.h.b16 %v222
    %v1407 = vunpack.c.l.b16 %v223
    %v1408 = vunpack.c.h.b16 %v223
    %v1409 = vunpack.c.l.b16 %v224
    %v1410 = vunpack.c.h.b16 %v224
    %v1411 = vunpack.c.l.b16 %v225
    %v1412 = vunpack.c.h.b16 %v225
    %v1413 = vunpack.c.l.b16 %v226
    %v1414 = vunpack.c.h.b16 %v226
    %v1415 = vunpack.c.l.b16 %v227
    %v1416 = vunpack.c.h.b16 %v227
    %v1417 = vunpack.c.l.b16 %v228
    %v1418 = vunpack.c.h.b16 %v228
    %v1419 = vunpack.c.l.b16 %v229
    %v1420 = vunpack.c.h.b16 %v229
    %v1421 = vunpack.c.l.b16 %v230
    %v1422 = vunpack.c.h.b16 %v230
    %v1423 = vunpack.c.l.b16 %v231
    %v1424 = vunpack.c.h.b16 %v231
    %v1425 = vunpack.c.l.b16 %v232
    %v1426 = vunpack.c.h.b16 %v232
    %v1427 = vunpack.c.l.b16 %v233
    %v1428 = vunpack.c.h.b16 %v233
    %v1429 = vunpack.c.l.b16 %v234
    %v1430 = vunpack.c.h.b16 %v234
    %v1431 = vunpack.c.l.b16 %v235
    %v1432 = vunpack.c.h.b16 %v235
    %v1433 = vunpack.c.l.b16 %v236
    %v1434 = vunpack.c.h.b16 %v236
    %v1435 = vunpack.c.l.b16 %v237
    %v1436 = vunpack.c.h.b16 %v237
    %v1437 = vunpack.c.l.b16 %v238
    %v1438 = vunpack.c.h.b16 %v238
    %v1439 = vunpack.c.l.b16 %v239
    %v1440 = vunpack.c.h.b16 %v239
    %v1441 = vunpack.c.l.b16 %v240
    %v1442 = vunpack.c.h.b16 %v240
    %v1443 = vunpack.c.l.b16 %v241
    %v1444 = vunpack.c.h.b16 %v241
    %v1445 = vunpack.c.l.b16 %v242
    %v1446 = vunpack.c.h.b16 %v242
    %v1447 = vunpack.c.l.b16 %v243
    %v1448 = vunpack.c.h.b16 %v243
    %v1449 = vunpack.c.l.b16 %v244
    %v1450 = vunpack.c.h.b16 %v244
    %v1451 = vunpack.c.l.b16 %v245
    %v1452 = vunpack.c.h.b16 %v245
    %v1453 = vunpack.c.l.b16 %v246
    %v1454 = vunpack.c.h.b16 %v246
    %v1455 = vunpack.c.l.b16 %v247
    %v1456 = vunpack.c.h.b16 %v247
    %v1457 = vunpack.c.l.b16 %v248
    %v1458 = vunpack.c.h.b16 %v248
    %v1459 = vunpack.c.l.b16 %v249
    %v1460 = vunpack.c.h.b16 %v249
    %v1461 = vunpack.c.l.b16 %v250
    %v1462 = vunpack.c.h.b16 %v250
    %v1463 = vunpack.c.l.b16 %v251
    %v1464 = vunpack.c.h.b16 %v251
    %v1465 = vunpack.c.l.b16 %v252
    %v1466 = vunpack.c.h.b16 %v252
    %v1467 = vunpack.c.l.b16 %v253
    %v1468 = vunpack.c.h.b16 %v253
    %v1469 = vunpack.c.l.b16 %v254
    %v1470 = vunpack.c.h.b16 %v254
    %v1471 = vunpack.c.l.b16 %v255
    %v1472 = vunpack.c.h.b16 %v255
    %v1473 = vunpack.c.l.b16 %v256
    %v1474 = vunpack.c.h.b16 %v256
    %v1475 = vunpack.c.l.b16 %v257
    %v1476 = vunpack.c.h.b16 %v257
    %v1477 = vunpack.c.l.b16 %v258
    %v1478 = vunpack.c.h.b16 %v258
    %v1479 = vunpack.c.l.b16 %v259
    %v1480 = vunpack.c.h.b16 %v259
    %v1481 = vunpack.c.l.b16 %v260
    %v1482 = vunpack.c.h.b16 %v260
    %v1483 = vunpack.c.l.b16 %v261
    %v1484 = vunpack.c.h.b16 %v261
    %v1485 = vunpack.c.l.b16 %v262
    %v1486 = vunpack.c.h.b16 %v262
    %v1487 = vunpack.c.l.b16 %v263
    %v1488 = vunpack.c.h.b16 %v263
    %v1489 = vunpack.c.l.b16 %v264
    %v1490 = vunpack.c.h.b16 %v264
    %v1491 = vunpack.c.l.b16 %v265
    %v1492 = vunpack.c.h.b16 %v265
    %v1493 = vunpack.c.l.b16 %v266
    %v1494 = vunpack.c.h.b16 %v266
    %v1495 = vunpack.c.l.b16 %v267
    %v1496 = vunpack.c.h.b16 %v267
    %v1497 = vunpack.c.l.b16 %v268
    %v1498 = vunpack.c.h.b16 %v268
    %v1499 = vunpack.c.l.b16 %v269
    %v1500 = vunpack.c.h.b16 %v269
    %v1501 = vunpack.c.l.b16 %v270
    %v1502 = vunpack.c.h.b16 %v270
    %v1503 = vunpack.c.l.b16 %v271
    %v1504 = vunpack.c.h.b16 %v271
    %v1505 = vunpack.c.l.b16 %v272
    %v1506 = vunpack.c.h.b16 %v272
    %v1507 = vunpack.c.l.b16 %v273
    %v1508 = vunpack.c.h.b16 %v273
    %v1509 = vunpack.c.l.b16 %v274
    %v1510 = vunpack.c.h.b16 %v274
    %v1511 = vunpack.c.l.b16 %v275
    %v1512 = vunpack.c.h.b16 %v275
    %v1513 = vunpack.c.l.b16 %v276
    %v1514 = vunpack.c.h.b16 %v276
    %v1515 = vunpack.c.l.b16 %v277
    %v1516 = vunpack.c.h.b16 %v277
    %v1517 = vunpack.c.l.b16 %v278
    %v1518 = vunpack.c.h.b16 %v278
    %v1519 = vunpack.c.l.b16 %v279
    %v1520 = vunpack.c.h.b16 %v279
    %v1521 = vunpack.c.l.b16 %v280
    %v1522 = vunpack.c.h.b16 %v280
    %v1523 = vunpack.c.l.b16 %v281
    %v1524 = vunpack.c.h.b16 %v281
    %v1525 = vunpack.c.l.b16 %v282
    %v1526 = vunpack.c.h.b16 %v282
    %v1527 = vunpack.c.l.b16 %v283
    %v1528 = vunpack.c.h.b16 %v283
    %v1529 = vunpack.c.l.b16 %v284
    %v1530 = vunpack.c.h.b16 %v284
    %v1531 = vunpack.c.l.b16 %v285
    %v1532 = vunpack.c.h.b16 %v285
    %v1533 = vunpack.c.l.b16 %v286
    %v1534 = vunpack.c.h.b16 %v286
    %v1535 = vunpack.c.l.b16 %v287
    %v1536 = vunpack.c.h.b16 %v287
    %v1537 = vunpack.c.l.b16 %v288
    %v1538 = vunpack.c.h.b16 %v288
    %v1539 = vunpack.c.l.b16 %v289
    %v1540 = vunpack.c.h.b16 %v289
    %v1541 = vunpack.c.l.b16 %v290
    %v1542 = vunpack.c.h.b16 %v290
    %v1543 = vunpack.c.l.b16 %v291
    %v1544 = vunpack.c.h.b16 %v291
    %v1545 = vunpack.c.l.b16 %v292
    %v1546 = vunpack.c.h.b16 %v292
    %v1547 = vunpack.c.l.b16 %v293
    %v1548 = vunpack.c.h.b16 %v293
    %v1549 = vunpack.c.l.b16 %v294
    %v1550 = vunpack.c.h.b16 %v294
    %v1551 = vunpack.c.l.b16 %v295
    %v1552 = vunpack.c.h.b16 %v295
    %v1553 = vunpack.c.l.b16 %v296
    %v1554 = vunpack.c.h.b16 %v296
    %v1555 = vunpack.c.l.b16 %v297
    %v1556 = vunpack.c.h.b16 %v297
    %v1557 = vunpack.c.l.b16 %v298
    %v1558 = vunpack.c.h.b16 %v298
    %v1559 = vunpack.c.l.b16 %v299
    %v1560 = vunpack.c.h.b16 %v299
    %v1561 = vunpack.c.l.b16 %v300
    %v1562 = vunpack.c.h.b16 %v300
    %v1563 = vunpack.c.l.b16 %v301
    %v1564 = vunpack.c.h.b16 %v301
    %v1565 = vunpack.c.l.b16 %v302
    %v1566 = vunpack.c.h.b16 %v302
    %v1567 = vunpack.c.l.b16 %v303
    %v1568 = vunpack.c.h.b16 %v303
    %v1569 = vunpack.c.l.b16 %v304
    %v1570 = vunpack.c.h.b16 %v304
    %v1571 = vunpack.c.l.b16 %v305
    %v1572 = vunpack.c.h.b16 %v305
    %v1573 = vunpack.c.l.b16 %v306
    %v1574 = vunpack.c.h.b16 %v306
    %v1575 = vunpack.c.l.b16 %v307
    %v1576 = vunpack.c.h.b16 %v307
    %v1577 = vunpack.c.l.b16 %v308
    %v1578 = vunpack.c.h.b16 %v308
    %v1579 = vunpack.c.l.b16 %v309
    %v1580 = vunpack.c.h.b16 %v309
    %v1581 = vunpack.c.l.b16 %v310
    %v1582 = vunpack.c.h.b16 %v310
    %v1583 = vunpack.c.l.b16 %v311
    %v1584 = vunpack.c.h.b16 %v311
    %v1585 = vunpack.c.l.b16 %v312
    %v1586 = vunpack.c.h.b16 %v312
    %v1587 = vunpack.c.l.b16 %v313
    %v1588 = vunpack.c.h.b16 %v313
    %v1589 = vunpack.c.l.b16 %v314
    %v1590 = vunpack.c.h.b16 %v314
    %v1591 = vunpack.c.l.b16 %v315
    %v1592 = vunpack.c.h.b16 %v315
    %v1593 = vunpack.c.l.b16 %v316
    %v1594 = vunpack.c.h.b16 %v316
    %v1595 = vunpack.c.l.b16 %v317
    %v1596 = vunpack.c.h.b16 %v317
    %v1597 = vunpack.c.l.b16 %v318
    %v1598 = vunpack.c.h.b16 %v318
    %v1599 = vunpack.c.l.b16 %v319
    %v1600 = vunpack.c.h.b16 %v319
    %v1601 = vunpack.c.l.b16 %v320
    %v1602 = vunpack.c.h.b16 %v320
    %v1603 = vunpack.c.l.b16 %v321
    %v1604 = vunpack.c.h.b16 %v321
    %v1605 = vunpack.c.l.b16 %v322
    %v1606 = vunpack.c.h.b16 %v322
    %v1607 = vunpack.c.l.b16 %v323
    %v1608 = vunpack.c.h.b16 %v323
    %v1609 = vunpack.c.l.b16 %v324
    %v1610 = vunpack.c.h.b16 %v324
    %v1611 = vunpack.c.l.b16 %v325
    %v1612 = vunpack.c.h.b16 %v325
    %v1613 = vunpack.c.l.b16 %v326
    %v1614 = vunpack.c.h.b16 %v326
    %v1615 = vunpack.c.l.b16 %v327
    %v1616 = vunpack.c.h.b16 %v327
    %v1617 = vunpack.c.l.b16 %v328
    %v1618 = vunpack.c.h.b16 %v328
    %v1619 = vunpack.c.l.b16 %v329
    %v1620 = vunpack.c.h.b16 %v329
    %v1621 = vunpack.c.l.b16 %v330
    %v1622 = vunpack.c.h.b16 %v330
    %v1623 = vunpack.c.l.b16 %v331
    %v1624 = vunpack.c.h.b16 %v331
    %v1625 = vunpack.c.l.b16 %v332
    %v1626 = vunpack.c.h.b16 %v332
    %v1627 = vunpack.c.l.b16 %v333
    %v1628 = vunpack.c.h.b16 %v333
    %v1629 = vunpack.c.l.b16 %v334
    %v1630 = vunpack.c.h.b16 %v334
    %v1631 = vunpack.c.l.b16 %v335
    %v1632 = vunpack.c.h.b16 %v335
    %v1633 = vunpack.c.l.b16 %v336
    %v1634 = vunpack.c.h.b16 %v336
    %v1635 = vunpack.c.l.b16 %v337
    %v1636 = vunpack.c.h.b16 %v337
    %v1637 = vunpack.c.l.b16 %v338
    %v1638 = vunpack.c.h.b16 %v338
    %v1639 = vunpack.c.l.b16 %v339
    %v1640 = vunpack.c.h.b16 %v339
    %v1641 = vunpack.c.l.b16 %v340
    %v1642 = vunpack.c.h.b16 %v340
    %v1643 = vunpack.c.l.b16 %v341
    %v1644 = vunpack.c.h.b16 %v341
    %v1645 = vunpack.c.l.b16 %v342
    %v1646 = vunpack.c.h.b16 %v342
    %v1647 = vunpack.c.l.b16 %v343
    %v1648 = vunpack.c.h.b16 %v343
    %v1649 = vunpack.c.l.b16 %v344
    %v1650 = vunpack.c.h.b16 %v344
    %v1651 = vunpack.c.l.b16 %v345
    %v1652 = vunpack.c.h.b16 %v345
    %v1653 = vunpack.c.l.b16 %v346
    %v1654 = vunpack.c.h.b16 %v346
    %v1655 = vunpack.c.l.b16 %v347
    %v1656 = vunpack.c.h.b16 %v347
    %v1657 = vunpack.c.l.b16 %v348
    %v1658 = vunpack.c.h.b16 %v348
    %v1659 = vunpack.c.l.b16 %v349
    %v1660 = vunpack.c.h.b16 %v349
    %v1661 = vunpack.c.l.b16 %v350
    %v1662 = vunpack.c.h.b16 %v350
    %v1663 = vunpack.c.l.b16 %v351
    %v1664 = vunpack.c.h.b16 %v351
    %v1665 = vunpack.c.l.b16 %v352
    %v1666 = vunpack.c.h.b16 %v352
    %v1667 = vunpack.c.l.b16 %v353
    %v1668 = vunpack.c.h.b16 %v353
    %v1669 = vunpack.c.l.b16 %v354
    %v1670 = vunpack.c.h.b16 %v354
    %v1671 = vunpack.c.l.b16 %v355
    %v1672 = vunpack.c.h.b16 %v355
    %v1673 = vunpack.c.l.b16 %v356
    %v1674 = vunpack.c.h.b16 %v356
    %v1675 = vunpack.c.l.b16 %v357
    %v1676 = vunpack.c.h.b16 %v357
    %v1677 = vunpack.c.l.b16 %v358
    %v1678 = vunpack.c.h.b16 %v358
    %v1679 = vunpack.c.l.b16 %v359
    %v1680 = vunpack.c.h.b16 %v359
    %v1681 = vunpack.c.l.b16 %v360
    %v1682 = vunpack.c.h.b16 %v360
    %v1683 = vunpack.c.l.b16 %v361
    %v1684 = vunpack.c.h.b16 %v361
    %v1685 = vunpack.c.l.b16 %v362
    %v1686 = vunpack.c.h.b16 %v362
    %v1687 = vunpack.c.l.b16 %v363
    %v1688 = vunpack.c.h.b16 %v363
    %v1689 = vunpack.c.l.b16 %v364
    %v1690 = vunpack.c.h.b16 %v364
    %v1691 = vunpack.c.l.b16 %v365
    %v1692 = vunpack.c.h.b16 %v365
    %v1693 = vunpack.c.l.b16 %v366
    %v1694 = vunpack.c.h.b16 %v366
    %v1695 = vunpack.c.l.b16 %v367
    %v1696 = vunpack.c.h.b16 %v367
    %v1697 = vunpack.c.l.b16 %v368
    %v1698 = vunpack.c.h.b16 %v368
    %v1699 = vunpack.c.l.b16 %v369
    %v1700 = vunpack.c.h.b16 %v369
    %v1701 = vunpack.c.l.b16 %v370
    %v1702 = vunpack.c.h.b16 %v370
    %v1703 = vunpack.c.l.b16 %v371
    %v1704 = vunpack.c.h.b16 %v371
    %v1705 = vunpack.c.l.b16 %v372
    %v1706 = vunpack.c.h.b16 %v372
    %v1707 = vunpack.c.l.b16 %v373
    %v1708 = vunpack.c.h.b16 %v373
    %v1709 = vunpack.c.l.b16 %v374
    %v1710 = vunpack.c.h.b16 %v374
    %v1711 = vunpack.c.l.b16 %v375
    %v1712 = vunpack.c.h.b16 %v375
    %v1713 = vunpack.c.l.b16 %v376
    %v1714 = vunpack.c.h.b16 %v376
    %v1715 = vunpack.c.l.b16 %v377
    %v1716 = vunpack.c.h.b16 %v377
    %v1717 = vunpack.c.l.b16 %v378
    %v1718 = vunpack.c.h.b16 %v378
    %v1719 = vunpack.c.l.b16 %v379
    %v1720 = vunpack.c.h.b16 %v379
    %v1721 = vunpack.c.l.b16 %v380
    %v1722 = vunpack.c.h.b16 %v380
    %v1723 = vunpack.c.l.b16 %v381
    %v1724 = vunpack.c.h.b16 %v381
    %v1725 = vunpack.c.l.b16 %v382
    %v1726 = vunpack.c.h.b16 %v382
    %v1727 = vunpack.c.l.b16 %v383
    %v1728 = vunpack.c.h.b16 %v383
    %v1729 = vunpack.c.l.b16 %v384
    %v1730 = vunpack.c.h.b16 %v384
    %v1731 = vunpack.c.l.b16 %v385
    %v1732 = vunpack.c.h.b16 %v385
    %v1733 = vunpack.c.l.b16 %v386
    %v1734 = vunpack.c.h.b16 %v386
    %v1735 = vunpack.c.l.b16 %v387
    %v1736 = vunpack.c.h.b16 %v387
    %v1737 = vunpack.c.l.b16 %v388
    %v1738 = vunpack.c.h.b16 %v388
    %v1739 = vunpack.c.l.b16 %v389
    %v1740 = vunpack.c.h.b16 %v389
    %v1741 = vunpack.c.l.b16 %v390
    %v1742 = vunpack.c.h.b16 %v390
    %v1743 = vunpack.c.l.b16 %v391
    %v1744 = vunpack.c.h.b16 %v391
    %v1745 = vunpack.c.l.b16 %v392
    %v1746 = vunpack.c.h.b16 %v392
    %v1747 = vunpack.c.l.b16 %v393
    %v1748 = vunpack.c.h.b16 %v393
    %v1749 = vunpack.c.l.b16 %v394
    %v1750 = vunpack.c.h.b16 %v394
    %v1751 = vunpack.c.l.b16 %v395
    %v1752 = vunpack.c.h.b16 %v395
    %v1753 = vunpack.c.l.b16 %v396
    %v1754 = vunpack.c.h.b16 %v396
    %v1755 = vunpack.c.l.b16 %v397
    %v1756 = vunpack.c.h.b16 %v397
    %v1757 = vunpack.c.l.b16 %v398
    %v1758 = vunpack.c.h.b16 %v398
    %v1759 = vunpack.c.l.b16 %v399
    %v1760 = vunpack.c.h.b16 %v399
    %v1761 = vunpack.c.l.b16 %v400
    %v1762 = vunpack.c.h.b16 %v400
    %v1763 = vunpack.c.l.b16 %v401
    %v1764 = vunpack.c.h.b16 %v401
    %v1765 = vunpack.c.l.b16 %v402
    %v1766 = vunpack.c.h.b16 %v402
    %v1767 = vunpack.c.l.b16 %v403
    %v1768 = vunpack.c.h.b16 %v403
    %v1769 = vunpack.c.l.b16 %v404
    %v1770 = vunpack.c.h.b16 %v404
    %v1771 = vunpack.c.l.b16 %v405
    %v1772 = vunpack.c.h.b16 %v405
    %v1773 = vunpack.c.l.b16 %v406
    %v1774 = vunpack.c.h.b16 %v406
    %v1775 = vunpack.c.l.b16 %v407
    %v1776 = vunpack.c.h.b16 %v407
    %v1777 = vunpack.c.l.b16 %v408
    %v1778 = vunpack.c.h.b16 %v408
    %v1779 = vunpack.c.l.b16 %v409
    %v1780 = vunpack.c.h.b16 %v409
    %v1781 = vunpack.c.l.b16 %v410
    %v1782 = vunpack.c.h.b16 %v410
    %v1783 = vunpack.c.l.b16 %v411
    %v1784 = vunpack.c.h.b16 %v411
    %v1785 = vunpack.c.l.b16 %v412
    %v1786 = vunpack.c.h.b16 %v412
    %v1787 = vunpack.c.l.b16 %v413
    %v1788 = vunpack.c.h.b16 %v413
    %v1789 = vunpack.c.l.b16 %v414
    %v1790 = vunpack.c.h.b16 %v414
    %v1791 = vunpack.c.l.b16 %v415
    %v1792 = vunpack.c.h.b16 %v415
    %v1793 = vunpack.c.l.b16 %v416
    %v1794 = vunpack.c.h.b16 %v416
    %v1795 = vunpack.c.l.b16 %v417
    %v1796 = vunpack.c.h.b16 %v417
    %v1797 = vunpack.c.l.b16 %v418
    %v1798 = vunpack.c.h.b16 %v418
    %v1799 = vunpack.c.l.b16 %v419
    %v1800 = vunpack.c.h.b16 %v419
    %v1801 = vunpack.c.l.b16 %v420
    %v1802 = vunpack.c.h.b16 %v420
    %v1803 = vunpack.c.l.b16 %v421
    %v1804 = vunpack.c.h.b16 %v421
    %v1805 = vunpack.c.l.b16 %v422
    %v1806 = vunpack.c.h.b16 %v422
    %v1807 = vunpack.c.l.b16 %v423
    %v1808 = vunpack.c.h.b16 %v423
    %v1809 = vunpack.c.l.b16 %v424
    %v1810 = vunpack.c.h.b16 %v424
    %v1811 = vunpack.c.l.b16 %v425
    %v1812 = vunpack.c.h.b16 %v425
    %v1813 = vunpack.c.l.b16 %v426
    %v1814 = vunpack.c.h.b16 %v426
    %v1815 = vunpack.c.l.b16 %v427
    %v1816 = vunpack.c.h.b16 %v427
    %v1817 = vunpack.c.l.b16 %v428
    %v1818 = vunpack.c.h.b16 %v428
    %v1819 = vunpack.c.l.b16 %v429
    %v1820 = vunpack.c.h.b16 %v429
    %v1821 = vunpack.c.l.b16 %v430
    %v1822 = vunpack.c.h.b16 %v430
    %v1823 = vunpack.c.l.b16 %v431
    %v1824 = vunpack.c.h.b16 %v431
    %v1825 = vunpack.c.l.b16 %v432
    %v1826 = vunpack.c.h.b16 %v432
    %v1827 = vunpack.c.l.b16 %v433
    %v1828 = vunpack.c.h.b16 %v433
    %v1829 = vunpack.c.l.b16 %v434
    %v1830 = vunpack.c.h.b16 %v434
    %v1831 = vunpack.c.l.b16 %v435
    %v1832 = vunpack.c.h.b16 %v435
    %v1833 = vunpack.c.l.b16 %v436
    %v1834 = vunpack.c.h.b16 %v436
    %v1835 = vunpack.c.l.b16 %v437
    %v1836 = vunpack.c.h.b16 %v437
    %v1837 = vunpack.c.l.b16 %v438
    %v1838 = vunpack.c.h.b16 %v438
    %v1839 = vunpack.c.l.b16 %v439
    %v1840 = vunpack.c.h.b16 %v439
    %v1841 = vunpack.c.l.b16 %v440
    %v1842 = vunpack.c.h.b16 %v440
    %v1843 = vunpack.c.l.b16 %v441
    %v1844 = vunpack.c.h.b16 %v441
    %v1845 = vunpack.c.l.b16 %v442
    %v1846 = vunpack.c.h.b16 %v442
    %v1847 = vunpack.c.l.b16 %v443
    %v1848 = vunpack.c.h.b16 %v443
    %v1849 = vunpack.c.l.b16 %v444
    %v1850 = vunpack.c.h.b16 %v444
    %v1851 = vunpack.c.l.b16 %v445
    %v1852 = vunpack.c.h.b16 %v445
    %v1853 = vunpack.c.l.b16 %v446
    %v1854 = vunpack.c.h.b16 %v446
    %v1855 = vunpack.c.l.b16 %v447
    %v1856 = vunpack.c.h.b16 %v447
    %v1857 = vunpack.c.l.b16 %v448
    %v1858 = vunpack.c.h.b16 %v448
    %v1859 = vunpack.c.l.b16 %v449
    %v1860 = vunpack.c.h.b16 %v449
    %v1861 = vunpack.c.l.b16 %v450
    %v1862 = vunpack.c.h.b16 %v450
    %v1863 = vunpack.c.l.b16 %v451
    %v1864 = vunpack.c.h.b16 %v451
    %v1865 = vunpack.c.l.b16 %v452
    %v1866 = vunpack.c.h.b16 %v452
    %v1867 = vunpack.c.l.b16 %v453
    %v1868 = vunpack.c.h.b16 %v453
    %v1869 = vunpack.c.l.b16 %v454
    %v1870 = vunpack.c.h.b16 %v454
    %v1871 = vunpack.c.l.b16 %v455
    %v1872 = vunpack.c.h.b16 %v455
    %v1873 = vunpack.c.l.b16 %v456
    %v1874 = vunpack.c.h.b16 %v456
    %v1875 = vunpack.c.l.b16 %v457
    %v1876 = vunpack.c.h.b16 %v457
    %v1877 = vunpack.c.l.b16 %v458
    %v1878 = vunpack.c.h.b16 %v458
    %v1879 = vunpack.c.l.b16 %v459
    %v1880 = vunpack.c.h.b16 %v459
    %v1881 = vunpack.c.l.b16 %v460
    %v1882 = vunpack.c.h.b16 %v460
    %v1883 = vunpack.c.l.b16 %v461
    %v1884 = vunpack.c.h.b16 %v461
    %v1885 = vunpack.c.l.b16 %v462
    %v1886 = vunpack.c.h.b16 %v462
    %v1887 = vunpack.c.l.b16 %v463
    %v1888 = vunpack.c.h.b16 %v463
    %v1889 = vunpack.c.l.b16 %v464
    %v1890 = vunpack.c.h.b16 %v464
    %v1891 = vunpack.c.l.b16 %v465
    %v1892 = vunpack.c.h.b16 %v465
    %v1893 = vunpack.c.l.b16 %v466
    %v1894 = vunpack.c.h.b16 %v466
    %v1895 = vunpack.c.l.b16 %v467
    %v1896 = vunpack.c.h.b16 %v467
    %v1897 = vunpack.c.l.b16 %v468
    %v1898 = vunpack.c.h.b16 %v468
    %v1899 = vunpack.c.l.b16 %v469
    %v1900 = vunpack.c.h.b16 %v469
    %v1901 = vunpack.c.l.b16 %v470
    %v1902 = vunpack.c.h.b16 %v470
    %v1903 = vunpack.c.l.b16 %v471
    %v1904 = vunpack.c.h.b16 %v471
    %v1905 = vunpack.c.l.b16 %v472
    %v1906 = vunpack.c.h.b16 %v472
    %v1907 = vunpack.c.l.b16 %v473
    %v1908 = vunpack.c.h.b16 %v473
    %v1909 = vunpack.c.l.b16 %v474
    %v1910 = vunpack.c.h.b16 %v474
    %v1911 = vunpack.c.l.b16 %v475
    %v1912 = vunpack.c.h.b16 %v475
    %v1913 = vunpack.c.l.b16 %v476
    %v1914 = vunpack.c.h.b16 %v476
    %v1915 = vunpack.c.l.b16 %v477
    %v1916 = vunpack.c.h.b16 %v477
    %v1917 = vunpack.c.l.b16 %v478
    %v1918 = vunpack.c.h.b16 %v478
    %v1919 = vunpack.c.l.b16 %v479
    %v1920 = vunpack.c.h.b16 %v479
    %v1921 = vunpack.c.l.b16 %v480
    %v1922 = vunpack.c.h.b16 %v480
    %v1923 = vunpack.c.l.b16 %v481
    %v1924 = vunpack.c.h.b16 %v481
    %v1925 = vunpack.c.l.b16 %v482
    %v1926 = vunpack.c.h.b16 %v482
    %v1927 = vunpack.c.l.b16 %v483
    %v1928 = vunpack.c.h.b16 %v483
    %v1929 = vunpack.c.l.b16 %v484
    %v1930 = vunpack.c.h.b16 %v484
    %v1931 = vunpack.c.l.b16 %v485
    %v1932 = vunpack.c.h.b16 %v485
    %v1933 = vunpack.c.l.b16 %v486
    %v1934 = vunpack.c.h.b16 %v486
    %v1935 = vunpack.c.l.b16 %v487
    %v1936 = vunpack.c.h.b16 %v487
    %v1937 = vunpack.c.l.b16 %v488
    %v1938 = vunpack.c.h.b16 %v488
    %v1939 = vunpack.c.l.b16 %v489
    %v1940 = vunpack.c.h.b16 %v489
    %v1941 = vunpack.c.l.b16 %v490
    %v1942 = vunpack.c.h.b16 %v490
    %v1943 = vunpack.c.l.b16 %v491
    %v1944 = vunpack.c.h.b16 %v491
    %v1945 = vunpack.c.l.b16 %v492
    %v1946 = vunpack.c.h.b16 %v492
    %v1947 = vunpack.c.l.b16 %v493
    %v1948 = vunpack.c.h.b16 %v493
    %v1949 = vunpack.c.l.b16 %v494
    %v1950 = vunpack.c.h.b16 %v494
    %v1951 = vunpack.c.l.b16 %v495
    %v1952 = vunpack.c.h.b16 %v495
    %v1953 = vunpack.c.l.b16 %v496
    %v1954 = vunpack.c.h.b16 %v496
    %v1955 = vunpack.c.l.b16 %v497
    %v1956 = vunpack.c.h.b16 %v497
    %v1957 = vunpack.c.l.b16 %v498
    %v1958 = vunpack.c.h.b16 %v498
    %v1959 = vunpack.c.l.b16 %v499
    %v1960 = vunpack.c.h.b16 %v499
    %v1961 = vunpack.c.l.b16 %v500
    %v1962 = vunpack.c.h.b16 %v500
    %v1963 = vunpack.c.l.b16 %v501
    %v1964 = vunpack.c.h.b16 %v501
    %v1965 = vunpack.c.l.b16 %v502
    %v1966 = vunpack.c.h.b16 %v502
    %v1967 = vunpack.c.l.b16 %v503
    %v1968 = vunpack.c.h.b16 %v503
    %v1969 = vunpack.c.l.b16 %v504
    %v1970 = vunpack.c.h.b16 %v504
    %v1971 = vunpack.c.l.b16 %v505
    %v1972 = vunpack.c.h.b16 %v505
    %v1973 = vunpack.c.l.b16 %v506
    %v1974 = vunpack.c.h.b16 %v506
    %v1975 = vunpack.c.l.b16 %v507
    %v1976 = vunpack.c.h.b16 %v507
    %v1977 = vunpack.c.l.b16 %v508
    %v1978 = vunpack.c.h.b16 %v508
    %v1979 = vunpack.c.l.b16 %v509
    %v1980 = vunpack.c.h.b16 %v509
    %v1981 = vunpack.c.l.b16 %v510
    %v1982 = vunpack.c.h.b16 %v510
    %v1983 = vunpack.c.l.b16 %v511
    %v1984 = vunpack.c.h.b16 %v511
    %v1985 = vunpack.c.l.b16 %v512
    %v1986 = vunpack.c.h.b16 %v512
    %v1987 = vunpack.c.l.b16 %v513
    %v1988 = vunpack.c.h.b16 %v513
    %v1989 = vunpack.c.l.b16 %v514
    %v1990 = vunpack.c.h.b16 %v514
    %v1991 = vunpack.c.l.b16 %v515
    %v1992 = vunpack.c.h.b16 %v515
    %v1993 = vunpack.c.l.b16 %v516
    %v1994 = vunpack.c.h.b16 %v516
    %v1995 = vunpack.c.l.b16 %v517
    %v1996 = vunpack.c.h.b16 %v517
    %v1997 = vunpack.c.l.b16 %v518
    %v1998 = vunpack.c.h.b16 %v518
    %v1999 = vunpack.c.l.b16 %v519
    %v2000 = vunpack.c.h.b16 %v519
    %v2001 = vunpack.c.l.b16 %v520
    %v2002 = vunpack.c.h.b16 %v520
    %v2003 = vunpack.c.l.b16 %v521
    %v2004 = vunpack.c.h.b16 %v521
    %v2005 = vunpack.c.l.b16 %v522
    %v2006 = vunpack.c.h.b16 %v522
    %v2007 = vunpack.c.l.b16 %v523
    %v2008 = vunpack.c.h.b16 %v523
    %v2009 = vunpack.c.l.b16 %v524
    %v2010 = vunpack.c.h.b16 %v524
    %v2011 = vunpack.c.l.b16 %v525
    %v2012 = vunpack.c.h.b16 %v525
    %v2013 = vunpack.c.l.b16 %v526
    %v2014 = vunpack.c.h.b16 %v526
    %v2015 = vunpack.c.l.b16 %v527
    %v2016 = vunpack.c.h.b16 %v527
    %v2017 = vunpack.c.l.b16 %v528
    %v2018 = vunpack.c.h.b16 %v528
    %v2019 = vunpack.c.l.b16 %v529
    %v2020 = vunpack.c.h.b16 %v529
    %v2021 = vunpack.c.l.b16 %v530
    %v2022 = vunpack.c.h.b16 %v530
    %v2023 = vunpack.c.l.b16 %v531
    %v2024 = vunpack.c.h.b16 %v531
    %v2025 = vunpack.c.l.b16 %v532
    %v2026 = vunpack.c.h.b16 %v532
    %v2027 = vunpack.c.l.b16 %v533
    %v2028 = vunpack.c.h.b16 %v533
    %v2029 = vunpack.c.l.b16 %v534
    %v2030 = vunpack.c.h.b16 %v534
    %v2031 = vunpack.c.l.b16 %v535
    %v2032 = vunpack.c.h.b16 %v535
    %v2033 = vunpack.c.l.b16 %v536
    %v2034 = vunpack.c.h.b16 %v536
    %v2035 = vunpack.c.l.b16 %v537
    %v2036 = vunpack.c.h.b16 %v537
    %v2037 = vunpack.c.l.b16 %v538
    %v2038 = vunpack.c.h.b16 %v538
    %v2039 = vunpack.c.l.b16 %v539
    %v2040 = vunpack.c.h.b16 %v539
    %v2041 = vunpack.c.l.b16 %v540
    %v2042 = vunpack.c.h.b16 %v540
    %v2043 = vunpack.c.l.b16 %v541
    %v2044 = vunpack.c.h.b16 %v541
    %v2045 = vunpack.c.l.b16 %v542
    %v2046 = vunpack.c.h.b16 %v542
    %v2047 = vunpack.c.l.b16 %v543
    %v2048 = vunpack.c.h.b16 %v543
    %v2049 = vunpack.c.l.b16 %v544
    %v2050 = vunpack.c.h.b16 %v544
    %v2051 = vunpack.c.l.b16 %v545
    %v2052 = vunpack.c.h.b16 %v545
    %v2053 = vunpack.c.l.b16 %v546
    %v2054 = vunpack.c.h.b16 %v546
    %v2055 = vunpack.c.l.b16 %v547
    %v2056 = vunpack.c.h.b16 %v547
    %v2057 = vunpack.c.l.b16 %v548
    %v2058 = vunpack.c.h.b16 %v548
    %v2059 = vunpack.c.l.b16 %v549
    %v2060 = vunpack.c.h.b16 %v549
    %v2061 = vunpack.c.l.b16 %v550
    %v2062 = vunpack.c.h.b16 %v550
    %v2063 = vunpack.c.l.b16 %v551
    %v2064 = vunpack.c.h.b16 %v551
    %v2065 = vunpack.c.l.b16 %v552
    %v2066 = vunpack.c.h.b16 %v552
    %v2067 = vunpack.c.l.b16 %v553
    %v2068 = vunpack.c.h.b16 %v553
    %v2069 = vunpack.c.l.b16 %v554
    %v2070 = vunpack.c.h.b16 %v554
    %v2071 = vunpack.c.l.b16 %v555
    %v2072 = vunpack.c.h.b16 %v555
    %v2073 = vunpack.c.l.b16 %v556
    %v2074 = vunpack.c.h.b16 %v556
    %v2075 = vunpack.c.l.b16 %v557
    %v2076 = vunpack.c.h.b16 %v557
    %v2077 = vunpack.c.l.b16 %v558
    %v2078 = vunpack.c.h.b16 %v558
    %v2079 = vunpack.c.l.b16 %v559
    %v2080 = vunpack.c.h.b16 %v559
    %v2081 = vunpack.c.l.b16 %v560
    %v2082 = vunpack.c.h.b16 %v560
    %v2083 = vunpack.c.l.b16 %v561
    %v2084 = vunpack.c.h.b16 %v561
    %v2085 = vunpack.c.l.b16 %v562
    %v2086 = vunpack.c.h.b16 %v562
    %v2087 = vunpack.c.l.b16 %v563
    %v2088 = vunpack.c.h.b16 %v563
    %v2089 = vunpack.c.l.b16 %v564
    %v2090 = vunpack.c.h.b16 %v564
    %v2091 = vunpack.c.l.b16 %v565
    %v2092 = vunpack.c.h.b16 %v565
    %v2093 = vunpack.c.l.b16 %v566
    %v2094 = vunpack.c.h.b16 %v566
    %v2095 = vunpack.c.l.b16 %v567
    %v2096 = vunpack.c.h.b16 %v567
    %v2097 = vunpack.c.l.b16 %v568
    %v2098 = vunpack.c.h.b16 %v568
    %v2099 = vunpack.c.l.b16 %v569
    %v2100 = vunpack.c.h.b16 %v569
    %v2101 = vunpack.c.l.b16 %v570
    %v2102 = vunpack.c.h.b16 %v570
    %v2103 = vunpack.c.l.b16 %v571
    %v2104 = vunpack.c.h.b16 %v571
    %v2105 = vunpack.c.l.b16 %v572
    %v2106 = vunpack.c.h.b16 %v572
    %v2107 = vunpack.c.l.b16 %v573
    %v2108 = vunpack.c.h.b16 %v573
    %v2109 = vunpack.c.l.b16 %v574
    %v2110 = vunpack.c.h.b16 %v574
    %v2111 = vunpack.c.l.b16 %v575
    %v2112 = vunpack.c.h.b16 %v575
    %v2113 = vunpack.c.l.b16 %v576
    %v2114 = vunpack.c.h.b16 %v576
    %v2115 = vunpack.c.l.b16 %v577
    %v2116 = vunpack.c.h.b16 %v577
    %v2117 = vunpack.c.l.b16 %v578
    %v2118 = vunpack.c.h.b16 %v578
    %v2119 = vunpack.c.l.b16 %v579
    %v2120 = vunpack.c.h.b16 %v579
    %v2121 = vunpack.c.l.b16 %v580
    %v2122 = vunpack.c.h.b16 %v580
    %v2123 = vunpack.c.l.b16 %v581
    %v2124 = vunpack.c.h.b16 %v581
    %v2125 = vunpack.c.l.b16 %v582
    %v2126 = vunpack.c.h.b16 %v582
    %v2127 = vunpack.c.l.b16 %v583
    %v2128 = vunpack.c.h.b16 %v583
    %v2129 = vunpack.c.l.b16 %v584
    %v2130 = vunpack.c.h.b16 %v584
    %v2131 = vunpack.c.l.b16 %v585
    %v2132 = vunpack.c.h.b16 %v585
    %v2133 = vunpack.c.l.b16 %v586
    %v2134 = vunpack.c.h.b16 %v586
    %v2135 = vunpack.c.l.b16 %v587
    %v2136 = vunpack.c.h.b16 %v587
    %v2137 = vunpack.c.l.b16 %v588
    %v2138 = vunpack.c.h.b16 %v588
    %v2139 = vunpack.c.l.b16 %v589
    %v2140 = vunpack.c.h.b16 %v589
    %v2141 = vunpack.c.l.b16 %v590
    %v2142 = vunpack.c.h.b16 %v590
    %v2143 = vunpack.c.l.b16 %v591
    %v2144 = vunpack.c.h.b16 %v591
    %v2145 = vunpack.c.l.b16 %v592
    %v2146 = vunpack.c.h.b16 %v592
    %v2147 = vunpack.c.l.b16 %v593
    %v2148 = vunpack.c.h.b16 %v593
    %v2149 = vunpack.c.l.b16 %v594
    %v2150 = vunpack.c.h.b16 %v594
    %v2151 = vunpack.c.l.b16 %v595
    %v2152 = vunpack.c.h.b16 %v595
    %v2153 = vunpack.c.l.b16 %v596
    %v2154 = vunpack.c.h.b16 %v596
    %v2155 = vunpack.c.l.b16 %v597
    %v2156 = vunpack.c.h.b16 %v597
    %v2157 = vunpack.c.l.b16 %v598
    %v2158 = vunpack.c.h.b16 %v598
    %v2159 = vunpack.c.l.b16 %v599
    %v2160 = vunpack.c.h.b16 %v599
    %v2161 = vunpack.c.l.b16 %v600
    %v2162 = vunpack.c.h.b16 %v600
    %v2163 = vunpack.c.l.b16 %v601
    %v2164 = vunpack.c.h.b16 %v601
    %v2165 = vunpack.c.l.b16 %v602
    %v2166 = vunpack.c.h.b16 %v602
    %v2167 = vunpack.c.l.b16 %v603
    %v2168 = vunpack.c.h.b16 %v603
    %v2169 = vunpack.c.l.b16 %v604
    %v2170 = vunpack.c.h.b16 %v604
    %v2171 = vunpack.c.l.b16 %v605
    %v2172 = vunpack.c.h.b16 %v605
    %v2173 = vunpack.c.l.b16 %v606
    %v2174 = vunpack.c.h.b16 %v606
    %v2175 = vunpack.c.l.b16 %v607
    %v2176 = vunpack.c.h.b16 %v607
    %v2177 = vunpack.c.l.b16 %v608
    %v2178 = vunpack.c.h.b16 %v608
    %v2179 = vunpack.c.l.b16 %v609
    %v2180 = vunpack.c.h.b16 %v609
    %v2181 = vunpack.c.l.b16 %v610
    %v2182 = vunpack.c.h.b16 %v610
    %v2183 = vunpack.c.l.b16 %v611
    %v2184 = vunpack.c.h.b16 %v611
    %v2185 = vunpack.c.l.b16 %v612
    %v2186 = vunpack.c.h.b16 %v612
    %v2187 = vunpack.c.l.b16 %v613
    %v2188 = vunpack.c.h.b16 %v613
    %v2189 = vunpack.c.l.b16 %v614
    %v2190 = vunpack.c.h.b16 %v614
    %v2191 = vpack.c.b16 %v1175, %v1167
    %v2192 = vpack.c.b16 %v1176, %v1168
    %v2193 = vpack.c.b16 %v1177, %v1169
    %v2194 = vpack.c.b16 %v1178, %v1170
    %v2195 = vpack.c.b16 %v1179, %v1171
    %v2196 = vpack.c.b16 %v1180, %v1172
    %v2197 = vpack.c.b16 %v1181, %v1173
    %v2198 = vpack.c.b16 %v1182, %v1174
    %v2199 = vpack.c.b16 %v1191, %v1183
    %v2200 = vpack.c.b16 %v1192, %v1184
    %v2201 = vpack.c.b16 %v1193, %v1185
    %v2202 = vpack.c.b16 %v1194, %v1186
    %v2203 = vpack.c.b16 %v1195, %v1187
    %v2204 = vpack.c.b16 %v1196, %v1188
    %v2205 = vpack.c.b16 %v1197, %v1189
    %v2206 = vpack.c.b16 %v1198, %v1190
    %v2207 = vpack.c.b16 %v1207, %v1199
    %v2208 = vpack.c.b16 %v1208, %v1200
    %v2209 = vpack.c.b16 %v1209, %v1201
    %v2210 = vpack.c.b16 %v1210, %v1202
    %v2211 = vpack.c.b16 %v1211, %v1203
    %v2212 = vpack.c.b16 %v1212, %v1204
    %v2213 = vpack.c.b16 %v1213, %v1205
    %v2214 = vpack.c.b16 %v1214, %v1206
    %v2215 = vpack.c.b16 %v1223, %v1215
    %v2216 = vpack.c.b16 %v1224, %v1216
    %v2217 = vpack.c.b16 %v1225, %v1217
    %v2218 = vpack.c.b16 %v1226, %v1218
    %v2219 = vpack.c.b16 %v1227, %v1219
    %v2220 = vpack.c.b16 %v1228, %v1220
    %v2221 = vpack.c.b16 %v1229, %v1221
    %v2222 = vpack.c.b16 %v1230, %v1222
    %v2223 = vpack.c.b16 %v1239, %v1231
    %v2224 = vpack.c.b16 %v1240, %v1232
    %v2225 = vpack.c.b16 %v1241, %v1233
    %v2226 = vpack.c.b16 %v1242, %v1234
    %v2227 = vpack.c.b16 %v1243, %v1235
    %v2228 = vpack.c.b16 %v1244, %v1236
    %v2229 = vpack.c.b16 %v1245, %v1237
    %v2230 = vpack.c.b16 %v1246, %v1238
    %v2231 = vpack.c.b16 %v1255, %v1247
    %v2232 = vpack.c.b16 %v1256, %v1248
    %v2233 = vpack.c.b16 %v1257, %v1249
    %v2234 = vpack.c.b16 %v1258, %v1250
    %v2235 = vpack.c.b16 %v1259, %v1251
    %v2236 = vpack.c.b16 %v1260, %v1252
    %v2237 = vpack.c.b16 %v1261, %v1253
    %v2238 = vpack.c.b16 %v1262, %v1254
    %v2239 = vpack.c.b16 %v1271, %v1263
    %v2240 = vpack.c.b16 %v1272, %v1264
    %v2241 = vpack.c.b16 %v1273, %v1265
    %v2242 = vpack.c.b16 %v1274, %v1266
    %v2243 = vpack.c.b16 %v1275, %v1267
    %v2244 = vpack.c.b16 %v1276, %v1268
    %v2245 = vpack.c.b16 %v1277, %v1269
    %v2246 = vpack.c.b16 %v1278, %v1270
    %v2247 = vpack.c.b16 %v1287, %v1279
    %v2248 = vpack.c.b16 %v1288, %v1280
    %v2249 = vpack.c.b16 %v1289, %v1281
    %v2250 = vpack.c.b16 %v1290, %v1282
    %v2251 = vpack.c.b16 %v1291, %v1283
    %v2252 = vpack.c.b16 %v1292, %v1284
    %v2253 = vpack.c.b16 %v1293, %v1285
    %v2254 = vpack.c.b16 %v1294, %v1286
    %v2255 = vpack.c.b16 %v1303, %v1295
    %v2256 = vpack.c.b16 %v1304, %v1296
    %v2257 = vpack.c.b16 %v1305, %v1297
    %v2258 = vpack.c.b16 %v1306, %v1298
    %v2259 = vpack.c.b16 %v1307, %v1299
    %v2260 = vpack.c.b16 %v1308, %v1300
    %v2261 = vpack.c.b16 %v1309, %v1301
    %v2262 = vpack.c.b16 %v1310, %v1302
    %v2263 = vpack.c.b16 %v1319, %v1311
    %v2264 = vpack.c.b16 %v1320, %v1312
    %v2265 = vpack.c.b16 %v1321, %v1313
    %v2266 = vpack.c.b16 %v1322, %v1314
    %v2267 = vpack.c.b16 %v1323, %v1315
    %v2268 = vpack.c.b16 %v1324, %v1316
    %v2269 = vpack.c.b16 %v1325, %v1317
    %v2270 = vpack.c.b16 %v1326, %v1318
    %v2271 = vpack.c.b16 %v1335, %v1327
    %v2272 = vpack.c.b16 %v1336, %v1328
    %v2273 = vpack.c.b16 %v1337, %v1329
    %v2274 = vpack.c.b16 %v1338, %v1330
    %v2275 = vpack.c.b16 %v1339, %v1331
    %v2276 = vpack.c.b16 %v1340, %v1332
    %v2277 = vpack.c.b16 %v1341, %v1333
    %v2278 = vpack.c.b16 %v1342, %v1334
    %v2279 = vpack.c.b16 %v1351, %v1343
    %v2280 = vpack.c.b16 %v1352, %v1344
    %v2281 = vpack.c.b16 %v1353, %v1345
    %v2282 = vpack.c.b16 %v1354, %v1346
    %v2283 = vpack.c.b16 %v1355, %v1347
    %v2284 = vpack.c.b16 %v1356, %v1348
    %v2285 = vpack.c.b16 %v1357, %v1349
    %v2286 = vpack.c.b16 %v1358, %v1350
    %v2287 = vpack.c.b16 %v1367, %v1359
    %v2288 = vpack.c.b16 %v1368, %v1360
    %v2289 = vpack.c.b16 %v1369, %v1361
    %v2290 = vpack.c.b16 %v1370, %v1362
    %v2291 = vpack.c.b16 %v1371, %v1363
    %v2292 = vpack.c.b16 %v1372, %v1364
    %v2293 = vpack.c.b16 %v1373, %v1365
    %v2294 = vpack.c.b16 %v1374, %v1366
    %v2295 = vpack.c.b16 %v1383, %v1375
    %v2296 = vpack.c.b16 %v1384, %v1376
    %v2297 = vpack.c.b16 %v1385, %v1377
    %v2298 = vpack.c.b16 %v1386, %v1378
    %v2299 = vpack.c.b16 %v1387, %v1379
    %v2300 = vpack.c.b16 %v1388, %v1380
    %v2301 = vpack.c.b16 %v1389, %v1381
    %v2302 = vpack.c.b16 %v1390, %v1382
    %v2303 = vpack.c.b16 %v1399, %v1391
    %v2304 = vpack.c.b16 %v1400, %v1392
    %v2305 = vpack.c.b16 %v1401, %v1393
    %v2306 = vpack.c.b16 %v1402, %v1394
    %v2307 = vpack.c.b16 %v1403, %v1395
    %v2308 = vpack.c.b16 %v1404, %v1396
    %v2309 = vpack.c.b16 %v1405, %v1397
    %v2310 = vpack.c.b16 %v1406, %v1398
    %v2311 = vpack.c.b16 %v1415, %v1407
    %v2312 = vpack.c.b16 %v1416, %v1408
    %v2313 = vpack.c.b16 %v1417, %v1409
    %v2314 = vpack.c.b16 %v1418, %v1410
    %v2315 = vpack.c.b16 %v1419, %v1411
    %v2316 = vpack.c.b16 %v1420, %v1412
    %v2317 = vpack.c.b16 %v1421, %v1413
    %v2318 = vpack.c.b16 %v1422, %v1414
    %v2319 = vpack.c.b16 %v1431, %v1423
    %v2320 = vpack.c.b16 %v1432, %v1424
    %v2321 = vpack.c.b16 %v1433, %v1425
    %v2322 = vpack.c.b16 %v1434, %v1426
    %v2323 = vpack.c.b16 %v1435, %v1427
    %v2324 = vpack.c.b16 %v1436, %v1428
    %v2325 = vpack.c.b16 %v1437, %v1429
    %v2326 = vpack.c.b16 %v1438, %v1430
    %v2327 = vpack.c.b16 %v1447, %v1439
    %v2328 = vpack.c.b16 %v1448, %v1440
    %v2329 = vpack.c.b16 %v1449, %v1441
    %v2330 = vpack.c.b16 %v1450, %v1442
    %v2331 = vpack.c.b16 %v1451, %v1443
    %v2332 = vpack.c.b16 %v1452, %v1444
    %v2333 = vpack.c.b16 %v1453, %v1445
    %v2334 = vpack.c.b16 %v1454, %v1446
    %v2335 = vpack.c.b16 %v1463, %v1455
    %v2336 = vpack.c.b16 %v1464, %v1456
    %v2337 = vpack.c.b16 %v1465, %v1457
    %v2338 = vpack.c.b16 %v1466, %v1458
    %v2339 = vpack.c.b16 %v1467, %v1459
    %v2340 = vpack.c.b16 %v1468, %v1460
    %v2341 = vpack.c.b16 %v1469, %v1461
    %v2342 = vpack.c.b16 %v1470, %v1462
    %v2343 = vpack.c.b16 %v1479, %v1471
    %v2344 = vpack.c.b16 %v1480, %v1472
    %v2345 = vpack.c.b16 %v1481, %v1473
    %v2346 = vpack.c.b16 %v1482, %v1474
    %v2347 = vpack.c.b16 %v1483, %v1475
    %v2348 = vpack.c.b16 %v1484, %v1476
    %v2349 = vpack.c.b16 %v1485, %v1477
    %v2350 = vpack.c.b16 %v1486, %v1478
    %v2351 = vpack.c.b16 %v1495, %v1487
    %v2352 = vpack.c.b16 %v1496, %v1488
    %v2353 = vpack.c.b16 %v1497, %v1489
    %v2354 = vpack.c.b16 %v1498, %v1490
    %v2355 = vpack.c.b16 %v1499, %v1491
    %v2356 = vpack.c.b16 %v1500, %v1492
    %v2357 = vpack.c.b16 %v1501, %v1493
    %v2358 = vpack.c.b16 %v1502, %v1494
    %v2359 = vpack.c.b16 %v1511, %v1503
    %v2360 = vpack.c.b16 %v1512, %v1504
    %v2361 = vpack.c.b16 %v1513, %v1505
    %v2362 = vpack.c.b16 %v1514, %v1506
    %v2363 = vpack.c.b16 %v1515, %v1507
    %v2364 = vpack.c.b16 %v1516, %v1508
    %v2365 = vpack.c.b16 %v1517, %v1509
    %v2366 = vpack.c.b16 %v1518, %v1510
    %v2367 = vpack.c.b16 %v1527, %v1519
    %v2368 = vpack.c.b16 %v1528, %v1520
    %v2369 = vpack.c.b16 %v1529, %v1521
    %v2370 = vpack.c.b16 %v1530, %v1522
    %v2371 = vpack.c.b16 %v1531, %v1523
    %v2372 = vpack.c.b16 %v1532, %v1524
    %v2373 = vpack.c.b16 %v1533, %v1525
    %v2374 = vpack.c.b16 %v1534, %v1526
    %v2375 = vpack.c.b16 %v1543, %v1535
    %v2376 = vpack.c.b16 %v1544, %v1536
    %v2377 = vpack.c.b16 %v1545, %v1537
    %v2378 = vpack.c.b16 %v1546, %v1538
    %v2379 = vpack.c.b16 %v1547, %v1539
    %v2380 = vpack.c.b16 %v1548, %v1540
    %v2381 = vpack.c.b16 %v1549, %v1541
    %v2382 = vpack.c.b16 %v1550, %v1542
    %v2383 = vpack.c.b16 %v1559, %v1551
    %v2384 = vpack.c.b16 %v1560, %v1552
    %v2385 = vpack.c.b16 %v1561, %v1553
    %v2386 = vpack.c.b16 %v1562, %v1554
    %v2387 = vpack.c.b16 %v1563, %v1555
    %v2388 = vpack.c.b16 %v1564, %v1556
    %v2389 = vpack.c.b16 %v1565, %v1557
    %v2390 = vpack.c.b16 %v1566, %v1558
    %v2391 = vpack.c.b16 %v1575, %v1567
    %v2392 = vpack.c.b16 %v1576, %v1568
    %v2393 = vpack.c.b16 %v1577, %v1569
    %v2394 = vpack.c.b16 %v1578, %v1570
    %v2395 = vpack.c.b16 %v1579, %v1571
    %v2396 = vpack.c.b16 %v1580, %v1572
    %v2397 = vpack.c.b16 %v1581, %v1573
    %v2398 = vpack.c.b16 %v1582, %v1574
    %v2399 = vpack.c.b16 %v1591, %v1583
    %v2400 = vpack.c.b16 %v1592, %v1584
    %v2401 = vpack.c.b16 %v1593, %v1585
    %v2402 = vpack.c.b16 %v1594, %v1586
    %v2403 = vpack.c.b16 %v1595, %v1587
    %v2404 = vpack.c.b16 %v1596, %v1588
    %v2405 = vpack.c.b16 %v1597, %v1589
    %v2406 = vpack.c.b16 %v1598, %v1590
    %v2407 = vpack.c.b16 %v1607, %v1599
    %v2408 = vpack.c.b16 %v1608, %v1600
    %v2409 = vpack.c.b16 %v1609, %v1601
    %v2410 = vpack.c.b16 %v1610, %v1602
    %v2411 = vpack.c.b16 %v1611, %v1603
    %v2412 = vpack.c.b16 %v1612, %v1604
    %v2413 = vpack.c.b16 %v1613, %v1605
    %v2414 = vpack.c.b16 %v1614, %v1606
    %v2415 = vpack.c.b16 %v1623, %v1615
    %v2416 = vpack.c.b16 %v1624, %v1616
    %v2417 = vpack.c.b16 %v1625, %v1617
    %v2418 = vpack.c.b16 %v1626, %v1618
    %v2419 = vpack.c.b16 %v1627, %v1619
    %v2420 = vpack.c.b16 %v1628, %v1620
    %v2421 = vpack.c.b16 %v1629, %v1621
    %v2422 = vpack.c.b16 %v1630, %v1622
    %v2423 = vpack.c.b16 %v1639, %v1631
    %v2424 = vpack.c.b16 %v1640, %v1632
    %v2425 = vpack.c.b16 %v1641, %v1633
    %v2426 = vpack.c.b16 %v1642, %v1634
    %v2427 = vpack.c.b16 %v1643, %v1635
    %v2428 = vpack.c.b16 %v1644, %v1636
    %v2429 = vpack.c.b16 %v1645, %v1637
    %v2430 = vpack.c.b16 %v1646, %v1638
    %v2431 = vpack.c.b16 %v1655, %v1647
    %v2432 = vpack.c.b16 %v1656, %v1648
    %v2433 = vpack.c.b16 %v1657, %v1649
    %v2434 = vpack.c.b16 %v1658, %v1650
    %v2435 = vpack.c.b16 %v1659, %v1651
    %v2436 = vpack.c.b16 %v1660, %v1652
    %v2437 = vpack.c.b16 %v1661, %v1653
    %v2438 = vpack.c.b16 %v1662, %v1654
    %v2439 = vpack.c.b16 %v1671, %v1663
    %v2440 = vpack.c.b16 %v1672, %v1664
    %v2441 = vpack.c.b16 %v1673, %v1665
    %v2442 = vpack.c.b16 %v1674, %v1666
    %v2443 = vpack.c.b16 %v1675, %v1667
    %v2444 = vpack.c.b16 %v1676, %v1668
    %v2445 = vpack.c.b16 %v1677, %v1669
    %v2446 = vpack.c.b16 %v1678, %v1670
    %v2447 = vpack.c.b16 %v1687, %v1679
    %v2448 = vpack.c.b16 %v1688, %v1680
    %v2449 = vpack.c.b16 %v1689, %v1681
    %v2450 = vpack.c.b16 %v1690, %v1682
    %v2451 = vpack.c.b16 %v1691, %v1683
    %v2452 = vpack.c.b16 %v1692, %v1684
    %v2453 = vpack.c.b16 %v1693, %v1685
    %v2454 = vpack.c.b16 %v1694, %v1686
    %v2455 = vpack.c.b16 %v1703, %v1695
    %v2456 = vpack.c.b16 %v1704, %v1696
    %v2457 = vpack.c.b16 %v1705, %v1697
    %v2458 = vpack.c.b16 %v1706, %v1698
    %v2459 = vpack.c.b16 %v1707, %v1699
    %v2460 = vpack.c.b16 %v1708, %v1700
    %v2461 = vpack.c.b16 %v1709, %v1701
    %v2462 = vpack.c.b16 %v1710, %v1702
    %v2463 = vpack.c.b16 %v1719, %v1711
    %v2464 = vpack.c.b16 %v1720, %v1712
    %v2465 = vpack.c.b16 %v1721, %v1713
    %v2466 = vpack.c.b16 %v1722, %v1714
    %v2467 = vpack.c.b16 %v1723, %v1715
    %v2468 = vpack.c.b16 %v1724, %v1716
    %v2469 = vpack.c.b16 %v1725, %v1717
    %v2470 = vpack.c.b16 %v1726, %v1718
    %v2471 = vpack.c.b16 %v1735, %v1727
    %v2472 = vpack.c.b16 %v1736, %v1728
    %v2473 = vpack.c.b16 %v1737, %v1729
    %v2474 = vpack.c.b16 %v1738, %v1730
    %v2475 = vpack.c.b16 %v1739, %v1731
    %v2476 = vpack.c.b16 %v1740, %v1732
    %v2477 = vpack.c.b16 %v1741, %v1733
    %v2478 = vpack.c.b16 %v1742, %v1734
    %v2479 = vpack.c.b16 %v1751, %v1743
    %v2480 = vpack.c.b16 %v1752, %v1744
    %v2481 = vpack.c.b16 %v1753, %v1745
    %v2482 = vpack.c.b16 %v1754, %v1746
    %v2483 = vpack.c.b16 %v1755, %v1747
    %v2484 = vpack.c.b16 %v1756, %v1748
    %v2485 = vpack.c.b16 %v1757, %v1749
    %v2486 = vpack.c.b16 %v1758, %v1750
    %v2487 = vpack.c.b16 %v1767, %v1759
    %v2488 = vpack.c.b16 %v1768, %v1760
    %v2489 = vpack.c.b16 %v1769, %v1761
    %v2490 = vpack.c.b16 %v1770, %v1762
    %v2491 = vpack.c.b16 %v1771, %v1763
    %v2492 = vpack.c.b16 %v1772, %v1764
    %v2493 = vpack.c.b16 %v1773, %v1765
    %v2494 = vpack.c.b16 %v1774, %v1766
    %v2495 = vpack.c.b16 %v1783, %v1775
    %v2496 = vpack.c.b16 %v1784, %v1776
    %v2497 = vpack.c.b16 %v1785, %v1777
    %v2498 = vpack.c.b16 %v1786, %v1778
    %v2499 = vpack.c.b16 %v1787, %v1779
    %v2500 = vpack.c.b16 %v1788, %v1780
    %v2501 = vpack.c.b16 %v1789, %v1781
    %v2502 = vpack.c.b16 %v1790, %v1782
    %v2503 = vpack.c.b16 %v1799, %v1791
    %v2504 = vpack.c.b16 %v1800, %v1792
    %v2505 = vpack.c.b16 %v1801, %v1793
    %v2506 = vpack.c.b16 %v1802, %v1794
    %v2507 = vpack.c.b16 %v1803, %v1795
    %v2508 = vpack.c.b16 %v1804, %v1796
    %v2509 = vpack.c.b16 %v1805, %v1797
    %v2510 = vpack.c.b16 %v1806, %v1798
    %v2511 = vpack.c.b16 %v1815, %v1807
    %v2512 = vpack.c.b16 %v1816, %v1808
    %v2513 = vpack.c.b16 %v1817, %v1809
    %v2514 = vpack.c.b16 %v1818, %v1810
    %v2515 = vpack.c.b16 %v1819, %v1811
    %v2516 = vpack.c.b16 %v1820, %v1812
    %v2517 = vpack.c.b16 %v1821, %v1813
    %v2518 = vpack.c.b16 %v1822, %v1814
    %v2519 = vpack.c.b16 %v1831, %v1823
    %v2520 = vpack.c.b16 %v1832, %v1824
    %v2521 = vpack.c.b16 %v1833, %v1825
    %v2522 = vpack.c.b16 %v1834, %v1826
    %v2523 = vpack.c.b16 %v1835, %v1827
    %v2524 = vpack.c.b16 %v1836, %v1828
    %v2525 = vpack.c.b16 %v1837, %v1829
    %v2526 = vpack.c.b16 %v1838, %v1830
    %v2527 = vpack.c.b16 %v1847, %v1839
    %v2528 = vpack.c.b16 %v1848, %v1840
    %v2529 = vpack.c.b16 %v1849, %v1841
    %v2530 = vpack.c.b16 %v1850, %v1842
    %v2531 = vpack.c.b16 %v1851, %v1843
    %v2532 = vpack.c.b16 %v1852, %v1844
    %v2533 = vpack.c.b16 %v1853, %v1845
    %v2534 = vpack.c.b16 %v1854, %v1846
    %v2535 = vpack.c.b16 %v1863, %v1855
    %v2536 = vpack.c.b16 %v1864, %v1856
    %v2537 = vpack.c.b16 %v1865, %v1857
    %v2538 = vpack.c.b16 %v1866, %v1858
    %v2539 = vpack.c.b16 %v1867, %v1859
    %v2540 = vpack.c.b16 %v1868, %v1860
    %v2541 = vpack.c.b16 %v1869, %v1861
    %v2542 = vpack.c.b16 %v1870, %v1862
    %v2543 = vpack.c.b16 %v1879, %v1871
    %v2544 = vpack.c.b16 %v1880, %v1872
    %v2545 = vpack.c.b16 %v1881, %v1873
    %v2546 = vpack.c.b16 %v1882, %v1874
    %v2547 = vpack.c.b16 %v1883, %v1875
    %v2548 = vpack.c.b16 %v1884, %v1876
    %v2549 = vpack.c.b16 %v1885, %v1877
    %v2550 = vpack.c.b16 %v1886, %v1878
    %v2551 = vpack.c.b16 %v1895, %v1887
    %v2552 = vpack.c.b16 %v1896, %v1888
    %v2553 = vpack.c.b16 %v1897, %v1889
    %v2554 = vpack.c.b16 %v1898, %v1890
    %v2555 = vpack.c.b16 %v1899, %v1891
    %v2556 = vpack.c.b16 %v1900, %v1892
    %v2557 = vpack.c.b16 %v1901, %v1893
    %v2558 = vpack.c.b16 %v1902, %v1894
    %v2559 = vpack.c.b16 %v1911, %v1903
    %v2560 = vpack.c.b16 %v1912, %v1904
    %v2561 = vpack.c.b16 %v1913, %v1905
    %v2562 = vpack.c.b16 %v1914, %v1906
    %v2563 = vpack.c.b16 %v1915, %v1907
    %v2564 = vpack.c.b16 %v1916, %v1908
    %v2565 = vpack.c.b16 %v1917, %v1909
    %v2566 = vpack.c.b16 %v1918, %v1910
    %v2567 = vpack.c.b16 %v1927, %v1919
    %v2568 = vpack.c.b16 %v1928, %v1920
    %v2569 = vpack.c.b16 %v1929, %v1921
    %v2570 = vpack.c.b16 %v1930, %v1922
    %v2571 = vpack.c.b16 %v1931, %v1923
    %v2572 = vpack.c.b16 %v1932, %v1924
    %v2573 = vpack.c.b16 %v1933, %v1925
    %v2574 = vpack.c.b16 %v1934, %v1926
    %v2575 = vpack.c.b16 %v1943, %v1935
    %v2576 = vpack.c.b16 %v1944, %v1936
    %v2577 = vpack.c.b16 %v1945, %v1937
    %v2578 = vpack.c.b16 %v1946, %v1938
    %v2579 = vpack.c.b16 %v1947, %v1939
    %v2580 = vpack.c.b16 %v1948, %v1940
    %v2581 = vpack.c.b16 %v1949, %v1941
    %v2582 = vpack.c.b16 %v1950, %v1942
    %v2583 = vpack.c.b16 %v1959, %v1951
    %v2584 = vpack.c.b16 %v1960, %v1952
    %v2585 = vpack.c.b16 %v1961, %v1953
    %v2586 = vpack.c.b16 %v1962, %v1954
    %v2587 = vpack.c.b16 %v1963, %v1955
    %v2588 = vpack.c.b16 %v1964, %v1956
    %v2589 = vpack.c.b16 %v1965, %v1957
    %v2590 = vpack.c.b16 %v1966, %v1958
    %v2591 = vpack.c.b16 %v1975, %v1967
    %v2592 = vpack.c.b16 %v1976, %v1968
    %v2593 = vpack.c.b16 %v1977, %v1969
    %v2594 = vpack.c.b16 %v1978, %v1970
    %v2595 = vpack.c.b16 %v1979, %v1971
    %v2596 = vpack.c.b16 %v1980, %v1972
    %v2597 = vpack.c.b16 %v1981, %v1973
    %v2598 = vpack.c.b16 %v1982, %v1974
    %v2599 = vpack.c.b16 %v1991, %v1983
    %v2600 = vpack.c.b16 %v1992, %v1984
    %v2601 = vpack.c.b16 %v1993, %v1985
    %v2602 = vpack.c.b16 %v1994, %v1986
    %v2603 = vpack.c.b16 %v1995, %v1987
    %v2604 = vpack.c.b16 %v1996, %v1988
    %v2605 = vpack.c.b16 %v1997, %v1989
    %v2606 = vpack.c.b16 %v1998, %v1990
    %v2607 = vpack.c.b16 %v2007, %v1999
    %v2608 = vpack.c.b16 %v2008, %v2000
    %v2609 = vpack.c.b16 %v2009, %v2001
    %v2610 = vpack.c.b16 %v2010, %v2002
    %v2611 = vpack.c.b16 %v2011, %v2003
    %v2612 = vpack.c.b16 %v2012, %v2004
    %v2613 = vpack.c.b16 %v2013, %v2005
    %v2614 = vpack.c.b16 %v2014, %v2006
    %v2615 = vpack.c.b16 %v2023, %v2015
    %v2616 = vpack.c.b16 %v2024, %v2016
    %v2617 = vpack.c.b16 %v2025, %v2017
    %v2618 = vpack.c.b16 %v2026, %v2018
    %v2619 = vpack.c.b16 %v2027, %v2019
    %v2620 = vpack.c.b16 %v2028, %v2020
    %v2621 = vpack.c.b16 %v2029, %v2021
    %v2622 = vpack.c.b16 %v2030, %v2022
    %v2623 = vpack.c.b16 %v2039, %v2031
    %v2624 = vpack.c.b16 %v2040, %v2032
    %v2625 = vpack.c.b16 %v2041, %v2033
    %v2626 = vpack.c.b16 %v2042, %v2034
    %v2627 = vpack.c.b16 %v2043, %v2035
    %v2628 = vpack.c.b16 %v2044, %v2036
    %v2629 = vpack.c.b16 %v2045, %v2037
    %v2630 = vpack.c.b16 %v2046, %v2038
    %v2631 = vpack.c.b16 %v2055, %v2047
    %v2632 = vpack.c.b16 %v2056, %v2048
    %v2633 = vpack.c.b16 %v2057, %v2049
    %v2634 = vpack.c.b16 %v2058, %v2050
    %v2635 = vpack.c.b16 %v2059, %v2051
    %v2636 = vpack.c.b16 %v2060, %v2052
    %v2637 = vpack.c.b16 %v2061, %v2053
    %v2638 = vpack.c.b16 %v2062, %v2054
    %v2639 = vpack.c.b16 %v2071, %v2063
    %v2640 = vpack.c.b16 %v2072, %v2064
    %v2641 = vpack.c.b16 %v2073, %v2065
    %v2642 = vpack.c.b16 %v2074, %v2066
    %v2643 = vpack.c.b16 %v2075, %v2067
    %v2644 = vpack.c.b16 %v2076, %v2068
    %v2645 = vpack.c.b16 %v2077, %v2069
    %v2646 = vpack.c.b16 %v2078, %v2070
    %v2647 = vpack.c.b16 %v2087, %v2079
    %v2648 = vpack.c.b16 %v2088, %v2080
    %v2649 = vpack.c.b16 %v2089, %v2081
    %v2650 = vpack.c.b16 %v2090, %v2082
    %v2651 = vpack.c.b16 %v2091, %v2083
    %v2652 = vpack.c.b16 %v2092, %v2084
    %v2653 = vpack.c.b16 %v2093, %v2085
    %v2654 = vpack.c.b16 %v2094, %v2086
    %v2655 = vpack.c.b16 %v2103, %v2095
    %v2656 = vpack.c.b16 %v2104, %v2096
    %v2657 = vpack.c.b16 %v2105, %v2097
    %v2658 = vpack.c.b16 %v2106, %v2098
    %v2659 = vpack.c.b16 %v2107, %v2099
    %v2660 = vpack.c.b16 %v2108, %v2100
    %v2661 = vpack.c.b16 %v2109, %v2101
    %v2662 = vpack.c.b16 %v2110, %v2102
    %v2663 = vpack.c.b16 %v2119, %v2111
    %v2664 = vpack.c.b16 %v2120, %v2112
    %v2665 = vpack.c.b16 %v2121, %v2113
    %v2666 = vpack.c.b16 %v2122, %v2114
    %v2667 = vpack.c.b16 %v2123, %v2115
    %v2668 = vpack.c.b16 %v2124, %v2116
    %v2669 = vpack.c.b16 %v2125, %v2117
    %v2670 = vpack.c.b16 %v2126, %v2118
    %v2671 = vpack.c.b16 %v2135, %v2127
    %v2672 = vpack.c.b16 %v2136, %v2128
    %v2673 = vpack.c.b16 %v2137, %v2129
    %v2674 = vpack.c.b16 %v2138, %v2130
    %v2675 = vpack.c.b16 %v2139, %v2131
    %v2676 = vpack.c.b16 %v2140, %v2132
    %v2677 = vpack.c.b16 %v2141, %v2133
    %v2678 = vpack.c.b16 %v2142, %v2134
    %v2679 = vpack.c.b16 %v2151, %v2143
    %v2680 = vpack.c.b16 %v2152, %v2144
    %v2681 = vpack.c.b16 %v2153, %v2145
    %v2682 = vpack.c.b16 %v2154, %v2146
    %v2683 = vpack.c.b16 %v2155, %v2147
    %v2684 = vpack.c.b16 %v2156, %v2148
    %v2685 = vpack.c.b16 %v2157, %v2149
    %v2686 = vpack.c.b16 %v2158, %v2150
    %v2687 = vpack.c.b16 %v2167, %v2159
    %v2688 = vpack.c.b16 %v2168, %v2160
    %v2689 = vpack.c.b16 %v2169, %v2161
    %v2690 = vpack.c.b16 %v2170, %v2162
    %v2691 = vpack.c.b16 %v2171, %v2163
    %v2692 = vpack.c.b16 %v2172, %v2164
    %v2693 = vpack.c.b16 %v2173, %v2165
    %v2694 = vpack.c.b16 %v2174, %v2166
    %v2695 = vpack.c.b16 %v2183, %v2175
    %v2696 = vpack.c.b16 %v2184, %v2176
    %v2697 = vpack.c.b16 %v2185, %v2177
    %v2698 = vpack.c.b16 %v2186, %v2178
    %v2699 = vpack.c.b16 %v2187, %v2179
    %v2700 = vpack.c.b16 %v2188, %v2180
    %v2701 = vpack.c.b16 %v2189, %v2181
    %v2702 = vpack.c.b16 %v2190, %v2182
    %3215 = vmatprep.subr.bf16.mxu0 %v2248
    %3216 = vmatpush1.bf16.msra.mxu0 %v2247
    %3217 = vmatprep.subr.bf16.mxu0 %v2240
    %3218 = vmatpush1.bf16.msra.mxu0 %v2239
    %3219 = vmatprep.subr.bf16.mxu0 %v2232
    %3220 = vmatpush1.bf16.msra.mxu0 %v2231
    %3221 = vmatprep.subr.bf16.mxu0 %v2224
    %3222 = vmatpush1.bf16.msra.mxu0 %v2223
    %3223 = vmatprep.subr.bf16.mxu0 %v2216
    %3224 = vmatpush1.bf16.msra.mxu0 %v2215
    %3225 = vmatprep.subr.bf16.mxu0 %v2208
    %3226 = vmatpush1.bf16.msra.mxu0 %v2207
    %3227 = vmatprep.subr.bf16.mxu0 %v2200
    %3228 = vmatpush1.bf16.msra.mxu0 %v2199
    %3229 = vmatprep.subr.bf16.mxu0 %v2192
    %3230 = vmatpush1.bf16.msra.mxu0 %v2191
    %3231 = vmatprep.subr.bf16.mxu0 %v2312
    %3232 = vmatpush2.bf16.msra.mxu0 %v2311
    %3233 = vmatprep.subr.bf16.mxu0 %v2304
    %3234 = vmatpush2.bf16.msra.mxu0 %v2303
    %3235 = vmatprep.subr.bf16.mxu0 %v2296
    %3236 = vmatpush2.bf16.msra.mxu0 %v2295
    %3237 = vmatprep.subr.bf16.mxu0 %v2288
    %3238 = vmatpush2.bf16.msra.mxu0 %v2287
    %3239 = vmatprep.subr.bf16.mxu0 %v2280
    %3240 = vmatpush2.bf16.msra.mxu0 %v2279
    %3241 = vmatprep.subr.bf16.mxu0 %v2272
    %3242 = vmatpush2.bf16.msra.mxu0 %v2271
    %3243 = vmatprep.subr.bf16.mxu0 %v2264
    %3244 = vmatpush2.bf16.msra.mxu0 %v2263
    %3245 = vmatprep.subr.bf16.mxu0 %v2256
    %3246 = vmatpush2.bf16.msra.mxu0 %v2255
    %3247 = vmatprep.mubr.bf16.mxu0 %v640
    %3248 = vmatmul.mubr.bf16.gmra.mxu0 %v639
    %v3249 = vpop.f32.mrf.mxu0
    %v3250 = vadd.f32 0.0, %v3249
    %v3251 = vpop.f32.mrf.mxu0
    %v3252 = vadd.f32 0.0, %v3251
    %v3253 = vpop.f32.mrf.mxu0
    %v3254 = vadd.f32 0.0, %v3253
    %v3255 = vpop.f32.mrf.mxu0
    %v3256 = vadd.f32 0.0, %v3255
    %3257 = vdwg.mxu0
    %3258 = vmatprep.subr.bf16.mxu0 %v2376
    %3259 = vmatpush1.bf16.msra.mxu0 %v2375
    %3260 = vmatprep.subr.bf16.mxu0 %v2368
    %3261 = vmatpush1.bf16.msra.mxu0 %v2367
    %3262 = vmatprep.subr.bf16.mxu0 %v2360
    %3263 = vmatpush1.bf16.msra.mxu0 %v2359
    %3264 = vmatprep.subr.bf16.mxu0 %v2352
    %3265 = vmatpush1.bf16.msra.mxu0 %v2351
    %3266 = vmatprep.subr.bf16.mxu0 %v2344
    %3267 = vmatpush1.bf16.msra.mxu0 %v2343
    %3268 = vmatprep.subr.bf16.mxu0 %v2336
    %3269 = vmatpush1.bf16.msra.mxu0 %v2335
    %3270 = vmatprep.subr.bf16.mxu0 %v2328
    %3271 = vmatpush1.bf16.msra.mxu0 %v2327
    %3272 = vmatprep.subr.bf16.mxu0 %v2320
    %3273 = vmatpush1.bf16.msra.mxu0 %v2319
    %3274 = vmatprep.subr.bf16.mxu0 %v2440
    %3275 = vmatpush2.bf16.msra.mxu0 %v2439
    %3276 = vmatprep.subr.bf16.mxu0 %v2432
    %3277 = vmatpush2.bf16.msra.mxu0 %v2431
    %3278 = vmatprep.subr.bf16.mxu0 %v2424
    %3279 = vmatpush2.bf16.msra.mxu0 %v2423
    %3280 = vmatprep.subr.bf16.mxu0 %v2416
    %3281 = vmatpush2.bf16.msra.mxu0 %v2415
    %3282 = vmatprep.subr.bf16.mxu0 %v2408
    %3283 = vmatpush2.bf16.msra.mxu0 %v2407
    %3284 = vmatprep.subr.bf16.mxu0 %v2400
    %3285 = vmatpush2.bf16.msra.mxu0 %v2399
    %3286 = vmatprep.subr.bf16.mxu0 %v2392
    %3287 = vmatpush2.bf16.msra.mxu0 %v2391
    %3288 = vmatprep.subr.bf16.mxu0 %v2384
    %3289 = vmatpush2.bf16.msra.mxu0 %v2383
    %3290 = vmatprep.mubr.bf16.mxu0 %v642
    %3291 = vmatmul.mubr.bf16.gmra.mxu0 %v641
    %v3292 = vpop.f32.mrf.mxu0
    %v3293 = vadd.f32 %v3250, %v3292
    %v3294 = vpop.f32.mrf.mxu0
    %v3295 = vadd.f32 %v3252, %v3294
    %v3296 = vpop.f32.mrf.mxu0
    %v3297 = vadd.f32 %v3254, %v3296
    %v3298 = vpop.f32.mrf.mxu0
    %v3299 = vadd.f32 %v3256, %v3298
    %3300 = vdwg.mxu0
    %3301 = vmatprep.subr.bf16.mxu0 %v2504
    %3302 = vmatpush1.bf16.msra.mxu0 %v2503
    %3303 = vmatprep.subr.bf16.mxu0 %v2496
    %3304 = vmatpush1.bf16.msra.mxu0 %v2495
    %3305 = vmatprep.subr.bf16.mxu0 %v2488
    %3306 = vmatpush1.bf16.msra.mxu0 %v2487
    %3307 = vmatprep.subr.bf16.mxu0 %v2480
    %3308 = vmatpush1.bf16.msra.mxu0 %v2479
    %3309 = vmatprep.subr.bf16.mxu0 %v2472
    %3310 = vmatpush1.bf16.msra.mxu0 %v2471
    %3311 = vmatprep.subr.bf16.mxu0 %v2464
    %3312 = vmatpush1.bf16.msra.mxu0 %v2463
    %3313 = vmatprep.subr.bf16.mxu0 %v2456
    %3314 = vmatpush1.bf16.msra.mxu0 %v2455
    %3315 = vmatprep.subr.bf16.mxu0 %v2448
    %3316 = vmatpush1.bf16.msra.mxu0 %v2447
    %3317 = vmatprep.subr.bf16.mxu0 %v2568
    %3318 = vmatpush2.bf16.msra.mxu0 %v2567
    %3319 = vmatprep.subr.bf16.mxu0 %v2560
    %3320 = vmatpush2.bf16.msra.mxu0 %v2559
    %3321 = vmatprep.subr.bf16.mxu0 %v2552
    %3322 = vmatpush2.bf16.msra.mxu0 %v2551
    %3323 = vmatprep.subr.bf16.mxu0 %v2544
    %3324 = vmatpush2.bf16.msra.mxu0 %v2543
    %3325 = vmatprep.subr.bf16.mxu0 %v2536
    %3326 = vmatpush2.bf16.msra.mxu0 %v2535
    %3327 = vmatprep.subr.bf16.mxu0 %v2528
    %3328 = vmatpush2.bf16.msra.mxu0 %v2527
    %3329 = vmatprep.subr.bf16.mxu0 %v2520
    %3330 = vmatpush2.bf16.msra.mxu0 %v2519
    %3331 = vmatprep.subr.bf16.mxu0 %v2512
    %3332 = vmatpush2.bf16.msra.mxu0 %v2511
    %3333 = vmatprep.mubr.bf16.mxu0 %v644
    %3334 = vmatmul.mubr.bf16.gmra.mxu0 %v643
    %v3335 = vpop.f32.mrf.mxu0
    %v3336 = vadd.f32 %v3293, %v3335
    %v3337 = vpop.f32.mrf.mxu0
    %v3338 = vadd.f32 %v3295, %v3337
    %v3339 = vpop.f32.mrf.mxu0
    %v3340 = vadd.f32 %v3297, %v3339
    %v3341 = vpop.f32.mrf.mxu0
    %v3342 = vadd.f32 %v3299, %v3341
    %3343 = vdwg.mxu0
    %3344 = vmatprep.subr.bf16.mxu0 %v2632
    %3345 = vmatpush1.bf16.msra.mxu0 %v2631
    %3346 = vmatprep.subr.bf16.mxu0 %v2624
    %3347 = vmatpush1.bf16.msra.mxu0 %v2623
    %3348 = vmatprep.subr.bf16.mxu0 %v2616
    %3349 = vmatpush1.bf16.msra.mxu0 %v2615
    %3350 = vmatprep.subr.bf16.mxu0 %v2608
    %3351 = vmatpush1.bf16.msra.mxu0 %v2607
    %3352 = vmatprep.subr.bf16.mxu0 %v2600
    %3353 = vmatpush1.bf16.msra.mxu0 %v2599
    %3354 = vmatprep.subr.bf16.mxu0 %v2592
    %3355 = vmatpush1.bf16.msra.mxu0 %v2591
    %3356 = vmatprep.subr.bf16.mxu0 %v2584
    %3357 = vmatpush1.bf16.msra.mxu0 %v2583
    %3358 = vmatprep.subr.bf16.mxu0 %v2576
    %3359 = vmatpush1.bf16.msra.mxu0 %v2575
    %3360 = vmatprep.subr.bf16.mxu0 %v2696
    %3361 = vmatpush2.bf16.msra.mxu0 %v2695
    %3362 = vmatprep.subr.bf16.mxu0 %v2688
    %3363 = vmatpush2.bf16.msra.mxu0 %v2687
    %3364 = vmatprep.subr.bf16.mxu0 %v2680
    %3365 = vmatpush2.bf16.msra.mxu0 %v2679
    %3366 = vmatprep.subr.bf16.mxu0 %v2672
    %3367 = vmatpush2.bf16.msra.mxu0 %v2671
    %3368 = vmatprep.subr.bf16.mxu0 %v2664
    %3369 = vmatpush2.bf16.msra.mxu0 %v2663
    %3370 = vmatprep.subr.bf16.mxu0 %v2656
    %3371 = vmatpush2.bf16.msra.mxu0 %v2655
    %3372 = vmatprep.subr.bf16.mxu0 %v2648
    %3373 = vmatpush2.bf16.msra.mxu0 %v2647
    %3374 = vmatprep.subr.bf16.mxu0 %v2640
    %3375 = vmatpush2.bf16.msra.mxu0 %v2639
    %3376 = vmatprep.mubr.bf16.mxu0 %v646
    %3377 = vmatmul.mubr.bf16.gmra.mxu0 %v645
    %v3378 = vpop.f32.mrf.mxu0
    %v3379 = vadd.f32 %v3336, %v3378
    %v3380 = vpop.f32.mrf.mxu0
    %v3381 = vadd.f32 %v3338, %v3380
    %v3382 = vpop.f32.mrf.mxu0
    %v3383 = vadd.f32 %v3340, %v3382
    %v3384 = vpop.f32.mrf.mxu0
    %v3385 = vadd.f32 %v3342, %v3384
    %3386 = vdwg.mxu0
    %3387 = vmatprep.subr.bf16.mxu0 %v2250
    %3388 = vmatpush1.bf16.msra.mxu0 %v2249
    %3389 = vmatprep.subr.bf16.mxu0 %v2242
    %3390 = vmatpush1.bf16.msra.mxu0 %v2241
    %3391 = vmatprep.subr.bf16.mxu0 %v2234
    %3392 = vmatpush1.bf16.msra.mxu0 %v2233
    %3393 = vmatprep.subr.bf16.mxu0 %v2226
    %3394 = vmatpush1.bf16.msra.mxu0 %v2225
    %3395 = vmatprep.subr.bf16.mxu0 %v2218
    %3396 = vmatpush1.bf16.msra.mxu0 %v2217
    %3397 = vmatprep.subr.bf16.mxu0 %v2210
    %3398 = vmatpush1.bf16.msra.mxu0 %v2209
    %3399 = vmatprep.subr.bf16.mxu0 %v2202
    %3400 = vmatpush1.bf16.msra.mxu0 %v2201
    %3401 = vmatprep.subr.bf16.mxu0 %v2194
    %3402 = vmatpush1.bf16.msra.mxu0 %v2193
    %3403 = vmatprep.subr.bf16.mxu0 %v2314
    %3404 = vmatpush2.bf16.msra.mxu0 %v2313
    %3405 = vmatprep.subr.bf16.mxu0 %v2306
    %3406 = vmatpush2.bf16.msra.mxu0 %v2305
    %3407 = vmatprep.subr.bf16.mxu0 %v2298
    %3408 = vmatpush2.bf16.msra.mxu0 %v2297
    %3409 = vmatprep.subr.bf16.mxu0 %v2290
    %3410 = vmatpush2.bf16.msra.mxu0 %v2289
    %3411 = vmatprep.subr.bf16.mxu0 %v2282
    %3412 = vmatpush2.bf16.msra.mxu0 %v2281
    %3413 = vmatprep.subr.bf16.mxu0 %v2274
    %3414 = vmatpush2.bf16.msra.mxu0 %v2273
    %3415 = vmatprep.subr.bf16.mxu0 %v2266
    %3416 = vmatpush2.bf16.msra.mxu0 %v2265
    %3417 = vmatprep.subr.bf16.mxu0 %v2258
    %3418 = vmatpush2.bf16.msra.mxu0 %v2257
    %3419 = vmatprep.mubr.bf16.mxu0 %v640
    %3420 = vmatmul.mubr.bf16.gmra.mxu0 %v639
    %v3421 = vpop.f32.mrf.mxu0
    %v3422 = vadd.f32 0.0, %v3421
    %v3423 = vpop.f32.mrf.mxu0
    %v3424 = vadd.f32 0.0, %v3423
    %v3425 = vpop.f32.mrf.mxu0
    %v3426 = vadd.f32 0.0, %v3425
    %v3427 = vpop.f32.mrf.mxu0
    %v3428 = vadd.f32 0.0, %v3427
    %3429 = vdwg.mxu0
    %3430 = vmatprep.subr.bf16.mxu0 %v2378
    %3431 = vmatpush1.bf16.msra.mxu0 %v2377
    %3432 = vmatprep.subr.bf16.mxu0 %v2370
    %3433 = vmatpush1.bf16.msra.mxu0 %v2369
    %3434 = vmatprep.subr.bf16.mxu0 %v2362
    %3435 = vmatpush1.bf16.msra.mxu0 %v2361
    %3436 = vmatprep.subr.bf16.mxu0 %v2354
    %3437 = vmatpush1.bf16.msra.mxu0 %v2353
    %3438 = vmatprep.subr.bf16.mxu0 %v2346
    %3439 = vmatpush1.bf16.msra.mxu0 %v2345
    %3440 = vmatprep.subr.bf16.mxu0 %v2338
    %3441 = vmatpush1.bf16.msra.mxu0 %v2337
    %3442 = vmatprep.subr.bf16.mxu0 %v2330
    %3443 = vmatpush1.bf16.msra.mxu0 %v2329
    %3444 = vmatprep.subr.bf16.mxu0 %v2322
    %3445 = vmatpush1.bf16.msra.mxu0 %v2321
    %3446 = vmatprep.subr.bf16.mxu0 %v2442
    %3447 = vmatpush2.bf16.msra.mxu0 %v2441
    %3448 = vmatprep.subr.bf16.mxu0 %v2434
    %3449 = vmatpush2.bf16.msra.mxu0 %v2433
    %3450 = vmatprep.subr.bf16.mxu0 %v2426
    %3451 = vmatpush2.bf16.msra.mxu0 %v2425
    %3452 = vmatprep.subr.bf16.mxu0 %v2418
    %3453 = vmatpush2.bf16.msra.mxu0 %v2417
    %3454 = vmatprep.subr.bf16.mxu0 %v2410
    %3455 = vmatpush2.bf16.msra.mxu0 %v2409
    %3456 = vmatprep.subr.bf16.mxu0 %v2402
    %3457 = vmatpush2.bf16.msra.mxu0 %v2401
    %3458 = vmatprep.subr.bf16.mxu0 %v2394
    %3459 = vmatpush2.bf16.msra.mxu0 %v2393
    %3460 = vmatprep.subr.bf16.mxu0 %v2386
    %3461 = vmatpush2.bf16.msra.mxu0 %v2385
    %3462 = vmatprep.mubr.bf16.mxu0 %v642
    %3463 = vmatmul.mubr.bf16.gmra.mxu0 %v641
    %v3464 = vpop.f32.mrf.mxu0
    %v3465 = vadd.f32 %v3422, %v3464
    %v3466 = vpop.f32.mrf.mxu0
    %v3467 = vadd.f32 %v3424, %v3466
    %v3468 = vpop.f32.mrf.mxu0
    %v3469 = vadd.f32 %v3426, %v3468
    %v3470 = vpop.f32.mrf.mxu0
    %v3471 = vadd.f32 %v3428, %v3470
    %3472 = vdwg.mxu0
    %3473 = vmatprep.subr.bf16.mxu0 %v2506
    %3474 = vmatpush1.bf16.msra.mxu0 %v2505
    %3475 = vmatprep.subr.bf16.mxu0 %v2498
    %3476 = vmatpush1.bf16.msra.mxu0 %v2497
    %3477 = vmatprep.subr.bf16.mxu0 %v2490
    %3478 = vmatpush1.bf16.msra.mxu0 %v2489
    %3479 = vmatprep.subr.bf16.mxu0 %v2482
    %3480 = vmatpush1.bf16.msra.mxu0 %v2481
    %3481 = vmatprep.subr.bf16.mxu0 %v2474
    %3482 = vmatpush1.bf16.msra.mxu0 %v2473
    %3483 = vmatprep.subr.bf16.mxu0 %v2466
    %3484 = vmatpush1.bf16.msra.mxu0 %v2465
    %3485 = vmatprep.subr.bf16.mxu0 %v2458
    %3486 = vmatpush1.bf16.msra.mxu0 %v2457
    %3487 = vmatprep.subr.bf16.mxu0 %v2450
    %3488 = vmatpush1.bf16.msra.mxu0 %v2449
    %3489 = vmatprep.subr.bf16.mxu0 %v2570
    %3490 = vmatpush2.bf16.msra.mxu0 %v2569
    %3491 = vmatprep.subr.bf16.mxu0 %v2562
    %3492 = vmatpush2.bf16.msra.mxu0 %v2561
    %3493 = vmatprep.subr.bf16.mxu0 %v2554
    %3494 = vmatpush2.bf16.msra.mxu0 %v2553
    %3495 = vmatprep.subr.bf16.mxu0 %v2546
    %3496 = vmatpush2.bf16.msra.mxu0 %v2545
    %3497 = vmatprep.subr.bf16.mxu0 %v2538
    %3498 = vmatpush2.bf16.msra.mxu0 %v2537
    %3499 = vmatprep.subr.bf16.mxu0 %v2530
    %3500 = vmatpush2.bf16.msra.mxu0 %v2529
    %3501 = vmatprep.subr.bf16.mxu0 %v2522
    %3502 = vmatpush2.bf16.msra.mxu0 %v2521
    %3503 = vmatprep.subr.bf16.mxu0 %v2514
    %3504 = vmatpush2.bf16.msra.mxu0 %v2513
    %3505 = vmatprep.mubr.bf16.mxu0 %v644
    %3506 = vmatmul.mubr.bf16.gmra.mxu0 %v643
    %v3507 = vpop.f32.mrf.mxu0
    %v3508 = vadd.f32 %v3465, %v3507
    %v3509 = vpop.f32.mrf.mxu0
    %v3510 = vadd.f32 %v3467, %v3509
    %v3511 = vpop.f32.mrf.mxu0
    %v3512 = vadd.f32 %v3469, %v3511
    %v3513 = vpop.f32.mrf.mxu0
    %v3514 = vadd.f32 %v3471, %v3513
    %3515 = vdwg.mxu0
    %3516 = vmatprep.subr.bf16.mxu0 %v2634
    %3517 = vmatpush1.bf16.msra.mxu0 %v2633
    %3518 = vmatprep.subr.bf16.mxu0 %v2626
    %3519 = vmatpush1.bf16.msra.mxu0 %v2625
    %3520 = vmatprep.subr.bf16.mxu0 %v2618
    %3521 = vmatpush1.bf16.msra.mxu0 %v2617
    %3522 = vmatprep.subr.bf16.mxu0 %v2610
    %3523 = vmatpush1.bf16.msra.mxu0 %v2609
    %3524 = vmatprep.subr.bf16.mxu0 %v2602
    %3525 = vmatpush1.bf16.msra.mxu0 %v2601
    %3526 = vmatprep.subr.bf16.mxu0 %v2594
    %3527 = vmatpush1.bf16.msra.mxu0 %v2593
    %3528 = vmatprep.subr.bf16.mxu0 %v2586
    %3529 = vmatpush1.bf16.msra.mxu0 %v2585
    %3530 = vmatprep.subr.bf16.mxu0 %v2578
    %3531 = vmatpush1.bf16.msra.mxu0 %v2577
    %3532 = vmatprep.subr.bf16.mxu0 %v2698
    %3533 = vmatpush2.bf16.msra.mxu0 %v2697
    %3534 = vmatprep.subr.bf16.mxu0 %v2690
    %3535 = vmatpush2.bf16.msra.mxu0 %v2689
    %3536 = vmatprep.subr.bf16.mxu0 %v2682
    %3537 = vmatpush2.bf16.msra.mxu0 %v2681
    %3538 = vmatprep.subr.bf16.mxu0 %v2674
    %3539 = vmatpush2.bf16.msra.mxu0 %v2673
    %3540 = vmatprep.subr.bf16.mxu0 %v2666
    %3541 = vmatpush2.bf16.msra.mxu0 %v2665
    %3542 = vmatprep.subr.bf16.mxu0 %v2658
    %3543 = vmatpush2.bf16.msra.mxu0 %v2657
    %3544 = vmatprep.subr.bf16.mxu0 %v2650
    %3545 = vmatpush2.bf16.msra.mxu0 %v2649
    %3546 = vmatprep.subr.bf16.mxu0 %v2642
    %3547 = vmatpush2.bf16.msra.mxu0 %v2641
    %3548 = vmatprep.mubr.bf16.mxu0 %v646
    %3549 = vmatmul.mubr.bf16.gmra.mxu0 %v645
    %v3550 = vpop.f32.mrf.mxu0
    %v3551 = vadd.f32 %v3508, %v3550
    %v3552 = vpop.f32.mrf.mxu0
    %v3553 = vadd.f32 %v3510, %v3552
    %v3554 = vpop.f32.mrf.mxu0
    %v3555 = vadd.f32 %v3512, %v3554
    %v3556 = vpop.f32.mrf.mxu0
    %v3557 = vadd.f32 %v3514, %v3556
    %3558 = vdwg.mxu0
    %3559 = vmatprep.subr.bf16.mxu0 %v2252
    %3560 = vmatpush1.bf16.msra.mxu0 %v2251
    %3561 = vmatprep.subr.bf16.mxu0 %v2244
    %3562 = vmatpush1.bf16.msra.mxu0 %v2243
    %3563 = vmatprep.subr.bf16.mxu0 %v2236
    %3564 = vmatpush1.bf16.msra.mxu0 %v2235
    %3565 = vmatprep.subr.bf16.mxu0 %v2228
    %3566 = vmatpush1.bf16.msra.mxu0 %v2227
    %3567 = vmatprep.subr.bf16.mxu0 %v2220
    %3568 = vmatpush1.bf16.msra.mxu0 %v2219
    %3569 = vmatprep.subr.bf16.mxu0 %v2212
    %3570 = vmatpush1.bf16.msra.mxu0 %v2211
    %3571 = vmatprep.subr.bf16.mxu0 %v2204
    %3572 = vmatpush1.bf16.msra.mxu0 %v2203
    %3573 = vmatprep.subr.bf16.mxu0 %v2196
    %3574 = vmatpush1.bf16.msra.mxu0 %v2195
    %3575 = vmatprep.subr.bf16.mxu0 %v2316
    %3576 = vmatpush2.bf16.msra.mxu0 %v2315
    %3577 = vmatprep.subr.bf16.mxu0 %v2308
    %3578 = vmatpush2.bf16.msra.mxu0 %v2307
    %3579 = vmatprep.subr.bf16.mxu0 %v2300
    %3580 = vmatpush2.bf16.msra.mxu0 %v2299
    %3581 = vmatprep.subr.bf16.mxu0 %v2292
    %3582 = vmatpush2.bf16.msra.mxu0 %v2291
    %3583 = vmatprep.subr.bf16.mxu0 %v2284
    %3584 = vmatpush2.bf16.msra.mxu0 %v2283
    %3585 = vmatprep.subr.bf16.mxu0 %v2276
    %3586 = vmatpush2.bf16.msra.mxu0 %v2275
    %3587 = vmatprep.subr.bf16.mxu0 %v2268
    %3588 = vmatpush2.bf16.msra.mxu0 %v2267
    %3589 = vmatprep.subr.bf16.mxu0 %v2260
    %3590 = vmatpush2.bf16.msra.mxu0 %v2259
    %3591 = vmatprep.mubr.bf16.mxu0 %v640
    %3592 = vmatmul.mubr.bf16.gmra.mxu0 %v639
    %v3593 = vpop.f32.mrf.mxu0
    %v3594 = vadd.f32 0.0, %v3593
    %v3595 = vpop.f32.mrf.mxu0
    %v3596 = vadd.f32 0.0, %v3595
    %v3597 = vpop.f32.mrf.mxu0
    %v3598 = vadd.f32 0.0, %v3597
    %v3599 = vpop.f32.mrf.mxu0
    %v3600 = vadd.f32 0.0, %v3599
    %3601 = vdwg.mxu0
    %3602 = vmatprep.subr.bf16.mxu0 %v2380
    %3603 = vmatpush1.bf16.msra.mxu0 %v2379
    %3604 = vmatprep.subr.bf16.mxu0 %v2372
    %3605 = vmatpush1.bf16.msra.mxu0 %v2371
    %3606 = vmatprep.subr.bf16.mxu0 %v2364
    %3607 = vmatpush1.bf16.msra.mxu0 %v2363
    %3608 = vmatprep.subr.bf16.mxu0 %v2356
    %3609 = vmatpush1.bf16.msra.mxu0 %v2355
    %3610 = vmatprep.subr.bf16.mxu0 %v2348
    %3611 = vmatpush1.bf16.msra.mxu0 %v2347
    %3612 = vmatprep.subr.bf16.mxu0 %v2340
    %3613 = vmatpush1.bf16.msra.mxu0 %v2339
    %3614 = vmatprep.subr.bf16.mxu0 %v2332
    %3615 = vmatpush1.bf16.msra.mxu0 %v2331
    %3616 = vmatprep.subr.bf16.mxu0 %v2324
    %3617 = vmatpush1.bf16.msra.mxu0 %v2323
    %3618 = vmatprep.subr.bf16.mxu0 %v2444
    %3619 = vmatpush2.bf16.msra.mxu0 %v2443
    %3620 = vmatprep.subr.bf16.mxu0 %v2436
    %3621 = vmatpush2.bf16.msra.mxu0 %v2435
    %3622 = vmatprep.subr.bf16.mxu0 %v2428
    %3623 = vmatpush2.bf16.msra.mxu0 %v2427
    %3624 = vmatprep.subr.bf16.mxu0 %v2420
    %3625 = vmatpush2.bf16.msra.mxu0 %v2419
    %3626 = vmatprep.subr.bf16.mxu0 %v2412
    %3627 = vmatpush2.bf16.msra.mxu0 %v2411
    %3628 = vmatprep.subr.bf16.mxu0 %v2404
    %3629 = vmatpush2.bf16.msra.mxu0 %v2403
    %3630 = vmatprep.subr.bf16.mxu0 %v2396
    %3631 = vmatpush2.bf16.msra.mxu0 %v2395
    %3632 = vmatprep.subr.bf16.mxu0 %v2388
    %3633 = vmatpush2.bf16.msra.mxu0 %v2387
    %3634 = vmatprep.mubr.bf16.mxu0 %v642
    %3635 = vmatmul.mubr.bf16.gmra.mxu0 %v641
    %v3636 = vpop.f32.mrf.mxu0
    %v3637 = vadd.f32 %v3594, %v3636
    %v3638 = vpop.f32.mrf.mxu0
    %v3639 = vadd.f32 %v3596, %v3638
    %v3640 = vpop.f32.mrf.mxu0
    %v3641 = vadd.f32 %v3598, %v3640
    %v3642 = vpop.f32.mrf.mxu0
    %v3643 = vadd.f32 %v3600, %v3642
    %3644 = vdwg.mxu0
    %3645 = vmatprep.subr.bf16.mxu0 %v2508
    %3646 = vmatpush1.bf16.msra.mxu0 %v2507
    %3647 = vmatprep.subr.bf16.mxu0 %v2500
    %3648 = vmatpush1.bf16.msra.mxu0 %v2499
    %3649 = vmatprep.subr.bf16.mxu0 %v2492
    %3650 = vmatpush1.bf16.msra.mxu0 %v2491
    %3651 = vmatprep.subr.bf16.mxu0 %v2484
    %3652 = vmatpush1.bf16.msra.mxu0 %v2483
    %3653 = vmatprep.subr.bf16.mxu0 %v2476
    %3654 = vmatpush1.bf16.msra.mxu0 %v2475
    %3655 = vmatprep.subr.bf16.mxu0 %v2468
    %3656 = vmatpush1.bf16.msra.mxu0 %v2467
    %3657 = vmatprep.subr.bf16.mxu0 %v2460
    %3658 = vmatpush1.bf16.msra.mxu0 %v2459
    %3659 = vmatprep.subr.bf16.mxu0 %v2452
    %3660 = vmatpush1.bf16.msra.mxu0 %v2451
    %3661 = vmatprep.subr.bf16.mxu0 %v2572
    %3662 = vmatpush2.bf16.msra.mxu0 %v2571
    %3663 = vmatprep.subr.bf16.mxu0 %v2564
    %3664 = vmatpush2.bf16.msra.mxu0 %v2563
    %3665 = vmatprep.subr.bf16.mxu0 %v2556
    %3666 = vmatpush2.bf16.msra.mxu0 %v2555
    %3667 = vmatprep.subr.bf16.mxu0 %v2548
    %3668 = vmatpush2.bf16.msra.mxu0 %v2547
    %3669 = vmatprep.subr.bf16.mxu0 %v2540
    %3670 = vmatpush2.bf16.msra.mxu0 %v2539
    %3671 = vmatprep.subr.bf16.mxu0 %v2532
    %3672 = vmatpush2.bf16.msra.mxu0 %v2531
    %3673 = vmatprep.subr.bf16.mxu0 %v2524
    %3674 = vmatpush2.bf16.msra.mxu0 %v2523
    %3675 = vmatprep.subr.bf16.mxu0 %v2516
    %3676 = vmatpush2.bf16.msra.mxu0 %v2515
    %3677 = vmatprep.mubr.bf16.mxu0 %v644
    %3678 = vmatmul.mubr.bf16.gmra.mxu0 %v643
    %v3679 = vpop.f32.mrf.mxu0
    %v3680 = vadd.f32 %v3637, %v3679
    %v3681 = vpop.f32.mrf.mxu0
    %v3682 = vadd.f32 %v3639, %v3681
    %v3683 = vpop.f32.mrf.mxu0
    %v3684 = vadd.f32 %v3641, %v3683
    %v3685 = vpop.f32.mrf.mxu0
    %v3686 = vadd.f32 %v3643, %v3685
    %3687 = vdwg.mxu0
    %3688 = vmatprep.subr.bf16.mxu0 %v2636
    %3689 = vmatpush1.bf16.msra.mxu0 %v2635
    %3690 = vmatprep.subr.bf16.mxu0 %v2628
    %3691 = vmatpush1.bf16.msra.mxu0 %v2627
    %3692 = vmatprep.subr.bf16.mxu0 %v2620
    %3693 = vmatpush1.bf16.msra.mxu0 %v2619
    %3694 = vmatprep.subr.bf16.mxu0 %v2612
    %3695 = vmatpush1.bf16.msra.mxu0 %v2611
    %3696 = vmatprep.subr.bf16.mxu0 %v2604
    %3697 = vmatpush1.bf16.msra.mxu0 %v2603
    %3698 = vmatprep.subr.bf16.mxu0 %v2596
    %3699 = vmatpush1.bf16.msra.mxu0 %v2595
    %3700 = vmatprep.subr.bf16.mxu0 %v2588
    %3701 = vmatpush1.bf16.msra.mxu0 %v2587
    %3702 = vmatprep.subr.bf16.mxu0 %v2580
    %3703 = vmatpush1.bf16.msra.mxu0 %v2579
    %3704 = vmatprep.subr.bf16.mxu0 %v2700
    %3705 = vmatpush2.bf16.msra.mxu0 %v2699
    %3706 = vmatprep.subr.bf16.mxu0 %v2692
    %3707 = vmatpush2.bf16.msra.mxu0 %v2691
    %3708 = vmatprep.subr.bf16.mxu0 %v2684
    %3709 = vmatpush2.bf16.msra.mxu0 %v2683
    %3710 = vmatprep.subr.bf16.mxu0 %v2676
    %3711 = vmatpush2.bf16.msra.mxu0 %v2675
    %3712 = vmatprep.subr.bf16.mxu0 %v2668
    %3713 = vmatpush2.bf16.msra.mxu0 %v2667
    %3714 = vmatprep.subr.bf16.mxu0 %v2660
    %3715 = vmatpush2.bf16.msra.mxu0 %v2659
    %3716 = vmatprep.subr.bf16.mxu0 %v2652
    %3717 = vmatpush2.bf16.msra.mxu0 %v2651
    %3718 = vmatprep.subr.bf16.mxu0 %v2644
    %3719 = vmatpush2.bf16.msra.mxu0 %v2643
    %3720 = vmatprep.mubr.bf16.mxu0 %v646
    %3721 = vmatmul.mubr.bf16.gmra.mxu0 %v645
    %v3722 = vpop.f32.mrf.mxu0
    %v3723 = vadd.f32 %v3680, %v3722
    %v3724 = vpop.f32.mrf.mxu0
    %v3725 = vadd.f32 %v3682, %v3724
    %v3726 = vpop.f32.mrf.mxu0
    %v3727 = vadd.f32 %v3684, %v3726
    %v3728 = vpop.f32.mrf.mxu0
    %v3729 = vadd.f32 %v3686, %v3728
    %3730 = vdwg.mxu0
    %3731 = vmatprep.subr.bf16.mxu0 %v2254
    %3732 = vmatpush1.bf16.msra.mxu0 %v2253
    %3733 = vmatprep.subr.bf16.mxu0 %v2246
    %3734 = vmatpush1.bf16.msra.mxu0 %v2245
    %3735 = vmatprep.subr.bf16.mxu0 %v2238
    %3736 = vmatpush1.bf16.msra.mxu0 %v2237
    %3737 = vmatprep.subr.bf16.mxu0 %v2230
    %3738 = vmatpush1.bf16.msra.mxu0 %v2229
    %3739 = vmatprep.subr.bf16.mxu0 %v2222
    %3740 = vmatpush1.bf16.msra.mxu0 %v2221
    %3741 = vmatprep.subr.bf16.mxu0 %v2214
    %3742 = vmatpush1.bf16.msra.mxu0 %v2213
    %3743 = vmatprep.subr.bf16.mxu0 %v2206
    %3744 = vmatpush1.bf16.msra.mxu0 %v2205
    %3745 = vmatprep.subr.bf16.mxu0 %v2198
    %3746 = vmatpush1.bf16.msra.mxu0 %v2197
    %3747 = vmatprep.subr.bf16.mxu0 %v2318
    %3748 = vmatpush2.bf16.msra.mxu0 %v2317
    %3749 = vmatprep.subr.bf16.mxu0 %v2310
    %3750 = vmatpush2.bf16.msra.mxu0 %v2309
    %3751 = vmatprep.subr.bf16.mxu0 %v2302
    %3752 = vmatpush2.bf16.msra.mxu0 %v2301
    %3753 = vmatprep.subr.bf16.mxu0 %v2294
    %3754 = vmatpush2.bf16.msra.mxu0 %v2293
    %3755 = vmatprep.subr.bf16.mxu0 %v2286
    %3756 = vmatpush2.bf16.msra.mxu0 %v2285
    %3757 = vmatprep.subr.bf16.mxu0 %v2278
    %3758 = vmatpush2.bf16.msra.mxu0 %v2277
    %3759 = vmatprep.subr.bf16.mxu0 %v2270
    %3760 = vmatpush2.bf16.msra.mxu0 %v2269
    %3761 = vmatprep.subr.bf16.mxu0 %v2262
    %3762 = vmatpush2.bf16.msra.mxu0 %v2261
    %3763 = vmatprep.mubr.bf16.mxu0 %v640
    %3764 = vmatmul.mubr.bf16.gmra.mxu0 %v639
    %v3765 = vpop.f32.mrf.mxu0
    %v3766 = vadd.f32 0.0, %v3765
    %v3767 = vpop.f32.mrf.mxu0
    %v3768 = vadd.f32 0.0, %v3767
    %v3769 = vpop.f32.mrf.mxu0
    %v3770 = vadd.f32 0.0, %v3769
    %v3771 = vpop.f32.mrf.mxu0
    %v3772 = vadd.f32 0.0, %v3771
    %3773 = vdwg.mxu0
    %3774 = vmatprep.subr.bf16.mxu0 %v2382
    %3775 = vmatpush1.bf16.msra.mxu0 %v2381
    %3776 = vmatprep.subr.bf16.mxu0 %v2374
    %3777 = vmatpush1.bf16.msra.mxu0 %v2373
    %3778 = vmatprep.subr.bf16.mxu0 %v2366
    %3779 = vmatpush1.bf16.msra.mxu0 %v2365
    %3780 = vmatprep.subr.bf16.mxu0 %v2358
    %3781 = vmatpush1.bf16.msra.mxu0 %v2357
    %3782 = vmatprep.subr.bf16.mxu0 %v2350
    %3783 = vmatpush1.bf16.msra.mxu0 %v2349
    %3784 = vmatprep.subr.bf16.mxu0 %v2342
    %3785 = vmatpush1.bf16.msra.mxu0 %v2341
    %3786 = vmatprep.subr.bf16.mxu0 %v2334
    %3787 = vmatpush1.bf16.msra.mxu0 %v2333
    %3788 = vmatprep.subr.bf16.mxu0 %v2326
    %3789 = vmatpush1.bf16.msra.mxu0 %v2325
    %3790 = vmatprep.subr.bf16.mxu0 %v2446
    %3791 = vmatpush2.bf16.msra.mxu0 %v2445
    %3792 = vmatprep.subr.bf16.mxu0 %v2438
    %3793 = vmatpush2.bf16.msra.mxu0 %v2437
    %3794 = vmatprep.subr.bf16.mxu0 %v2430
    %3795 = vmatpush2.bf16.msra.mxu0 %v2429
    %3796 = vmatprep.subr.bf16.mxu0 %v2422
    %3797 = vmatpush2.bf16.msra.mxu0 %v2421
    %3798 = vmatprep.subr.bf16.mxu0 %v2414
    %3799 = vmatpush2.bf16.msra.mxu0 %v2413
    %3800 = vmatprep.subr.bf16.mxu0 %v2406
    %3801 = vmatpush2.bf16.msra.mxu0 %v2405
    %3802 = vmatprep.subr.bf16.mxu0 %v2398
    %3803 = vmatpush2.bf16.msra.mxu0 %v2397
    %3804 = vmatprep.subr.bf16.mxu0 %v2390
    %3805 = vmatpush2.bf16.msra.mxu0 %v2389
    %3806 = vmatprep.mubr.bf16.mxu0 %v642
    %3807 = vmatmul.mubr.bf16.gmra.mxu0 %v641
    %v3808 = vpop.f32.mrf.mxu0
    %v3809 = vadd.f32 %v3766, %v3808
    %v3810 = vpop.f32.mrf.mxu0
    %v3811 = vadd.f32 %v3768, %v3810
    %v3812 = vpop.f32.mrf.mxu0
    %v3813 = vadd.f32 %v3770, %v3812
    %v3814 = vpop.f32.mrf.mxu0
    %v3815 = vadd.f32 %v3772, %v3814
    %3816 = vdwg.mxu0
    %3817 = vmatprep.subr.bf16.mxu0 %v2510
    %3818 = vmatpush1.bf16.msra.mxu0 %v2509
    %3819 = vmatprep.subr.bf16.mxu0 %v2502
    %3820 = vmatpush1.bf16.msra.mxu0 %v2501
    %3821 = vmatprep.subr.bf16.mxu0 %v2494
    %3822 = vmatpush1.bf16.msra.mxu0 %v2493
    %3823 = vmatprep.subr.bf16.mxu0 %v2486
    %3824 = vmatpush1.bf16.msra.mxu0 %v2485
    %3825 = vmatprep.subr.bf16.mxu0 %v2478
    %3826 = vmatpush1.bf16.msra.mxu0 %v2477
    %3827 = vmatprep.subr.bf16.mxu0 %v2470
    %3828 = vmatpush1.bf16.msra.mxu0 %v2469
    %3829 = vmatprep.subr.bf16.mxu0 %v2462
    %3830 = vmatpush1.bf16.msra.mxu0 %v2461
    %3831 = vmatprep.subr.bf16.mxu0 %v2454
    %3832 = vmatpush1.bf16.msra.mxu0 %v2453
    %3833 = vmatprep.subr.bf16.mxu0 %v2574
    %3834 = vmatpush2.bf16.msra.mxu0 %v2573
    %3835 = vmatprep.subr.bf16.mxu0 %v2566
    %3836 = vmatpush2.bf16.msra.mxu0 %v2565
    %3837 = vmatprep.subr.bf16.mxu0 %v2558
    %3838 = vmatpush2.bf16.msra.mxu0 %v2557
    %3839 = vmatprep.subr.bf16.mxu0 %v2550
    %3840 = vmatpush2.bf16.msra.mxu0 %v2549
    %3841 = vmatprep.subr.bf16.mxu0 %v2542
    %3842 = vmatpush2.bf16.msra.mxu0 %v2541
    %3843 = vmatprep.subr.bf16.mxu0 %v2534
    %3844 = vmatpush2.bf16.msra.mxu0 %v2533
    %3845 = vmatprep.subr.bf16.mxu0 %v2526
    %3846 = vmatpush2.bf16.msra.mxu0 %v2525
    %3847 = vmatprep.subr.bf16.mxu0 %v2518
    %3848 = vmatpush2.bf16.msra.mxu0 %v2517
    %3849 = vmatprep.mubr.bf16.mxu0 %v644
    %3850 = vmatmul.mubr.bf16.gmra.mxu0 %v643
    %v3851 = vpop.f32.mrf.mxu0
    %v3852 = vadd.f32 %v3809, %v3851
    %v3853 = vpop.f32.mrf.mxu0
    %v3854 = vadd.f32 %v3811, %v3853
    %v3855 = vpop.f32.mrf.mxu0
    %v3856 = vadd.f32 %v3813, %v3855
    %v3857 = vpop.f32.mrf.mxu0
    %v3858 = vadd.f32 %v3815, %v3857
    %3859 = vdwg.mxu0
    %3860 = vmatprep.subr.bf16.mxu0 %v2638
    %3861 = vmatpush1.bf16.msra.mxu0 %v2637
    %3862 = vmatprep.subr.bf16.mxu0 %v2630
    %3863 = vmatpush1.bf16.msra.mxu0 %v2629
    %3864 = vmatprep.subr.bf16.mxu0 %v2622
    %3865 = vmatpush1.bf16.msra.mxu0 %v2621
    %3866 = vmatprep.subr.bf16.mxu0 %v2614
    %3867 = vmatpush1.bf16.msra.mxu0 %v2613
    %3868 = vmatprep.subr.bf16.mxu0 %v2606
    %3869 = vmatpush1.bf16.msra.mxu0 %v2605
    %3870 = vmatprep.subr.bf16.mxu0 %v2598
    %3871 = vmatpush1.bf16.msra.mxu0 %v2597
    %3872 = vmatprep.subr.bf16.mxu0 %v2590
    %3873 = vmatpush1.bf16.msra.mxu0 %v2589
    %3874 = vmatprep.subr.bf16.mxu0 %v2582
    %3875 = vmatpush1.bf16.msra.mxu0 %v2581
    %3876 = vmatprep.subr.bf16.mxu0 %v2702
    %3877 = vmatpush2.bf16.msra.mxu0 %v2701
    %3878 = vmatprep.subr.bf16.mxu0 %v2694
    %3879 = vmatpush2.bf16.msra.mxu0 %v2693
    %3880 = vmatprep.subr.bf16.mxu0 %v2686
    %3881 = vmatpush2.bf16.msra.mxu0 %v2685
    %3882 = vmatprep.subr.bf16.mxu0 %v2678
    %3883 = vmatpush2.bf16.msra.mxu0 %v2677
    %3884 = vmatprep.subr.bf16.mxu0 %v2670
    %3885 = vmatpush2.bf16.msra.mxu0 %v2669
    %3886 = vmatprep.subr.bf16.mxu0 %v2662
    %3887 = vmatpush2.bf16.msra.mxu0 %v2661
    %3888 = vmatprep.subr.bf16.mxu0 %v2654
    %3889 = vmatpush2.bf16.msra.mxu0 %v2653
    %3890 = vmatprep.subr.bf16.mxu0 %v2646
    %3891 = vmatpush2.bf16.msra.mxu0 %v2645
    %3892 = vmatprep.mubr.bf16.mxu0 %v646
    %3893 = vmatmul.mubr.bf16.gmra.mxu0 %v645
    %v3894 = vpop.f32.mrf.mxu0
    %v3895 = vadd.f32 %v3852, %v3894
    %v3896 = vpop.f32.mrf.mxu0
    %v3897 = vadd.f32 %v3854, %v3896
    %v3898 = vpop.f32.mrf.mxu0
    %v3899 = vadd.f32 %v3856, %v3898
    %v3900 = vpop.f32.mrf.mxu0
    %v3901 = vadd.f32 %v3858, %v3900
    %3902 = vdwg.mxu0
    %v3903 = vadd.f32 %v79, %v3379
    %v3904 = vadd.f32 %v80, %v3381
    %v3905 = vadd.f32 %v81, %v3551
    %v3906 = vadd.f32 %v82, %v3553
    %v3907 = vadd.f32 %v83, %v3723
    %v3908 = vadd.f32 %v84, %v3725
    %v3909 = vadd.f32 %v85, %v3895
    %v3910 = vadd.f32 %v86, %v3897
    %v3911 = vadd.f32 %v87, %v3383
    %v3912 = vadd.f32 %v88, %v3385
    %v3913 = vadd.f32 %v89, %v3555
    %v3914 = vadd.f32 %v90, %v3557
    %v3915 = vadd.f32 %v91, %v3727
    %v3916 = vadd.f32 %v92, %v3729
    %v3917 = vadd.f32 %v93, %v3899
    %v3918 = vadd.f32 %v94, %v3901
    %3919 = vst [vmem:[%s5] sm:$0xff] %v3903
    %3920 = vst [vmem:[%s5 + $0x8] sm:$0xff] %v3904
    %3921 = vst [vmem:[%s5 + $0x10] sm:$0xff] %v3905
    %3922 = vst [vmem:[%s5 + $0x18] sm:$0xff] %v3906
    %3923 = vst [vmem:[%s5 + $0x20] sm:$0xff] %v3907
    %3924 = vst [vmem:[%s5 + $0x28] sm:$0xff] %v3908
    %3925 = vst [vmem:[%s5 + $0x30] sm:$0xff] %v3909
    %3926 = vst [vmem:[%s5 + $0x38] sm:$0xff] %v3910
    %3927 = vst [vmem:[%s5 + $0x40] sm:$0xff] %v3911
    %3928 = vst [vmem:[%s5 + $0x48] sm:$0xff] %v3912
    %3929 = vst [vmem:[%s5 + $0x50] sm:$0xff] %v3913
    %3930 = vst [vmem:[%s5 + $0x58] sm:$0xff] %v3914
    %3931 = vst [vmem:[%s5 + $0x60] sm:$0xff] %v3915
    %3932 = vst [vmem:[%s5 + $0x68] sm:$0xff] %v3916
    %3933 = vst [vmem:[%s5 + $0x70] sm:$0xff] %v3917
    %3934 = vst [vmem:[%s5 + $0x78] sm:$0xff] %v3918
    // Predicated region
    $region38: #{quintuplet_forward.1} parent=1 // pred_check
      %p3935 = pneg %p59
    $region39: #{quintuplet_forward.1} parent=1 // pred_check_branch
      %3937 = sbr.rel (%p3935) target = $region41
    $region40: #{quintuplet_forward.1} parent=1 // pred_region
      %v3938 = vld [vmem:[%s5] sm:$0xff]
      %v3939 = vld [vmem:[%s5 + $0x8] sm:$0xff]
      %v3940 = vld [vmem:[%s5 + $0x10] sm:$0xff]
      %v3941 = vld [vmem:[%s5 + $0x18] sm:$0xff]
      %v3942 = vld [vmem:[%s5 + $0x20] sm:$0xff]
      %v3943 = vld [vmem:[%s5 + $0x28] sm:$0xff]
      %v3944 = vld [vmem:[%s5 + $0x30] sm:$0xff]
      %v3945 = vld [vmem:[%s5 + $0x38] sm:$0xff]
      %v3946 = vld [vmem:[%s5 + $0x40] sm:$0xff]
      %v3947 = vld [vmem:[%s5 + $0x48] sm:$0xff]
      %v3948 = vld [vmem:[%s5 + $0x50] sm:$0xff]
      %v3949 = vld [vmem:[%s5 + $0x58] sm:$0xff]
      %v3950 = vld [vmem:[%s5 + $0x60] sm:$0xff]
      %v3951 = vld [vmem:[%s5 + $0x68] sm:$0xff]
      %v3952 = vld [vmem:[%s5 + $0x70] sm:$0xff]
      %v3953 = vld [vmem:[%s5 + $0x78] sm:$0xff]
      %v3954 = vld [vmem:[#allocation4] sm:$0xff]
      %v3956 = vlaneseq
      %v3957 = vshrl.u32 %v3956, 7
      %v3958 = vsub.s32 0, %v3957
      %v3959 = vrot.slane %v3954, %v3958
      %v3960 = vlaneseq
      %v3961 = vshrl.u32 %v3960, 7
      %v3962 = vsub.s32 1, %v3961
      %v3963 = vrot.slane %v3954, %v3962
      %v3964 = vlaneseq
      %v3965 = vshrl.u32 %v3964, 7
      %v3966 = vsub.s32 2, %v3965
      %v3967 = vrot.slane %v3954, %v3966
      %v3968 = vlaneseq
      %v3969 = vshrl.u32 %v3968, 7
      %v3970 = vsub.s32 3, %v3969
      %v3971 = vrot.slane %v3954, %v3970
      %v3972 = vlaneseq
      %v3973 = vshrl.u32 %v3972, 7
      %v3974 = vsub.s32 4, %v3973
      %v3975 = vrot.slane %v3954, %v3974
      %v3976 = vlaneseq
      %v3977 = vshrl.u32 %v3976, 7
      %v3978 = vsub.s32 5, %v3977
      %v3979 = vrot.slane %v3954, %v3978
      %v3980 = vlaneseq
      %v3981 = vshrl.u32 %v3980, 7
      %v3982 = vsub.s32 6, %v3981
      %v3983 = vrot.slane %v3954, %v3982
      %v3984 = vlaneseq
      %v3985 = vshrl.u32 %v3984, 7
      %v3986 = vsub.s32 7, %v3985
      %v3987 = vrot.slane %v3954, %v3986
      %v3996 = vadd.f32 %v3938, %v3959
      %v3997 = vadd.f32 %v3939, %v3963
      %v3998 = vadd.f32 %v3940, %v3967
      %v3999 = vadd.f32 %v3941, %v3971
      %v4000 = vadd.f32 %v3942, %v3975
      %v4001 = vadd.f32 %v3943, %v3979
      %v4002 = vadd.f32 %v3944, %v3983
      %v4003 = vadd.f32 %v3945, %v3987
      %v4004 = vadd.f32 %v3946, %v3959
      %v4005 = vadd.f32 %v3947, %v3963
      %v4006 = vadd.f32 %v3948, %v3967
      %v4007 = vadd.f32 %v3949, %v3971
      %v4008 = vadd.f32 %v3950, %v3975
      %v4009 = vadd.f32 %v3951, %v3979
      %v4010 = vadd.f32 %v3952, %v3983
      %v4011 = vadd.f32 %v3953, %v3987
      %v4012 = vmax.f32 %v3996, 0.0
      %v4013 = vmax.f32 %v3997, 0.0
      %v4014 = vmax.f32 %v3998, 0.0
      %v4015 = vmax.f32 %v3999, 0.0
      %v4016 = vmax.f32 %v4000, 0.0
      %v4017 = vmax.f32 %v4001, 0.0
      %v4018 = vmax.f32 %v4002, 0.0
      %v4019 = vmax.f32 %v4003, 0.0
      %v4020 = vmax.f32 %v4004, 0.0
      %v4021 = vmax.f32 %v4005, 0.0
      %v4022 = vmax.f32 %v4006, 0.0
      %v4023 = vmax.f32 %v4007, 0.0
      %v4024 = vmax.f32 %v4008, 0.0
      %v4025 = vmax.f32 %v4009, 0.0
      %v4026 = vmax.f32 %v4010, 0.0
      %v4027 = vmax.f32 %v4011, 0.0
      %4028 = vst [vmem:[%s5] sm:$0xff] %v4012
      %4029 = vst [vmem:[%s5 + $0x8] sm:$0xff] %v4013
      %4030 = vst [vmem:[%s5 + $0x10] sm:$0xff] %v4014
      %4031 = vst [vmem:[%s5 + $0x18] sm:$0xff] %v4015
      %4032 = vst [vmem:[%s5 + $0x20] sm:$0xff] %v4016
      %4033 = vst [vmem:[%s5 + $0x28] sm:$0xff] %v4017
      %4034 = vst [vmem:[%s5 + $0x30] sm:$0xff] %v4018
      %4035 = vst [vmem:[%s5 + $0x38] sm:$0xff] %v4019
      %4036 = vst [vmem:[%s5 + $0x40] sm:$0xff] %v4020
      %4037 = vst [vmem:[%s5 + $0x48] sm:$0xff] %v4021
      %4038 = vst [vmem:[%s5 + $0x50] sm:$0xff] %v4022
      %4039 = vst [vmem:[%s5 + $0x58] sm:$0xff] %v4023
      %4040 = vst [vmem:[%s5 + $0x60] sm:$0xff] %v4024
      %4041 = vst [vmem:[%s5 + $0x68] sm:$0xff] %v4025
      %4042 = vst [vmem:[%s5 + $0x70] sm:$0xff] %v4026
      %4043 = vst [vmem:[%s5 + $0x78] sm:$0xff] %v4027
      %v4044 = vld [vmem:[%s3] sm:$0xff]
      %v4045 = vld [vmem:[%s3 + $0x8] sm:$0xff]
      %v4046 = vld [vmem:[%s3 + $0x10] sm:$0xff]
      %v4047 = vld [vmem:[%s3 + $0x18] sm:$0xff]
      %v4048 = vld [vmem:[%s3 + $0x20] sm:$0xff]
      %v4049 = vld [vmem:[%s3 + $0x28] sm:$0xff]
      %v4050 = vld [vmem:[%s3 + $0x30] sm:$0xff]
      %v4051 = vld [vmem:[%s3 + $0x38] sm:$0xff]
      %v4052 = vld [vmem:[%s3 + $0x40] sm:$0xff]
      %v4053 = vld [vmem:[%s3 + $0x48] sm:$0xff]
      %v4054 = vld [vmem:[%s3 + $0x50] sm:$0xff]
      %v4055 = vld [vmem:[%s3 + $0x58] sm:$0xff]
      %v4056 = vld [vmem:[%s3 + $0x60] sm:$0xff]
      %v4057 = vld [vmem:[%s3 + $0x68] sm:$0xff]
      %v4058 = vld [vmem:[%s3 + $0x70] sm:$0xff]
      %v4059 = vld [vmem:[%s3 + $0x78] sm:$0xff]
      %v4060 = vld [vmem:[%s3 + $0x80] sm:$0xff]
      %v4061 = vld [vmem:[%s3 + $0x88] sm:$0xff]
      %v4062 = vld [vmem:[%s3 + $0x90] sm:$0xff]
      %v4063 = vld [vmem:[%s3 + $0x98] sm:$0xff]
      %v4064 = vld [vmem:[%s3 + $0xa0] sm:$0xff]
      %v4065 = vld [vmem:[%s3 + $0xa8] sm:$0xff]
      %v4066 = vld [vmem:[%s3 + $0xb0] sm:$0xff]
      %v4067 = vld [vmem:[%s3 + $0xb8] sm:$0xff]
      %v4068 = vld [vmem:[%s3 + $0xc0] sm:$0xff]
      %v4069 = vld [vmem:[%s3 + $0xc8] sm:$0xff]
      %v4070 = vld [vmem:[%s3 + $0xd0] sm:$0xff]
      %v4071 = vld [vmem:[%s3 + $0xd8] sm:$0xff]
      %v4072 = vld [vmem:[%s3 + $0xe0] sm:$0xff]
      %v4073 = vld [vmem:[%s3 + $0xe8] sm:$0xff]
      %v4074 = vld [vmem:[%s3 + $0xf0] sm:$0xff]
      %v4075 = vld [vmem:[%s3 + $0xf8] sm:$0xff]
      %v4076 = vld [vmem:[%s3 + $0x100] sm:$0xff]
      %v4077 = vld [vmem:[%s3 + $0x108] sm:$0xff]
      %v4078 = vld [vmem:[%s3 + $0x110] sm:$0xff]
      %v4079 = vld [vmem:[%s3 + $0x118] sm:$0xff]
      %v4080 = vld [vmem:[%s3 + $0x120] sm:$0xff]
      %v4081 = vld [vmem:[%s3 + $0x128] sm:$0xff]
      %v4082 = vld [vmem:[%s3 + $0x130] sm:$0xff]
      %v4083 = vld [vmem:[%s3 + $0x138] sm:$0xff]
      %v4084 = vld [vmem:[%s3 + $0x140] sm:$0xff]
      %v4085 = vld [vmem:[%s3 + $0x148] sm:$0xff]
      %v4086 = vld [vmem:[%s3 + $0x150] sm:$0xff]
      %v4087 = vld [vmem:[%s3 + $0x158] sm:$0xff]
      %v4088 = vld [vmem:[%s3 + $0x160] sm:$0xff]
      %v4089 = vld [vmem:[%s3 + $0x168] sm:$0xff]
      %v4090 = vld [vmem:[%s3 + $0x170] sm:$0xff]
      %v4091 = vld [vmem:[%s3 + $0x178] sm:$0xff]
      %v4092 = vld [vmem:[%s3 + $0x180] sm:$0xff]
      %v4093 = vld [vmem:[%s3 + $0x188] sm:$0xff]
      %v4094 = vld [vmem:[%s3 + $0x190] sm:$0xff]
      %v4095 = vld [vmem:[%s3 + $0x198] sm:$0xff]
      %v4096 = vld [vmem:[%s3 + $0x1a0] sm:$0xff]
      %v4097 = vld [vmem:[%s3 + $0x1a8] sm:$0xff]
      %v4098 = vld [vmem:[%s3 + $0x1b0] sm:$0xff]
      %v4099 = vld [vmem:[%s3 + $0x1b8] sm:$0xff]
      %v4100 = vld [vmem:[%s3 + $0x1c0] sm:$0xff]
      %v4101 = vld [vmem:[%s3 + $0x1c8] sm:$0xff]
      %v4102 = vld [vmem:[%s3 + $0x1d0] sm:$0xff]
      %v4103 = vld [vmem:[%s3 + $0x1d8] sm:$0xff]
      %v4104 = vld [vmem:[%s3 + $0x1e0] sm:$0xff]
      %v4105 = vld [vmem:[%s3 + $0x1e8] sm:$0xff]
      %v4106 = vld [vmem:[%s3 + $0x1f0] sm:$0xff]
      %v4107 = vld [vmem:[%s3 + $0x1f8] sm:$0xff]
      %v4108 = vld [vmem:[%s3 + $0x200] sm:$0xff]
      %v4109 = vld [vmem:[%s3 + $0x208] sm:$0xff]
      %v4110 = vld [vmem:[%s3 + $0x210] sm:$0xff]
      %v4111 = vld [vmem:[%s3 + $0x218] sm:$0xff]
      %v4112 = vld [vmem:[%s3 + $0x220] sm:$0xff]
      %v4113 = vld [vmem:[%s3 + $0x228] sm:$0xff]
      %v4114 = vld [vmem:[%s3 + $0x230] sm:$0xff]
      %v4115 = vld [vmem:[%s3 + $0x238] sm:$0xff]
      %v4116 = vld [vmem:[%s3 + $0x240] sm:$0xff]
      %v4117 = vld [vmem:[%s3 + $0x248] sm:$0xff]
      %v4118 = vld [vmem:[%s3 + $0x250] sm:$0xff]
      %v4119 = vld [vmem:[%s3 + $0x258] sm:$0xff]
      %v4120 = vld [vmem:[%s3 + $0x260] sm:$0xff]
      %v4121 = vld [vmem:[%s3 + $0x268] sm:$0xff]
      %v4122 = vld [vmem:[%s3 + $0x270] sm:$0xff]
      %v4123 = vld [vmem:[%s3 + $0x278] sm:$0xff]
      %v4124 = vld [vmem:[%s3 + $0x280] sm:$0xff]
      %v4125 = vld [vmem:[%s3 + $0x288] sm:$0xff]
      %v4126 = vld [vmem:[%s3 + $0x290] sm:$0xff]
      %v4127 = vld [vmem:[%s3 + $0x298] sm:$0xff]
      %v4128 = vld [vmem:[%s3 + $0x2a0] sm:$0xff]
      %v4129 = vld [vmem:[%s3 + $0x2a8] sm:$0xff]
      %v4130 = vld [vmem:[%s3 + $0x2b0] sm:$0xff]
      %v4131 = vld [vmem:[%s3 + $0x2b8] sm:$0xff]
      %v4132 = vld [vmem:[%s3 + $0x2c0] sm:$0xff]
      %v4133 = vld [vmem:[%s3 + $0x2c8] sm:$0xff]
      %v4134 = vld [vmem:[%s3 + $0x2d0] sm:$0xff]
      %v4135 = vld [vmem:[%s3 + $0x2d8] sm:$0xff]
      %v4136 = vld [vmem:[%s3 + $0x2e0] sm:$0xff]
      %v4137 = vld [vmem:[%s3 + $0x2e8] sm:$0xff]
      %v4138 = vld [vmem:[%s3 + $0x2f0] sm:$0xff]
      %v4139 = vld [vmem:[%s3 + $0x2f8] sm:$0xff]
      %v4140 = vld [vmem:[%s3 + $0x300] sm:$0xff]
      %v4141 = vld [vmem:[%s3 + $0x308] sm:$0xff]
      %v4142 = vld [vmem:[%s3 + $0x310] sm:$0xff]
      %v4143 = vld [vmem:[%s3 + $0x318] sm:$0xff]
      %v4144 = vld [vmem:[%s3 + $0x320] sm:$0xff]
      %v4145 = vld [vmem:[%s3 + $0x328] sm:$0xff]
      %v4146 = vld [vmem:[%s3 + $0x330] sm:$0xff]
      %v4147 = vld [vmem:[%s3 + $0x338] sm:$0xff]
      %v4148 = vld [vmem:[%s3 + $0x340] sm:$0xff]
      %v4149 = vld [vmem:[%s3 + $0x348] sm:$0xff]
      %v4150 = vld [vmem:[%s3 + $0x350] sm:$0xff]
      %v4151 = vld [vmem:[%s3 + $0x358] sm:$0xff]
      %v4152 = vld [vmem:[%s3 + $0x360] sm:$0xff]
      %v4153 = vld [vmem:[%s3 + $0x368] sm:$0xff]
      %v4154 = vld [vmem:[%s3 + $0x370] sm:$0xff]
      %v4155 = vld [vmem:[%s3 + $0x378] sm:$0xff]
      %v4156 = vld [vmem:[%s3 + $0x380] sm:$0xff]
      %v4157 = vld [vmem:[%s3 + $0x388] sm:$0xff]
      %v4158 = vld [vmem:[%s3 + $0x390] sm:$0xff]
      %v4159 = vld [vmem:[%s3 + $0x398] sm:$0xff]
      %v4160 = vld [vmem:[%s3 + $0x3a0] sm:$0xff]
      %v4161 = vld [vmem:[%s3 + $0x3a8] sm:$0xff]
      %v4162 = vld [vmem:[%s3 + $0x3b0] sm:$0xff]
      %v4163 = vld [vmem:[%s3 + $0x3b8] sm:$0xff]
      %v4164 = vld [vmem:[%s3 + $0x3c0] sm:$0xff]
      %v4165 = vld [vmem:[%s3 + $0x3c8] sm:$0xff]
      %v4166 = vld [vmem:[%s3 + $0x3d0] sm:$0xff]
      %v4167 = vld [vmem:[%s3 + $0x3d8] sm:$0xff]
      %v4168 = vld [vmem:[%s3 + $0x3e0] sm:$0xff]
      %v4169 = vld [vmem:[%s3 + $0x3e8] sm:$0xff]
      %v4170 = vld [vmem:[%s3 + $0x3f0] sm:$0xff]
      %v4171 = vld [vmem:[%s3 + $0x3f8] sm:$0xff]
      %v4172 = vld [vmem:[#allocation6] sm:$0x1]
      %v4174 = vlaneseq
      %v4175 = vshrl.u32 %v4174, 7
      %v4176 = vsub.s32 0, %v4175
      %v4177 = vrot.slane %v4172, %v4176
      %4179 = vmatprep.subr.mxu0 0.0
      %4180 = vmatpush1.msra.mxu0 %v4059
      %4181 = vmatprep.subr.mxu0 0.0
      %4182 = vmatpush1.msra.mxu0 %v4058
      %4183 = vmatprep.subr.mxu0 0.0
      %4184 = vmatpush1.msra.mxu0 %v4057
      %4185 = vmatprep.subr.mxu0 0.0
      %4186 = vmatpush1.msra.mxu0 %v4056
      %4187 = vmatprep.subr.mxu0 0.0
      %4188 = vmatpush1.msra.mxu0 %v4055
      %4189 = vmatprep.subr.mxu0 0.0
      %4190 = vmatpush1.msra.mxu0 %v4054
      %4191 = vmatprep.subr.mxu0 0.0
      %4192 = vmatpush1.msra.mxu0 %v4053
      %4193 = vmatprep.subr.mxu0 0.0
      %4194 = vmatpush1.msra.mxu0 %v4052
      %4195 = vmatprep.subr.mxu0 0.0
      %4196 = vmatpush1.msra.mxu0 %v4051
      %4197 = vmatprep.subr.mxu0 0.0
      %4198 = vmatpush1.msra.mxu0 %v4050
      %4199 = vmatprep.subr.mxu0 0.0
      %4200 = vmatpush1.msra.mxu0 %v4049
      %4201 = vmatprep.subr.mxu0 0.0
      %4202 = vmatpush1.msra.mxu0 %v4048
      %4203 = vmatprep.subr.mxu0 0.0
      %4204 = vmatpush1.msra.mxu0 %v4047
      %4205 = vmatprep.subr.mxu0 0.0
      %4206 = vmatpush1.msra.mxu0 %v4046
      %4207 = vmatprep.subr.mxu0 0.0
      %4208 = vmatpush1.msra.mxu0 %v4045
      %4209 = vmatprep.subr.mxu0 0.0
      %4210 = vmatpush1.msra.mxu0 %v4044
      %4211 = vmatprep.subr.mxu0 0.0
      %4212 = vmatpush2.msra.mxu0 %v4075
      %4213 = vmatprep.subr.mxu0 0.0
      %4214 = vmatpush2.msra.mxu0 %v4074
      %4215 = vmatprep.subr.mxu0 0.0
      %4216 = vmatpush2.msra.mxu0 %v4073
      %4217 = vmatprep.subr.mxu0 0.0
      %4218 = vmatpush2.msra.mxu0 %v4072
      %4219 = vmatprep.subr.mxu0 0.0
      %4220 = vmatpush2.msra.mxu0 %v4071
      %4221 = vmatprep.subr.mxu0 0.0
      %4222 = vmatpush2.msra.mxu0 %v4070
      %4223 = vmatprep.subr.mxu0 0.0
      %4224 = vmatpush2.msra.mxu0 %v4069
      %4225 = vmatprep.subr.mxu0 0.0
      %4226 = vmatpush2.msra.mxu0 %v4068
      %4227 = vmatprep.subr.mxu0 0.0
      %4228 = vmatpush2.msra.mxu0 %v4067
      %4229 = vmatprep.subr.mxu0 0.0
      %4230 = vmatpush2.msra.mxu0 %v4066
      %4231 = vmatprep.subr.mxu0 0.0
      %4232 = vmatpush2.msra.mxu0 %v4065
      %4233 = vmatprep.subr.mxu0 0.0
      %4234 = vmatpush2.msra.mxu0 %v4064
      %4235 = vmatprep.subr.mxu0 0.0
      %4236 = vmatpush2.msra.mxu0 %v4063
      %4237 = vmatprep.subr.mxu0 0.0
      %4238 = vmatpush2.msra.mxu0 %v4062
      %4239 = vmatprep.subr.mxu0 0.0
      %4240 = vmatpush2.msra.mxu0 %v4061
      %4241 = vmatprep.subr.mxu0 0.0
      %4242 = vmatpush2.msra.mxu0 %v4060
      %4243 = vmatprep.mubr.f32.mxu0 %v4013
      %4244 = vmatmul.mubr.f32.gmra.mxu0 %v4012
      %v4245 = vpop.f32.mrf.mxu0
      %v4246 = vadd.f32 %v4177, %v4245
      %v4247 = vpop.f32.mrf.mxu0
      %4248 = vmatprep.mubr.f32.mxu0 %v4021
      %4249 = vmatmul.mubr.f32.gmra.mxu0 %v4020
      %v4250 = vpop.f32.mrf.mxu0
      %v4251 = vadd.f32 %v4177, %v4250
      %v4252 = vpop.f32.mrf.mxu0
      %4253 = vdwg.mxu0
      %4254 = vmatprep.subr.mxu0 0.0
      %4255 = vmatpush1.msra.mxu0 %v4091
      %4256 = vmatprep.subr.mxu0 0.0
      %4257 = vmatpush1.msra.mxu0 %v4090
      %4258 = vmatprep.subr.mxu0 0.0
      %4259 = vmatpush1.msra.mxu0 %v4089
      %4260 = vmatprep.subr.mxu0 0.0
      %4261 = vmatpush1.msra.mxu0 %v4088
      %4262 = vmatprep.subr.mxu0 0.0
      %4263 = vmatpush1.msra.mxu0 %v4087
      %4264 = vmatprep.subr.mxu0 0.0
      %4265 = vmatpush1.msra.mxu0 %v4086
      %4266 = vmatprep.subr.mxu0 0.0
      %4267 = vmatpush1.msra.mxu0 %v4085
      %4268 = vmatprep.subr.mxu0 0.0
      %4269 = vmatpush1.msra.mxu0 %v4084
      %4270 = vmatprep.subr.mxu0 0.0
      %4271 = vmatpush1.msra.mxu0 %v4083
      %4272 = vmatprep.subr.mxu0 0.0
      %4273 = vmatpush1.msra.mxu0 %v4082
      %4274 = vmatprep.subr.mxu0 0.0
      %4275 = vmatpush1.msra.mxu0 %v4081
      %4276 = vmatprep.subr.mxu0 0.0
      %4277 = vmatpush1.msra.mxu0 %v4080
      %4278 = vmatprep.subr.mxu0 0.0
      %4279 = vmatpush1.msra.mxu0 %v4079
      %4280 = vmatprep.subr.mxu0 0.0
      %4281 = vmatpush1.msra.mxu0 %v4078
      %4282 = vmatprep.subr.mxu0 0.0
      %4283 = vmatpush1.msra.mxu0 %v4077
      %4284 = vmatprep.subr.mxu0 0.0
      %4285 = vmatpush1.msra.mxu0 %v4076
      %4286 = vmatprep.subr.mxu0 0.0
      %4287 = vmatpush2.msra.mxu0 %v4107
      %4288 = vmatprep.subr.mxu0 0.0
      %4289 = vmatpush2.msra.mxu0 %v4106
      %4290 = vmatprep.subr.mxu0 0.0
      %4291 = vmatpush2.msra.mxu0 %v4105
      %4292 = vmatprep.subr.mxu0 0.0
      %4293 = vmatpush2.msra.mxu0 %v4104
      %4294 = vmatprep.subr.mxu0 0.0
      %4295 = vmatpush2.msra.mxu0 %v4103
      %4296 = vmatprep.subr.mxu0 0.0
      %4297 = vmatpush2.msra.mxu0 %v4102
      %4298 = vmatprep.subr.mxu0 0.0
      %4299 = vmatpush2.msra.mxu0 %v4101
      %4300 = vmatprep.subr.mxu0 0.0
      %4301 = vmatpush2.msra.mxu0 %v4100
      %4302 = vmatprep.subr.mxu0 0.0
      %4303 = vmatpush2.msra.mxu0 %v4099
      %4304 = vmatprep.subr.mxu0 0.0
      %4305 = vmatpush2.msra.mxu0 %v4098
      %4306 = vmatprep.subr.mxu0 0.0
      %4307 = vmatpush2.msra.mxu0 %v4097
      %4308 = vmatprep.subr.mxu0 0.0
      %4309 = vmatpush2.msra.mxu0 %v4096
      %4310 = vmatprep.subr.mxu0 0.0
      %4311 = vmatpush2.msra.mxu0 %v4095
      %4312 = vmatprep.subr.mxu0 0.0
      %4313 = vmatpush2.msra.mxu0 %v4094
      %4314 = vmatprep.subr.mxu0 0.0
      %4315 = vmatpush2.msra.mxu0 %v4093
      %4316 = vmatprep.subr.mxu0 0.0
      %4317 = vmatpush2.msra.mxu0 %v4092
      %4318 = vmatprep.mubr.f32.mxu0 %v4015
      %4319 = vmatmul.mubr.f32.gmra.mxu0 %v4014
      %v4320 = vpop.f32.mrf.mxu0
      %v4321 = vadd.f32 %v4246, %v4320
      %v4322 = vpop.f32.mrf.mxu0
      %4323 = vmatprep.mubr.f32.mxu0 %v4023
      %4324 = vmatmul.mubr.f32.gmra.mxu0 %v4022
      %v4325 = vpop.f32.mrf.mxu0
      %v4326 = vadd.f32 %v4251, %v4325
      %v4327 = vpop.f32.mrf.mxu0
      %4328 = vdwg.mxu0
      %4329 = vmatprep.subr.mxu0 0.0
      %4330 = vmatpush1.msra.mxu0 %v4123
      %4331 = vmatprep.subr.mxu0 0.0
      %4332 = vmatpush1.msra.mxu0 %v4122
      %4333 = vmatprep.subr.mxu0 0.0
      %4334 = vmatpush1.msra.mxu0 %v4121
      %4335 = vmatprep.subr.mxu0 0.0
      %4336 = vmatpush1.msra.mxu0 %v4120
      %4337 = vmatprep.subr.mxu0 0.0
      %4338 = vmatpush1.msra.mxu0 %v4119
      %4339 = vmatprep.subr.mxu0 0.0
      %4340 = vmatpush1.msra.mxu0 %v4118
      %4341 = vmatprep.subr.mxu0 0.0
      %4342 = vmatpush1.msra.mxu0 %v4117
      %4343 = vmatprep.subr.mxu0 0.0
      %4344 = vmatpush1.msra.mxu0 %v4116
      %4345 = vmatprep.subr.mxu0 0.0
      %4346 = vmatpush1.msra.mxu0 %v4115
      %4347 = vmatprep.subr.mxu0 0.0
      %4348 = vmatpush1.msra.mxu0 %v4114
      %4349 = vmatprep.subr.mxu0 0.0
      %4350 = vmatpush1.msra.mxu0 %v4113
      %4351 = vmatprep.subr.mxu0 0.0
      %4352 = vmatpush1.msra.mxu0 %v4112
      %4353 = vmatprep.subr.mxu0 0.0
      %4354 = vmatpush1.msra.mxu0 %v4111
      %4355 = vmatprep.subr.mxu0 0.0
      %4356 = vmatpush1.msra.mxu0 %v4110
      %4357 = vmatprep.subr.mxu0 0.0
      %4358 = vmatpush1.msra.mxu0 %v4109
      %4359 = vmatprep.subr.mxu0 0.0
      %4360 = vmatpush1.msra.mxu0 %v4108
      %4361 = vmatprep.subr.mxu0 0.0
      %4362 = vmatpush2.msra.mxu0 %v4139
      %4363 = vmatprep.subr.mxu0 0.0
      %4364 = vmatpush2.msra.mxu0 %v4138
      %4365 = vmatprep.subr.mxu0 0.0
      %4366 = vmatpush2.msra.mxu0 %v4137
      %4367 = vmatprep.subr.mxu0 0.0
      %4368 = vmatpush2.msra.mxu0 %v4136
      %4369 = vmatprep.subr.mxu0 0.0
      %4370 = vmatpush2.msra.mxu0 %v4135
      %4371 = vmatprep.subr.mxu0 0.0
      %4372 = vmatpush2.msra.mxu0 %v4134
      %4373 = vmatprep.subr.mxu0 0.0
      %4374 = vmatpush2.msra.mxu0 %v4133
      %4375 = vmatprep.subr.mxu0 0.0
      %4376 = vmatpush2.msra.mxu0 %v4132
      %4377 = vmatprep.subr.mxu0 0.0
      %4378 = vmatpush2.msra.mxu0 %v4131
      %4379 = vmatprep.subr.mxu0 0.0
      %4380 = vmatpush2.msra.mxu0 %v4130
      %4381 = vmatprep.subr.mxu0 0.0
      %4382 = vmatpush2.msra.mxu0 %v4129
      %4383 = vmatprep.subr.mxu0 0.0
      %4384 = vmatpush2.msra.mxu0 %v4128
      %4385 = vmatprep.subr.mxu0 0.0
      %4386 = vmatpush2.msra.mxu0 %v4127
      %4387 = vmatprep.subr.mxu0 0.0
      %4388 = vmatpush2.msra.mxu0 %v4126
      %4389 = vmatprep.subr.mxu0 0.0
      %4390 = vmatpush2.msra.mxu0 %v4125
      %4391 = vmatprep.subr.mxu0 0.0
      %4392 = vmatpush2.msra.mxu0 %v4124
      %4393 = vmatprep.mubr.f32.mxu0 %v4017
      %4394 = vmatmul.mubr.f32.gmra.mxu0 %v4016
      %v4395 = vpop.f32.mrf.mxu0
      %v4396 = vadd.f32 %v4321, %v4395
      %v4397 = vpop.f32.mrf.mxu0
      %4398 = vmatprep.mubr.f32.mxu0 %v4025
      %4399 = vmatmul.mubr.f32.gmra.mxu0 %v4024
      %v4400 = vpop.f32.mrf.mxu0
      %v4401 = vadd.f32 %v4326, %v4400
      %v4402 = vpop.f32.mrf.mxu0
      %4403 = vdwg.mxu0
      %4404 = vmatprep.subr.mxu0 0.0
      %4405 = vmatpush1.msra.mxu0 %v4155
      %4406 = vmatprep.subr.mxu0 0.0
      %4407 = vmatpush1.msra.mxu0 %v4154
      %4408 = vmatprep.subr.mxu0 0.0
      %4409 = vmatpush1.msra.mxu0 %v4153
      %4410 = vmatprep.subr.mxu0 0.0
      %4411 = vmatpush1.msra.mxu0 %v4152
      %4412 = vmatprep.subr.mxu0 0.0
      %4413 = vmatpush1.msra.mxu0 %v4151
      %4414 = vmatprep.subr.mxu0 0.0
      %4415 = vmatpush1.msra.mxu0 %v4150
      %4416 = vmatprep.subr.mxu0 0.0
      %4417 = vmatpush1.msra.mxu0 %v4149
      %4418 = vmatprep.subr.mxu0 0.0
      %4419 = vmatpush1.msra.mxu0 %v4148
      %4420 = vmatprep.subr.mxu0 0.0
      %4421 = vmatpush1.msra.mxu0 %v4147
      %4422 = vmatprep.subr.mxu0 0.0
      %4423 = vmatpush1.msra.mxu0 %v4146
      %4424 = vmatprep.subr.mxu0 0.0
      %4425 = vmatpush1.msra.mxu0 %v4145
      %4426 = vmatprep.subr.mxu0 0.0
      %4427 = vmatpush1.msra.mxu0 %v4144
      %4428 = vmatprep.subr.mxu0 0.0
      %4429 = vmatpush1.msra.mxu0 %v4143
      %4430 = vmatprep.subr.mxu0 0.0
      %4431 = vmatpush1.msra.mxu0 %v4142
      %4432 = vmatprep.subr.mxu0 0.0
      %4433 = vmatpush1.msra.mxu0 %v4141
      %4434 = vmatprep.subr.mxu0 0.0
      %4435 = vmatpush1.msra.mxu0 %v4140
      %4436 = vmatprep.subr.mxu0 0.0
      %4437 = vmatpush2.msra.mxu0 %v4171
      %4438 = vmatprep.subr.mxu0 0.0
      %4439 = vmatpush2.msra.mxu0 %v4170
      %4440 = vmatprep.subr.mxu0 0.0
      %4441 = vmatpush2.msra.mxu0 %v4169
      %4442 = vmatprep.subr.mxu0 0.0
      %4443 = vmatpush2.msra.mxu0 %v4168
      %4444 = vmatprep.subr.mxu0 0.0
      %4445 = vmatpush2.msra.mxu0 %v4167
      %4446 = vmatprep.subr.mxu0 0.0
      %4447 = vmatpush2.msra.mxu0 %v4166
      %4448 = vmatprep.subr.mxu0 0.0
      %4449 = vmatpush2.msra.mxu0 %v4165
      %4450 = vmatprep.subr.mxu0 0.0
      %4451 = vmatpush2.msra.mxu0 %v4164
      %4452 = vmatprep.subr.mxu0 0.0
      %4453 = vmatpush2.msra.mxu0 %v4163
      %4454 = vmatprep.subr.mxu0 0.0
      %4455 = vmatpush2.msra.mxu0 %v4162
      %4456 = vmatprep.subr.mxu0 0.0
      %4457 = vmatpush2.msra.mxu0 %v4161
      %4458 = vmatprep.subr.mxu0 0.0
      %4459 = vmatpush2.msra.mxu0 %v4160
      %4460 = vmatprep.subr.mxu0 0.0
      %4461 = vmatpush2.msra.mxu0 %v4159
      %4462 = vmatprep.subr.mxu0 0.0
      %4463 = vmatpush2.msra.mxu0 %v4158
      %4464 = vmatprep.subr.mxu0 0.0
      %4465 = vmatpush2.msra.mxu0 %v4157
      %4466 = vmatprep.subr.mxu0 0.0
      %4467 = vmatpush2.msra.mxu0 %v4156
      %4468 = vmatprep.mubr.f32.mxu0 %v4019
      %4469 = vmatmul.mubr.f32.gmra.mxu0 %v4018
      %v4470 = vpop.f32.mrf.mxu0
      %v4471 = vadd.f32 %v4396, %v4470
      %v4472 = vpop.f32.mrf.mxu0
      %4473 = vmatprep.mubr.f32.mxu0 %v4027
      %4474 = vmatmul.mubr.f32.gmra.mxu0 %v4026
      %v4475 = vpop.f32.mrf.mxu0
      %v4476 = vadd.f32 %v4401, %v4475
      %v4477 = vpop.f32.mrf.mxu0
      %4478 = vdwg.mxu0
      %v4479 = vlaneseq
      %v4480 = vand.u32 %v4479, 127
      %vm4481 = vcmp.lt.s32.totalorder %v4480, 2
      %v4482 = vsel %vm4481, %v4471, -1e+30
      %v4483 = vsel %vm4481, %v4476, -1e+30
      %vm4484 = vcmask 64512
      %v4485 = vsel %vm4484, %v4482, -inf
      %4486 = vmax.xlane.f32.xlu0 %v4485
      %v4487 = vpop.xlane.xlu0 %4486
      %v4488 = vsel %vm4484, %v4483, -inf
      %4489 = vmax.xlane.f32.xlu0 %v4488
      %v4490 = vpop.xlane.xlu0 %4489
      %v4491 = vsub.f32 %v4482, %v4487
      %v4492 = vsub.f32 %v4483, %v4490
      %v4493 = vmul.f32 %v4491, 1.442695
      %v4494 = vpow.pop %v4493
      %v4495 = vmul.f32 %v4492, 1.442695
      %v4496 = vpow.pop %v4495
      %v4497 = vsel %vm4484, %v4494, 0.0
      %4498 = vadd.xlane.f32.xlu0 %v4497
      %v4499 = vpop.xlane.xlu0 %4498
      %v4500 = vsel %vm4484, %v4496, 0.0
      %4501 = vadd.xlane.f32.xlu0 %v4500
      %v4502 = vpop.xlane.xlu0 %4501
      %v4503 = vlog2.pop %v4499
      %v4504 = vmul.f32 %v4503, 0.6931472
      %v4505 = vlog2.pop %v4502
      %v4506 = vmul.f32 %v4505, 0.6931472
      %v4507 = vsub.f32 %v4491, %v4504
      %v4508 = vsub.f32 %v4492, %v4506
      %4509 = vst.msk [vmem:[%s6] sm:$0xff] %vm4484, %v4507
      %4510 = vst.msk [vmem:[%s6 + $0x8] sm:$0xff] %vm4484, %v4508
    $region41: #{quintuplet_forward.1} parent=1 // pred_fallthru
      _
    // Predicated region
    $region42: #{quintuplet_forward.1} parent=1 // pred_check
      _
    $region43: #{quintuplet_forward.1} parent=1 // pred_check_branch
      %4512 = sbr.rel (0) target = $region45
    $region44: #{quintuplet_forward.1} parent=1 // pred_region
      _
    $region45: #{quintuplet_forward.1} parent=1 // pred_fallthru
      _
    // Predicated region
    $region46: #{quintuplet_forward.1} parent=1 // pred_check
      _
    $region47: #{quintuplet_forward.1} parent=1 // pred_check_branch
      %4514 = sbr.rel (0) target = $region49
    $region48: #{quintuplet_forward.1} parent=1 // pred_region
      _
    $region49: #{quintuplet_forward.1} parent=1 // pred_fallthru
      _
    // Predicated region
    $region50: #{quintuplet_forward.1} parent=1 // pred_check
      _
    $region51: #{quintuplet_forward.1} parent=1 // pred_check_branch
      %4516 = sbr.rel (0) target = $region53
    $region52: #{quintuplet_forward.1} parent=1 // pred_region
      _
    $region53: #{quintuplet_forward.1} parent=1 // pred_fallthru
      _
    // Predicated region
    $region54: #{quintuplet_forward.1} parent=1 // pred_check
      _
    $region55: #{quintuplet_forward.1} parent=1 // pred_check_branch
      %4518 = sbr.rel (0) target = $region57
    $region56: #{quintuplet_forward.1} parent=1 // pred_region
      _
    $region57: #{quintuplet_forward.1} parent=1 // pred_fallthru
      _
    %4519 = vsyncpa [#allocation3], 1
    %4520 = vsyncpa [#allocation5], 1

</llo_original>
